<compile_context>
chip_gen: v7x
topology: tpu7x:2x2x1
jax: 0.10.0
libtpu: 0.0.40
codegen_flags: <defaults>
</compile_context>

<pallas_src>
import functools

import jax
import jax.numpy as jnp
from jax import lax
from jax.experimental import pallas as pl
from jax.experimental.pallas import tpu as pltpu

HEAD_DIM = 64  # fixed by the PyTorch module


# ----------------------------------------------------------------------------
# Fused kernel: everything resident in VMEM, one grid step.
#   x_ref    : (B*S, E)
#   wqkv_ref : (E, 3E)   (q|k|v weights, (in, out) layout, q pre-scaled)
#   bqkv_ref : (1, 3E)
#   wo_ref   : (E, E)
#   bo_ref   : (1, E)
#   o_ref    : (B*S, E)
#   acc_ref  : (B*S, E) f32 VMEM scratch (lane-dense attn output slab)
# ----------------------------------------------------------------------------
def _fused_mha_kernel(x_ref, wqkv_ref, bqkv_ref, wo_ref, bo_ref, o_ref, acc_ref,
                      *, batch, seq, num_heads):
    E = num_heads * HEAD_DIM
    D = HEAD_DIM
    S = seq
    H = num_heads

    x = x_ref[...]                                           # (B*S, E)

    # --- fused QKV projection over ALL B*S rows (M = B*S on the MXU) --------
    # 1/sqrt(D) is already folded into the q-columns of wqkv/bqkv.
    qkv = jnp.dot(x, wqkv_ref[...],
                  preferred_element_type=jnp.float32,
                  precision=lax.Precision.HIGHEST) + bqkv_ref[...]   # (B*S, 3E)

    q = qkv[:, :E]            # lane slices on 128-lane boundaries (E = 128)
    k = qkv[:, E:2 * E]
    v = qkv[:, 2 * E:]

    # --- gather each (batch, head) problem onto a NEW leading axis ----------
    # (B*S, E) -> (B*H, S, D): sublane slices at multiples of 8 (S = 8) and
    # lane slices at multiples of 64; stacking along a new major axis avoids
    # minor-dim reshape/transpose relayouts inside the kernel.
    def heads(z):
        return jnp.stack(
            [z[b * S:(b + 1) * S, h * D:(h + 1) * D]
             for b in range(batch) for h in range(H)], axis=0)

    q3 = heads(q)                                            # (B*H, S, D)
    k3 = heads(k)                                            # (B*H, S, D)
    v3 = heads(v)                                            # (B*H, S, D)

    # --- ALL B*H attention matmuls as ONE batched dot_general each ----------
    scores = jnp.einsum('nqd,nkd->nqk', q3, k3,
                        preferred_element_type=jnp.float32,
                        precision=lax.Precision.HIGHEST)     # (B*H, S, S)

    # numerically-stable exact softmax (1e-4 budget -> no approx reciprocal)
    m = jnp.max(scores, axis=-1, keepdims=True)
    e = jnp.exp(scores - m)
    p = e / jnp.sum(e, axis=-1, keepdims=True)

    ctx = jnp.einsum('nqk,nkd->nqd', p, v3,
                     preferred_element_type=jnp.float32,
                     precision=lax.Precision.HIGHEST)        # (B*H, S, D)

    # --- scatter head outputs straight into the lane-dense (B*S, E) slab ----
    # (direct slice-stores; no jnp.concatenate relayout)
    for b in range(batch):
        for h in range(H):
            acc_ref[b * S:(b + 1) * S, h * D:(h + 1) * D] = ctx[b * H + h]

    # --- output projection over ALL B*S rows ---------------------------------
    o_ref[...] = jnp.dot(acc_ref[...], wo_ref[...],
                         preferred_element_type=jnp.float32,
                         precision=lax.Precision.HIGHEST) + bo_ref[...]


# ----------------------------------------------------------------------------
# Wrapper
# ----------------------------------------------------------------------------
def custom_mha_forward(x, fused_params, num_heads):
    B, S, E = x.shape
    assert num_heads * HEAD_DIM == E, "embed_dim must equal num_heads * 64"

    wqkv = fused_params["wqkv"]   # (E, 3E), q columns pre-scaled by 1/sqrt(64)
    bqkv = fused_params["bqkv"]   # (1, 3E)
    wo = fused_params["wo"]       # (E, E)
    bo = fused_params["bo"]       # (1, E)

    BS = B * S
    x2 = x.reshape(BS, E)         # contiguous -> free metadata reshape in XLA

    kernel = functools.partial(_fused_mha_kernel,
                               batch=B, seq=S, num_heads=num_heads)

    flops = (2 * BS * E * 3 * E                               # qkv projection
             + 2 * 2 * B * num_heads * S * S * HEAD_DIM       # qk^T + pv
             + 2 * BS * E * E)                                # out projection
    bytes_accessed = 4 * (2 * BS * E + E * 3 * E + 3 * E + E * E + E)

    out2 = pl.pallas_call(
        kernel,
        out_shape=jax.ShapeDtypeStruct((BS, E), jnp.float32),
        grid=(1,),  # single step: per-step overhead paid once; weights DMA'd once
        in_specs=[
            pl.BlockSpec((BS, E), lambda i: (0, 0)),          # all rows at once
            pl.BlockSpec((E, 3 * E), lambda i: (0, 0)),       # resident weights
            pl.BlockSpec((1, 3 * E), lambda i: (0, 0)),
            pl.BlockSpec((E, E), lambda i: (0, 0)),
            pl.BlockSpec((1, E), lambda i: (0, 0)),
        ],
        out_specs=pl.BlockSpec((BS, E), lambda i: (0, 0)),
        scratch_shapes=[pltpu.VMEM((BS, E), jnp.float32)],
        compiler_params=pltpu.CompilerParams(
            dimension_semantics=("arbitrary",),
        ),
        cost_estimate=pl.CostEstimate(
            flops=flops,
            transcendentals=B * num_heads * S * S,
            bytes_accessed=bytes_accessed),
    )(x2, wqkv, bqkv, wo, bo)

    return out2.reshape(B, S, E)


# ----------------------------------------------------------------------------
# Parameter construction (PyTorch nn.Linear-style) and one-time fusion
# ----------------------------------------------------------------------------
def make_params(embed_dim, key):
    """Deterministic nn.Linear-style init: uniform(-1/sqrt(in), 1/sqrt(in))."""
    keys = jax.random.split(key, 8)
    bound = 1.0 / (embed_dim ** 0.5)

    def lin(kw, kb):
        w = jax.random.uniform(kw, (embed_dim, embed_dim), jnp.float32, -bound, bound)
        b = jax.random.uniform(kb, (embed_dim,), jnp.float32, -bound, bound)
        return w, b  # w keeps the PyTorch (out, in) layout

    params = {}
    for i, name in enumerate(["q_proj", "k_proj", "v_proj", "out_proj"]):
        params[name] = lin(keys[2 * i], keys[2 * i + 1])
    return params


def fuse_params(params):
    """One-time layout plumbing + scale folding (outside the per-call hot path)."""
    wq, bq = params["q_proj"]
    wk, bk = params["k_proj"]
    wv, bv = params["v_proj"]
    wo, bo = params["out_proj"]
    E = wq.shape[0]
    scale = 1.0 / (HEAD_DIM ** 0.5)
    return {
        # fold 1/sqrt(head_dim) into the q block of the fused weight/bias
        "wqkv": jnp.concatenate([wq.T * scale, wk.T, wv.T], axis=1),     # (E, 3E)
        "bqkv": jnp.concatenate([bq * scale, bk, bv]).reshape(1, 3 * E),  # (1, 3E)
        "wo": wo.T,                                                       # (E, E)
        "bo": bo.reshape(1, E),                                           # (1, E)
    }


# ----------------------------------------------------------------------------
# Pure-JAX reference (mirrors the PyTorch module) for correctness check
# ----------------------------------------------------------------------------
def reference_forward(x, params, num_heads):
    B, S, E = x.shape

    def lin(name, z):
        w, b = params[name]
        return z @ w.T + b

    q = lin("q_proj", x).reshape(B, S, num_heads, HEAD_DIM).transpose(0, 2, 1, 3)
    k = lin("k_proj", x).reshape(B, S, num_heads, HEAD_DIM).transpose(0, 2, 1, 3)
    v = lin("v_proj", x).reshape(B, S, num_heads, HEAD_DIM).transpose(0, 2, 1, 3)
    scores = jnp.einsum("bhqd,bhkd->bhqk", q, k) / (HEAD_DIM ** 0.5)
    p = jax.nn.softmax(scores, axis=-1)
    o = jnp.einsum("bhqk,bhkd->bhqd", p, v)
    o = o.transpose(0, 2, 1, 3).reshape(B, S, E)
    return lin("out_proj", o)


if __name__ == "__main__":
    num_heads = 2
    embed_dim = num_heads * HEAD_DIM  # 128
    batch, seq = 2, 8

    key = jax.random.PRNGKey(0)
    kx, kp = jax.random.split(key)
    x = jax.random.normal(kx, (batch, seq, embed_dim), jnp.float32)
    params = make_params(embed_dim, kp)
    fused = fuse_params(params)

    out = custom_mha_forward(x, fused, num_heads)
    out = jax.block_until_ready(out)

    # compute the reference with full-f32 matmuls so the 1e-4 comparison is fair
    with jax.default_matmul_precision("highest"):
        ref = reference_forward(x, params, num_heads)
    ref = jax.block_until_ready(ref)

    assert out.shape == (batch, seq, embed_dim)
    assert jnp.allclose(out, ref, atol=1e-4, rtol=1e-4), "mismatch vs reference"

    print("KERNEL_OK")
</pallas_src>

<mosaic_0001>
module attributes {stable_mosaic.version = 11 : i64} {
  func.func @_fused_mha_kernel(%arg0: i32, %arg1: memref<16x128xf32, #tpu.memory_space<vmem>>, %arg2: memref<128x384xf32, #tpu.memory_space<vmem>>, %arg3: memref<1x384xf32, #tpu.memory_space<vmem>>, %arg4: memref<128x128xf32, #tpu.memory_space<vmem>>, %arg5: memref<1x128xf32, #tpu.memory_space<vmem>>, %arg6: memref<16x128xf32, #tpu.memory_space<vmem>>, %arg7: memref<16x128xf32, #tpu.memory_space<vmem>>) attributes {dimension_semantics = [#tpu.dimension_semantics<arbitrary>], iteration_bounds = array<i64: 1>, scalar_prefetch = 0 : i64, scratch_operands = 1 : i64, tpu.core_type = #tpu.core_type<tc>, window_params = [{pipeline_mode = #tpu.pipeline_mode<synchronous>, transform_indices = @transform_0, window_bounds = array<i64: 16, 128>}, {pipeline_mode = #tpu.pipeline_mode<synchronous>, transform_indices = @transform_1, window_bounds = array<i64: 128, 384>}, {pipeline_mode = #tpu.pipeline_mode<synchronous>, transform_indices = @transform_2, window_bounds = array<i64: 1, 384>}, {pipeline_mode = #tpu.pipeline_mode<synchronous>, transform_indices = @transform_3, window_bounds = array<i64: 128, 128>}, {pipeline_mode = #tpu.pipeline_mode<synchronous>, transform_indices = @transform_4, window_bounds = array<i64: 1, 128>}, {pipeline_mode = #tpu.pipeline_mode<synchronous>, transform_indices = @transform_5, window_bounds = array<i64: 16, 128>}]} {
    %c0 = arith.constant 0 : index
    %c0_0 = arith.constant 0 : index
    %0 = vector.load %arg1[%c0, %c0_0] : memref<16x128xf32, #tpu.memory_space<vmem>>, vector<16x128xf32>
    %c0_1 = arith.constant 0 : index
    %c0_2 = arith.constant 0 : index
    %1 = vector.load %arg2[%c0_1, %c0_2] : memref<128x384xf32, #tpu.memory_space<vmem>>, vector<128x384xf32>
    %cst = arith.constant dense<0.000000e+00> : vector<16x384xf32>
    %2 = tpu.matmul %0, %1, %cst {dimension_numbers = #tpu.dot_dimension_numbers<[1], [0], [0], [1], [0, 0, 1, 1], [], []>, precision = #tpu.contract_precision<fp32>} : vector<16x128xf32>, vector<128x384xf32>, vector<16x384xf32> -> vector<16x384xf32>
    %c0_3 = arith.constant 0 : index
    %c0_4 = arith.constant 0 : index
    %3 = vector.load %arg3[%c0_3, %c0_4] : memref<1x384xf32, #tpu.memory_space<vmem>>, vector<1x384xf32>
    %4 = vector.broadcast %3 : vector<1x384xf32> to vector<16x384xf32>
    %5 = arith.addf %2, %4 : vector<16x384xf32>
    %6 = vector.extract_strided_slice %5 {offsets = [0, 0], sizes = [16, 128], strides = [1, 1]} : vector<16x384xf32> to vector<16x128xf32>
    %7 = vector.extract_strided_slice %5 {offsets = [0, 128], sizes = [16, 128], strides = [1, 1]} : vector<16x384xf32> to vector<16x128xf32>
    %8 = vector.extract_strided_slice %5 {offsets = [0, 256], sizes = [16, 128], strides = [1, 1]} : vector<16x384xf32> to vector<16x128xf32>
    %9 = vector.extract_strided_slice %6 {offsets = [0, 0], sizes = [8, 64], strides = [1, 1]} : vector<16x128xf32> to vector<8x64xf32>
    %10 = vector.extract_strided_slice %6 {offsets = [0, 64], sizes = [8, 64], strides = [1, 1]} : vector<16x128xf32> to vector<8x64xf32>
    %11 = vector.extract_strided_slice %6 {offsets = [8, 0], sizes = [8, 64], strides = [1, 1]} : vector<16x128xf32> to vector<8x64xf32>
    %12 = vector.extract_strided_slice %6 {offsets = [8, 64], sizes = [8, 64], strides = [1, 1]} : vector<16x128xf32> to vector<8x64xf32>
    %13 = vector.shape_cast %9 : vector<8x64xf32> to vector<1x8x64xf32>
    %14 = vector.shape_cast %10 : vector<8x64xf32> to vector<1x8x64xf32>
    %15 = vector.shape_cast %11 : vector<8x64xf32> to vector<1x8x64xf32>
    %16 = vector.shape_cast %12 : vector<8x64xf32> to vector<1x8x64xf32>
    %17 = tpu.concatenate %13, %14, %15, %16 in 0 : vector<1x8x64xf32>, vector<1x8x64xf32>, vector<1x8x64xf32>, vector<1x8x64xf32> -> vector<4x8x64xf32>
    %18 = vector.extract_strided_slice %7 {offsets = [0, 0], sizes = [8, 64], strides = [1, 1]} : vector<16x128xf32> to vector<8x64xf32>
    %19 = vector.extract_strided_slice %7 {offsets = [0, 64], sizes = [8, 64], strides = [1, 1]} : vector<16x128xf32> to vector<8x64xf32>
    %20 = vector.extract_strided_slice %7 {offsets = [8, 0], sizes = [8, 64], strides = [1, 1]} : vector<16x128xf32> to vector<8x64xf32>
    %21 = vector.extract_strided_slice %7 {offsets = [8, 64], sizes = [8, 64], strides = [1, 1]} : vector<16x128xf32> to vector<8x64xf32>
    %22 = vector.shape_cast %18 : vector<8x64xf32> to vector<1x8x64xf32>
    %23 = vector.shape_cast %19 : vector<8x64xf32> to vector<1x8x64xf32>
    %24 = vector.shape_cast %20 : vector<8x64xf32> to vector<1x8x64xf32>
    %25 = vector.shape_cast %21 : vector<8x64xf32> to vector<1x8x64xf32>
    %26 = tpu.concatenate %22, %23, %24, %25 in 0 : vector<1x8x64xf32>, vector<1x8x64xf32>, vector<1x8x64xf32>, vector<1x8x64xf32> -> vector<4x8x64xf32>
    %27 = vector.extract_strided_slice %8 {offsets = [0, 0], sizes = [8, 64], strides = [1, 1]} : vector<16x128xf32> to vector<8x64xf32>
    %28 = vector.extract_strided_slice %8 {offsets = [0, 64], sizes = [8, 64], strides = [1, 1]} : vector<16x128xf32> to vector<8x64xf32>
    %29 = vector.extract_strided_slice %8 {offsets = [8, 0], sizes = [8, 64], strides = [1, 1]} : vector<16x128xf32> to vector<8x64xf32>
    %30 = vector.extract_strided_slice %8 {offsets = [8, 64], sizes = [8, 64], strides = [1, 1]} : vector<16x128xf32> to vector<8x64xf32>
    %31 = vector.shape_cast %27 : vector<8x64xf32> to vector<1x8x64xf32>
    %32 = vector.shape_cast %28 : vector<8x64xf32> to vector<1x8x64xf32>
    %33 = vector.shape_cast %29 : vector<8x64xf32> to vector<1x8x64xf32>
    %34 = vector.shape_cast %30 : vector<8x64xf32> to vector<1x8x64xf32>
    %35 = tpu.concatenate %31, %32, %33, %34 in 0 : vector<1x8x64xf32>, vector<1x8x64xf32>, vector<1x8x64xf32>, vector<1x8x64xf32> -> vector<4x8x64xf32>
    "tpu.trace_start"() <{level = 10 : i32, message = "nqd,nkd->nqk"}> : () -> ()
    %cst_5 = arith.constant dense<0.000000e+00> : vector<4x8x8xf32>
    %36 = tpu.matmul %17, %26, %cst_5 {dimension_numbers = #tpu.dot_dimension_numbers<[2], [2], [1], [1], [0, 0, 0, 1, 1, 1], [0], [0]>, precision = #tpu.contract_precision<fp32>} : vector<4x8x64xf32>, vector<4x8x64xf32>, vector<4x8x8xf32> -> vector<4x8x8xf32>
    "tpu.trace_stop"() : () -> ()
    %cst_6 = arith.constant dense<0xFF800000> : vector<4x8xf32>
    %37 = vector.multi_reduction <maximumf>, %36, %cst_6 [2] : vector<4x8x8xf32> to vector<4x8xf32>
    %38 = vector.shape_cast %37 : vector<4x8xf32> to vector<4x8x1xf32>
    %39 = vector.broadcast %38 : vector<4x8x1xf32> to vector<4x8x8xf32>
    %40 = arith.subf %36, %39 : vector<4x8x8xf32>
    %41 = math.exp %40 : vector<4x8x8xf32>
    %cst_7 = arith.constant dense<0.000000e+00> : vector<4x8xf32>
    %42 = vector.multi_reduction <add>, %41, %cst_7 [2] : vector<4x8x8xf32> to vector<4x8xf32>
    %43 = vector.shape_cast %42 : vector<4x8xf32> to vector<4x8x1xf32>
    %44 = vector.broadcast %43 : vector<4x8x1xf32> to vector<4x8x8xf32>
    %45 = arith.divf %41, %44 : vector<4x8x8xf32>
    "tpu.trace_start"() <{level = 10 : i32, message = "nqk,nkd->nqd"}> : () -> ()
    %cst_8 = arith.constant dense<0.000000e+00> : vector<4x8x64xf32>
    %46 = tpu.matmul %45, %35, %cst_8 {dimension_numbers = #tpu.dot_dimension_numbers<[2], [1], [1], [2], [0, 0, 0, 1, 1, 2], [0], [0]>, precision = #tpu.contract_precision<fp32>} : vector<4x8x8xf32>, vector<4x8x64xf32>, vector<4x8x64xf32> -> vector<4x8x64xf32>
    "tpu.trace_stop"() : () -> ()
    %47 = vector.extract_strided_slice %46 {offsets = [0, 0, 0], sizes = [1, 8, 64], strides = [1, 1, 1]} : vector<4x8x64xf32> to vector<1x8x64xf32>
    %48 = vector.shape_cast %47 : vector<1x8x64xf32> to vector<8x64xf32>
    %c0_9 = arith.constant 0 : index
    %c0_10 = arith.constant 0 : index
    %49 = vector.load %arg7[%c0_9, %c0_10] : memref<16x128xf32, #tpu.memory_space<vmem>>, vector<8x64xf32>
    tpu.vector_store %arg7[%c0_9, %c0_10], %48 {strides = array<i32>} : memref<16x128xf32, #tpu.memory_space<vmem>>, vector<8x64xf32>,
    %50 = vector.extract_strided_slice %46 {offsets = [1, 0, 0], sizes = [1, 8, 64], strides = [1, 1, 1]} : vector<4x8x64xf32> to vector<1x8x64xf32>
    %51 = vector.shape_cast %50 : vector<1x8x64xf32> to vector<8x64xf32>
    %c0_11 = arith.constant 0 : index
    %c64 = arith.constant 64 : index
    %52 = vector.load %arg7[%c0_11, %c64] : memref<16x128xf32, #tpu.memory_space<vmem>>, vector<8x64xf32>
    tpu.vector_store %arg7[%c0_11, %c64], %51 {strides = array<i32>} : memref<16x128xf32, #tpu.memory_space<vmem>>, vector<8x64xf32>,
    %53 = vector.extract_strided_slice %46 {offsets = [2, 0, 0], sizes = [1, 8, 64], strides = [1, 1, 1]} : vector<4x8x64xf32> to vector<1x8x64xf32>
    %54 = vector.shape_cast %53 : vector<1x8x64xf32> to vector<8x64xf32>
    %c8 = arith.constant 8 : index
    %c0_12 = arith.constant 0 : index
    %55 = vector.load %arg7[%c8, %c0_12] : memref<16x128xf32, #tpu.memory_space<vmem>>, vector<8x64xf32>
    tpu.vector_store %arg7[%c8, %c0_12], %54 {strides = array<i32>} : memref<16x128xf32, #tpu.memory_space<vmem>>, vector<8x64xf32>,
    %56 = vector.extract_strided_slice %46 {offsets = [3, 0, 0], sizes = [1, 8, 64], strides = [1, 1, 1]} : vector<4x8x64xf32> to vector<1x8x64xf32>
    %57 = vector.shape_cast %56 : vector<1x8x64xf32> to vector<8x64xf32>
    %c8_13 = arith.constant 8 : index
    %c64_14 = arith.constant 64 : index
    %58 = vector.load %arg7[%c8_13, %c64_14] : memref<16x128xf32, #tpu.memory_space<vmem>>, vector<8x64xf32>
    tpu.vector_store %arg7[%c8_13, %c64_14], %57 {strides = array<i32>} : memref<16x128xf32, #tpu.memory_space<vmem>>, vector<8x64xf32>,
    %c0_15 = arith.constant 0 : index
    %c0_16 = arith.constant 0 : index
    %59 = vector.load %arg7[%c0_15, %c0_16] : memref<16x128xf32, #tpu.memory_space<vmem>>, vector<16x128xf32>
    %c0_17 = arith.constant 0 : index
    %c0_18 = arith.constant 0 : index
    %60 = vector.load %arg4[%c0_17, %c0_18] : memref<128x128xf32, #tpu.memory_space<vmem>>, vector<128x128xf32>
    %cst_19 = arith.constant dense<0.000000e+00> : vector<16x128xf32>
    %61 = tpu.matmul %59, %60, %cst_19 {dimension_numbers = #tpu.dot_dimension_numbers<[1], [0], [0], [1], [0, 0, 1, 1], [], []>, precision = #tpu.contract_precision<fp32>} : vector<16x128xf32>, vector<128x128xf32>, vector<16x128xf32> -> vector<16x128xf32>
    %c0_20 = arith.constant 0 : index
    %c0_21 = arith.constant 0 : index
    %62 = vector.load %arg5[%c0_20, %c0_21] : memref<1x128xf32, #tpu.memory_space<vmem>>, vector<1x128xf32>
    %63 = vector.broadcast %62 : vector<1x128xf32> to vector<16x128xf32>
    %64 = arith.addf %61, %63 : vector<16x128xf32>
    %c0_22 = arith.constant 0 : index
    %c0_23 = arith.constant 0 : index
    %65 = vector.load %arg6[%c0_22, %c0_23] : memref<16x128xf32, #tpu.memory_space<vmem>>, vector<16x128xf32>
    tpu.vector_store %arg6[%c0_22, %c0_23], %64 {strides = array<i32>} : memref<16x128xf32, #tpu.memory_space<vmem>>, vector<16x128xf32>,
    return
  }
  func.func @transform_0(%arg0: i32) -> (i32, i32) {
    %c0_i32 = arith.constant 0 : i32
    %c0_i32_0 = arith.constant 0 : i32
    %c0_i32_1 = arith.constant 0 : i32
    return %c0_i32, %c0_i32_0 : i32, i32
  }
  func.func @transform_1(%arg0: i32) -> (i32, i32) {
    %c0_i32 = arith.constant 0 : i32
    %c0_i32_0 = arith.constant 0 : i32
    %c0_i32_1 = arith.constant 0 : i32
    return %c0_i32, %c0_i32_0 : i32, i32
  }
  func.func @transform_2(%arg0: i32) -> (i32, i32) {
    %c0_i32 = arith.constant 0 : i32
    %c0_i32_0 = arith.constant 0 : i32
    %c0_i32_1 = arith.constant 0 : i32
    return %c0_i32, %c0_i32_0 : i32, i32
  }
  func.func @transform_3(%arg0: i32) -> (i32, i32) {
    %c0_i32 = arith.constant 0 : i32
    %c0_i32_0 = arith.constant 0 : i32
    %c0_i32_1 = arith.constant 0 : i32
    return %c0_i32, %c0_i32_0 : i32, i32
  }
  func.func @transform_4(%arg0: i32) -> (i32, i32) {
    %c0_i32 = arith.constant 0 : i32
    %c0_i32_0 = arith.constant 0 : i32
    %c0_i32_1 = arith.constant 0 : i32
    return %c0_i32, %c0_i32_0 : i32, i32
  }
  func.func @transform_5(%arg0: i32) -> (i32, i32) {
    %c0_i32 = arith.constant 0 : i32
    %c0_i32_0 = arith.constant 0 : i32
    %c0_i32_1 = arith.constant 0 : i32
    return %c0_i32, %c0_i32_0 : i32, i32
  }
}

</mosaic_0001>

<llo_original>
// kernel: tpu_custom_call.1
$region0: #{tpu_custom_call.1}
  #allocation0 [shape = 'u32[]', space=smem, size = 0x4, offset = 0x4, fixed_abs, tag = 'smem constant byte address 0x4 - core index']
  #allocation1 [shape = 'u32[144,128]{1,0:T(1,128)}', space=vmem, size = 0x12000, scoped, tag = 'internal scratch']
  #allocation2 [shape = 'f32[16,128]{1,0:T(8,128)}', space=vmem, size = 0x2000, scoped, tag = 'scratch operand']
  %s0 = inlined_call_operand.hbm [shape: f32[16,128], index: 0, kind: input, shape index: {}]
  %s1 = inlined_call_operand.hbm [shape: f32[128,384], index: 1, kind: input, shape index: {}]
  %s2 = inlined_call_operand.vmem [shape: f32[1,384], index: 2, kind: input, shape index: {}]
  %s3 = inlined_call_operand.hbm [shape: f32[128,128], index: 3, kind: input, shape index: {}]
  %s4 = inlined_call_operand.vmem [shape: f32[1,128], index: 4, kind: input, shape index: {}]
  %s5 = inlined_call_operand.hbm [shape: f32[16,128], index: 5, kind: output, shape index: {}]
  %s6 = sld [smem:[#allocation0]]
  $region42: #{tpu_custom_call.1} parent=0
    _
  %s8 = ssub.s32 1, %s6
  %s9 = scalar_select 0, %s8, %s6
  $region1: #{tpu_custom_call.1} parent=0
    #allocation3 [shape = 'u8[8192]{0}', space=vmem, size = 0x2000, scoped, tag = 'input window, operand 0, single buffered']
    #allocation4 [shape = 's32[1]{0}', space=sflag, size = 0x4, scoped, tag = 'scoped memory for tpu_custom_call.1']
    #allocation5 [shape = 's32[1]{0}', space=sflag, size = 0x4, scoped, tag = 'scoped memory for tpu_custom_call.1']
    #allocation6 [shape = 'u8[196608]{0}', space=vmem, size = 0x30000, scoped, tag = 'input window, operand 1, single buffered']
    #allocation7 [shape = 's32[1]{0}', space=sflag, size = 0x4, scoped, tag = 'scoped memory for tpu_custom_call.1']
    #allocation8 [shape = 'u8[65536]{0}', space=vmem, size = 0x10000, scoped, tag = 'input window, operand 3, single buffered']
    #allocation9 [shape = 'u8[8192]{0}', space=vmem, size = 0x2000, scoped, tag = 'output window, operand 0, single buffered']
    %10 = vsyncpa [#allocation4], 0
    %11 = vsyncpa [#allocation7], 0
    %12 = vsyncpa [#allocation5], 0
    // Predicated region
    $region2: #{tpu_custom_call.1} parent=1 // pred_check
      _
    $region3: #{tpu_custom_call.1} parent=1 // pred_check_branch
      %14 = sbr.rel (0) target = $region5
    $region4: #{tpu_custom_call.1} parent=1 // pred_region
      %s16 = ssub.s32 256, 256
      %17 = vsyncadd [#allocation4], %s16
      %s18 = sshll.u32 [#allocation3], 4
      %s19 = int_to_ptr.vmem [resolvable:$true] %s18
      %24 = dma.hbm_to_vmem [thread:$0]  %s0, 256, %s19, [#allocation4], 128, 128, 8
    $region5: #{tpu_custom_call.1} parent=1 // pred_fallthru
      _
    // Predicated region
    $region6: #{tpu_custom_call.1} parent=1 // pred_check
      _
    $region7: #{tpu_custom_call.1} parent=1 // pred_check_branch
      %26 = sbr.rel (0) target = $region9
    $region8: #{tpu_custom_call.1} parent=1 // pred_region
      %s28 = ssub.s32 6144, 6144
      %29 = vsyncadd [#allocation7], %s28
      %s30 = sshll.u32 [#allocation6], 4
      %s31 = int_to_ptr.vmem [resolvable:$true] %s30
      %36 = dma.hbm_to_vmem [thread:$0]  %s1, 6144, %s31, [#allocation7], 384, 384, 24
    $region9: #{tpu_custom_call.1} parent=1 // pred_fallthru
      _
    // Predicated region
    $region10: #{tpu_custom_call.1} parent=1 // pred_check
      _
    $region11: #{tpu_custom_call.1} parent=1 // pred_check_branch
      %38 = sbr.rel (0) target = $region13
    $region12: #{tpu_custom_call.1} parent=1 // pred_region
      _
    $region13: #{tpu_custom_call.1} parent=1 // pred_fallthru
      _
    // Predicated region
    $region14: #{tpu_custom_call.1} parent=1 // pred_check
      _
    $region15: #{tpu_custom_call.1} parent=1 // pred_check_branch
      %40 = sbr.rel (0) target = $region17
    $region16: #{tpu_custom_call.1} parent=1 // pred_region
      %s42 = ssub.s32 2048, 2048
      %43 = vsyncadd [#allocation7], %s42
      %s44 = sshll.u32 [#allocation8], 4
      %s45 = int_to_ptr.vmem [resolvable:$true] %s44
      %50 = dma.hbm_to_vmem [thread:$0]  %s3, 2048, %s45, [#allocation7], 128, 128, 8
    $region17: #{tpu_custom_call.1} parent=1 // pred_fallthru
      _
    // Predicated region
    $region18: #{tpu_custom_call.1} parent=1 // pred_check
      _
    $region19: #{tpu_custom_call.1} parent=1 // pred_check_branch
      %52 = sbr.rel (0) target = $region21
    $region20: #{tpu_custom_call.1} parent=1 // pred_region
      _
    $region21: #{tpu_custom_call.1} parent=1 // pred_fallthru
      _
    // Predicated region
    $region22: #{tpu_custom_call.1} parent=1 // pred_check
      _
    $region23: #{tpu_custom_call.1} parent=1 // pred_check_branch
      %54 = sbr.rel (0) target = $region25
    $region24: #{tpu_custom_call.1} parent=1 // pred_region
      %55 = dma.done [#allocation4], 256
    $region25: #{tpu_custom_call.1} parent=1 // pred_fallthru
      _
    // Predicated region
    $region26: #{tpu_custom_call.1} parent=1 // pred_check
      _
    $region27: #{tpu_custom_call.1} parent=1 // pred_check_branch
      %57 = sbr.rel (0) target = $region29
    $region28: #{tpu_custom_call.1} parent=1 // pred_region
      %58 = dma.done [#allocation7], 6144
    $region29: #{tpu_custom_call.1} parent=1 // pred_fallthru
      _
    // Predicated region
    $region30: #{tpu_custom_call.1} parent=1 // pred_check
      _
    $region31: #{tpu_custom_call.1} parent=1 // pred_check_branch
      %60 = sbr.rel (0) target = $region33
    $region32: #{tpu_custom_call.1} parent=1 // pred_region
      %61 = dma.done [#allocation7], 2048
    $region33: #{tpu_custom_call.1} parent=1 // pred_fallthru
      _
    %v62 = vld [vmem:[#allocation3] sm:$0xff]
    %v63 = vld [vmem:[#allocation3 + $0x8] sm:$0xff]
    %v64 = vld [vmem:[#allocation6] sm:$0xff]
    %v65 = vld [vmem:[#allocation6 + $0x8] sm:$0xff]
    %v66 = vld [vmem:[#allocation6 + $0x10] sm:$0xff]
    %v67 = vld [vmem:[#allocation6 + $0x18] sm:$0xff]
    %v68 = vld [vmem:[#allocation6 + $0x20] sm:$0xff]
    %v69 = vld [vmem:[#allocation6 + $0x28] sm:$0xff]
    %v70 = vld [vmem:[#allocation6 + $0x30] sm:$0xff]
    %v71 = vld [vmem:[#allocation6 + $0x38] sm:$0xff]
    %v72 = vld [vmem:[#allocation6 + $0x40] sm:$0xff]
    %v73 = vld [vmem:[#allocation6 + $0x48] sm:$0xff]
    %v74 = vld [vmem:[#allocation6 + $0x50] sm:$0xff]
    %v75 = vld [vmem:[#allocation6 + $0x58] sm:$0xff]
    %v76 = vld [vmem:[#allocation6 + $0x60] sm:$0xff]
    %v77 = vld [vmem:[#allocation6 + $0x68] sm:$0xff]
    %v78 = vld [vmem:[#allocation6 + $0x70] sm:$0xff]
    %v79 = vld [vmem:[#allocation6 + $0x78] sm:$0xff]
    %v80 = vld [vmem:[#allocation6 + $0x80] sm:$0xff]
    %v81 = vld [vmem:[#allocation6 + $0x88] sm:$0xff]
    %v82 = vld [vmem:[#allocation6 + $0x90] sm:$0xff]
    %v83 = vld [vmem:[#allocation6 + $0x98] sm:$0xff]
    %v84 = vld [vmem:[#allocation6 + $0xa0] sm:$0xff]
    %v85 = vld [vmem:[#allocation6 + $0xa8] sm:$0xff]
    %v86 = vld [vmem:[#allocation6 + $0xb0] sm:$0xff]
    %v87 = vld [vmem:[#allocation6 + $0xb8] sm:$0xff]
    %v88 = vld [vmem:[#allocation6 + $0xc0] sm:$0xff]
    %v89 = vld [vmem:[#allocation6 + $0xc8] sm:$0xff]
    %v90 = vld [vmem:[#allocation6 + $0xd0] sm:$0xff]
    %v91 = vld [vmem:[#allocation6 + $0xd8] sm:$0xff]
    %v92 = vld [vmem:[#allocation6 + $0xe0] sm:$0xff]
    %v93 = vld [vmem:[#allocation6 + $0xe8] sm:$0xff]
    %v94 = vld [vmem:[#allocation6 + $0xf0] sm:$0xff]
    %v95 = vld [vmem:[#allocation6 + $0xf8] sm:$0xff]
    %v96 = vld [vmem:[#allocation6 + $0x100] sm:$0xff]
    %v97 = vld [vmem:[#allocation6 + $0x108] sm:$0xff]
    %v98 = vld [vmem:[#allocation6 + $0x110] sm:$0xff]
    %v99 = vld [vmem:[#allocation6 + $0x118] sm:$0xff]
    %v100 = vld [vmem:[#allocation6 + $0x120] sm:$0xff]
    %v101 = vld [vmem:[#allocation6 + $0x128] sm:$0xff]
    %v102 = vld [vmem:[#allocation6 + $0x130] sm:$0xff]
    %v103 = vld [vmem:[#allocation6 + $0x138] sm:$0xff]
    %v104 = vld [vmem:[#allocation6 + $0x140] sm:$0xff]
    %v105 = vld [vmem:[#allocation6 + $0x148] sm:$0xff]
    %v106 = vld [vmem:[#allocation6 + $0x150] sm:$0xff]
    %v107 = vld [vmem:[#allocation6 + $0x158] sm:$0xff]
    %v108 = vld [vmem:[#allocation6 + $0x160] sm:$0xff]
    %v109 = vld [vmem:[#allocation6 + $0x168] sm:$0xff]
    %v110 = vld [vmem:[#allocation6 + $0x170] sm:$0xff]
    %v111 = vld [vmem:[#allocation6 + $0x178] sm:$0xff]
    %v112 = vld [vmem:[%s2] sm:$0x7]
    %v114 = vlaneseq
    %v115 = vshrl.u32 %v114, 7
    %v116 = vsub.s32 0, %v115
    %v117 = vrot.slane %v112, %v116
    %v118 = vlaneseq
    %v119 = vshrl.u32 %v118, 7
    %v120 = vsub.s32 1, %v119
    %v121 = vrot.slane %v112, %v120
    %v122 = vlaneseq
    %v123 = vshrl.u32 %v122, 7
    %v124 = vsub.s32 2, %v123
    %v125 = vrot.slane %v112, %v124
    %v129 = vand.u32 %v65, 4294901760
    %130 = vmatprep.subr.mxu0 %v129
    %v131 = vand.u32 %v64, 4294901760
    %132 = vmatpush1.msra.mxu0 %v131
    %v133 = vand.u32 %v68, 4294901760
    %134 = vmatprep.subr.mxu0 %v133
    %v135 = vand.u32 %v67, 4294901760
    %136 = vmatpush1.msra.mxu0 %v135
    %v137 = vand.u32 %v71, 4294901760
    %138 = vmatprep.subr.mxu0 %v137
    %v139 = vand.u32 %v70, 4294901760
    %140 = vmatpush1.msra.mxu0 %v139
    %v141 = vand.u32 %v74, 4294901760
    %142 = vmatprep.subr.mxu0 %v141
    %v143 = vand.u32 %v73, 4294901760
    %144 = vmatpush1.msra.mxu0 %v143
    %v145 = vand.u32 %v77, 4294901760
    %146 = vmatprep.subr.mxu0 %v145
    %v147 = vand.u32 %v76, 4294901760
    %148 = vmatpush1.msra.mxu0 %v147
    %v149 = vand.u32 %v80, 4294901760
    %150 = vmatprep.subr.mxu0 %v149
    %v151 = vand.u32 %v79, 4294901760
    %152 = vmatpush1.msra.mxu0 %v151
    %v153 = vand.u32 %v83, 4294901760
    %154 = vmatprep.subr.mxu0 %v153
    %v155 = vand.u32 %v82, 4294901760
    %156 = vmatpush1.msra.mxu0 %v155
    %v157 = vand.u32 %v86, 4294901760
    %158 = vmatprep.subr.mxu0 %v157
    %v159 = vand.u32 %v85, 4294901760
    %160 = vmatpush1.msra.mxu0 %v159
    %v161 = vand.u32 %v89, 4294901760
    %162 = vmatprep.subr.mxu0 %v161
    %v163 = vand.u32 %v88, 4294901760
    %164 = vmatpush1.msra.mxu0 %v163
    %v165 = vand.u32 %v92, 4294901760
    %166 = vmatprep.subr.mxu0 %v165
    %v167 = vand.u32 %v91, 4294901760
    %168 = vmatpush1.msra.mxu0 %v167
    %v169 = vand.u32 %v95, 4294901760
    %170 = vmatprep.subr.mxu0 %v169
    %v171 = vand.u32 %v94, 4294901760
    %172 = vmatpush1.msra.mxu0 %v171
    %v173 = vand.u32 %v98, 4294901760
    %174 = vmatprep.subr.mxu0 %v173
    %v175 = vand.u32 %v97, 4294901760
    %176 = vmatpush1.msra.mxu0 %v175
    %v177 = vand.u32 %v101, 4294901760
    %178 = vmatprep.subr.mxu0 %v177
    %v179 = vand.u32 %v100, 4294901760
    %180 = vmatpush1.msra.mxu0 %v179
    %v181 = vand.u32 %v104, 4294901760
    %182 = vmatprep.subr.mxu0 %v181
    %v183 = vand.u32 %v103, 4294901760
    %184 = vmatpush1.msra.mxu0 %v183
    %v185 = vand.u32 %v107, 4294901760
    %186 = vmatprep.subr.mxu0 %v185
    %v187 = vand.u32 %v106, 4294901760
    %188 = vmatpush1.msra.mxu0 %v187
    %v189 = vand.u32 %v110, 4294901760
    %190 = vmatprep.subr.mxu0 %v189
    %v191 = vand.u32 %v109, 4294901760
    %192 = vmatpush1.msra.mxu0 %v191
    %193 = vmatprep.subr.mxu0 0.0
    %194 = vmatpush1.msra.mxu0 0.0
    %195 = vmatprep.subr.mxu0 0.0
    %196 = vmatpush1.msra.mxu0 0.0
    %197 = vmatprep.subr.mxu0 0.0
    %198 = vmatpush1.msra.mxu0 0.0
    %199 = vmatprep.subr.mxu0 0.0
    %200 = vmatpush1.msra.mxu0 0.0
    %201 = vmatprep.subr.mxu0 0.0
    %202 = vmatpush1.msra.mxu0 0.0
    %203 = vmatprep.subr.mxu0 0.0
    %204 = vmatpush1.msra.mxu0 0.0
    %205 = vmatprep.subr.mxu0 0.0
    %206 = vmatpush1.msra.mxu0 0.0
    %207 = vmatprep.subr.mxu0 0.0
    %208 = vmatpush1.msra.mxu0 0.0
    %209 = vmatprep.subr.mxu0 0.0
    %210 = vmatpush1.msra.mxu0 0.0
    %211 = vmatprep.subr.mxu0 0.0
    %212 = vmatpush1.msra.mxu0 0.0
    %213 = vmatprep.subr.mxu0 0.0
    %214 = vmatpush1.msra.mxu0 0.0
    %215 = vmatprep.subr.mxu0 0.0
    %216 = vmatpush1.msra.mxu0 0.0
    %217 = vmatprep.subr.mxu0 0.0
    %218 = vmatpush1.msra.mxu0 0.0
    %219 = vmatprep.subr.mxu0 0.0
    %220 = vmatpush1.msra.mxu0 0.0
    %221 = vmatprep.subr.mxu0 0.0
    %222 = vmatpush1.msra.mxu0 0.0
    %223 = vmatprep.subr.mxu0 0.0
    %224 = vmatpush1.msra.mxu0 0.0
    %225 = vmatprep.mubr.f32.mxu0 0.0
    %v226 = vand.u32 %v62, 4294901760
    %v227 = vsub.f32 %v62, %v226
    %v228 = vand.u32 %v227, 4294901760
    %v229 = vsub.f32 %v227, %v228
    %v230 = vand.u32 %v229, 4294901760
    %231 = vmatmul.mubr.f32.gmra.mrb[0].mxu0 %v230
    %v232 = vpop.f32.mrb[0].mxu0
    %v233 = vadd.f32 %v117, %v232
    %v234 = vpop.f32.mrb[0].mxu0
    %v235 = vadd.f32 %v121, %v234
    %236 = vmatprep.mubr.f32.mxu0 0.0
    %v237 = vand.u32 %v63, 4294901760
    %v238 = vsub.f32 %v63, %v237
    %v239 = vand.u32 %v238, 4294901760
    %v240 = vsub.f32 %v238, %v239
    %v241 = vand.u32 %v240, 4294901760
    %242 = vmatmul.mubr.f32.gmra.mrb[0].mxu0 %v241
    %v243 = vpop.f32.mrb[0].mxu0
    %v244 = vadd.f32 %v117, %v243
    %v245 = vpop.f32.mrb[0].mxu0
    %v246 = vadd.f32 %v121, %v245
    %247 = vdwg.mxu0
    %v248 = vand.u32 %v65, 4294901760
    %v249 = vsub.f32 %v65, %v248
    %v250 = vand.u32 %v249, 4294901760
    %v251 = vsub.f32 %v249, %v250
    %v252 = vand.u32 %v251, 4294901760
    %253 = vmatprep.subr.mxu0 %v252
    %v254 = vand.u32 %v64, 4294901760
    %v255 = vsub.f32 %v64, %v254
    %v256 = vand.u32 %v255, 4294901760
    %v257 = vsub.f32 %v255, %v256
    %v258 = vand.u32 %v257, 4294901760
    %259 = vmatpush1.msra.mxu0 %v258
    %v260 = vand.u32 %v68, 4294901760
    %v261 = vsub.f32 %v68, %v260
    %v262 = vand.u32 %v261, 4294901760
    %v263 = vsub.f32 %v261, %v262
    %v264 = vand.u32 %v263, 4294901760
    %265 = vmatprep.subr.mxu0 %v264
    %v266 = vand.u32 %v67, 4294901760
    %v267 = vsub.f32 %v67, %v266
    %v268 = vand.u32 %v267, 4294901760
    %v269 = vsub.f32 %v267, %v268
    %v270 = vand.u32 %v269, 4294901760
    %271 = vmatpush1.msra.mxu0 %v270
    %v272 = vand.u32 %v71, 4294901760
    %v273 = vsub.f32 %v71, %v272
    %v274 = vand.u32 %v273, 4294901760
    %v275 = vsub.f32 %v273, %v274
    %v276 = vand.u32 %v275, 4294901760
    %277 = vmatprep.subr.mxu0 %v276
    %v278 = vand.u32 %v70, 4294901760
    %v279 = vsub.f32 %v70, %v278
    %v280 = vand.u32 %v279, 4294901760
    %v281 = vsub.f32 %v279, %v280
    %v282 = vand.u32 %v281, 4294901760
    %283 = vmatpush1.msra.mxu0 %v282
    %v284 = vand.u32 %v74, 4294901760
    %v285 = vsub.f32 %v74, %v284
    %v286 = vand.u32 %v285, 4294901760
    %v287 = vsub.f32 %v285, %v286
    %v288 = vand.u32 %v287, 4294901760
    %289 = vmatprep.subr.mxu0 %v288
    %v290 = vand.u32 %v73, 4294901760
    %v291 = vsub.f32 %v73, %v290
    %v292 = vand.u32 %v291, 4294901760
    %v293 = vsub.f32 %v291, %v292
    %v294 = vand.u32 %v293, 4294901760
    %295 = vmatpush1.msra.mxu0 %v294
    %v296 = vand.u32 %v77, 4294901760
    %v297 = vsub.f32 %v77, %v296
    %v298 = vand.u32 %v297, 4294901760
    %v299 = vsub.f32 %v297, %v298
    %v300 = vand.u32 %v299, 4294901760
    %301 = vmatprep.subr.mxu0 %v300
    %v302 = vand.u32 %v76, 4294901760
    %v303 = vsub.f32 %v76, %v302
    %v304 = vand.u32 %v303, 4294901760
    %v305 = vsub.f32 %v303, %v304
    %v306 = vand.u32 %v305, 4294901760
    %307 = vmatpush1.msra.mxu0 %v306
    %v308 = vand.u32 %v80, 4294901760
    %v309 = vsub.f32 %v80, %v308
    %v310 = vand.u32 %v309, 4294901760
    %v311 = vsub.f32 %v309, %v310
    %v312 = vand.u32 %v311, 4294901760
    %313 = vmatprep.subr.mxu0 %v312
    %v314 = vand.u32 %v79, 4294901760
    %v315 = vsub.f32 %v79, %v314
    %v316 = vand.u32 %v315, 4294901760
    %v317 = vsub.f32 %v315, %v316
    %v318 = vand.u32 %v317, 4294901760
    %319 = vmatpush1.msra.mxu0 %v318
    %v320 = vand.u32 %v83, 4294901760
    %v321 = vsub.f32 %v83, %v320
    %v322 = vand.u32 %v321, 4294901760
    %v323 = vsub.f32 %v321, %v322
    %v324 = vand.u32 %v323, 4294901760
    %325 = vmatprep.subr.mxu0 %v324
    %v326 = vand.u32 %v82, 4294901760
    %v327 = vsub.f32 %v82, %v326
    %v328 = vand.u32 %v327, 4294901760
    %v329 = vsub.f32 %v327, %v328
    %v330 = vand.u32 %v329, 4294901760
    %331 = vmatpush1.msra.mxu0 %v330
    %v332 = vand.u32 %v86, 4294901760
    %v333 = vsub.f32 %v86, %v332
    %v334 = vand.u32 %v333, 4294901760
    %v335 = vsub.f32 %v333, %v334
    %v336 = vand.u32 %v335, 4294901760
    %337 = vmatprep.subr.mxu0 %v336
    %v338 = vand.u32 %v85, 4294901760
    %v339 = vsub.f32 %v85, %v338
    %v340 = vand.u32 %v339, 4294901760
    %v341 = vsub.f32 %v339, %v340
    %v342 = vand.u32 %v341, 4294901760
    %343 = vmatpush1.msra.mxu0 %v342
    %v344 = vand.u32 %v89, 4294901760
    %v345 = vsub.f32 %v89, %v344
    %v346 = vand.u32 %v345, 4294901760
    %v347 = vsub.f32 %v345, %v346
    %v348 = vand.u32 %v347, 4294901760
    %349 = vmatprep.subr.mxu0 %v348
    %v350 = vand.u32 %v88, 4294901760
    %v351 = vsub.f32 %v88, %v350
    %v352 = vand.u32 %v351, 4294901760
    %v353 = vsub.f32 %v351, %v352
    %v354 = vand.u32 %v353, 4294901760
    %355 = vmatpush1.msra.mxu0 %v354
    %v356 = vand.u32 %v92, 4294901760
    %v357 = vsub.f32 %v92, %v356
    %v358 = vand.u32 %v357, 4294901760
    %v359 = vsub.f32 %v357, %v358
    %v360 = vand.u32 %v359, 4294901760
    %361 = vmatprep.subr.mxu0 %v360
    %v362 = vand.u32 %v91, 4294901760
    %v363 = vsub.f32 %v91, %v362
    %v364 = vand.u32 %v363, 4294901760
    %v365 = vsub.f32 %v363, %v364
    %v366 = vand.u32 %v365, 4294901760
    %367 = vmatpush1.msra.mxu0 %v366
    %v368 = vand.u32 %v95, 4294901760
    %v369 = vsub.f32 %v95, %v368
    %v370 = vand.u32 %v369, 4294901760
    %v371 = vsub.f32 %v369, %v370
    %v372 = vand.u32 %v371, 4294901760
    %373 = vmatprep.subr.mxu0 %v372
    %v374 = vand.u32 %v94, 4294901760
    %v375 = vsub.f32 %v94, %v374
    %v376 = vand.u32 %v375, 4294901760
    %v377 = vsub.f32 %v375, %v376
    %v378 = vand.u32 %v377, 4294901760
    %379 = vmatpush1.msra.mxu0 %v378
    %v380 = vand.u32 %v98, 4294901760
    %v381 = vsub.f32 %v98, %v380
    %v382 = vand.u32 %v381, 4294901760
    %v383 = vsub.f32 %v381, %v382
    %v384 = vand.u32 %v383, 4294901760
    %385 = vmatprep.subr.mxu0 %v384
    %v386 = vand.u32 %v97, 4294901760
    %v387 = vsub.f32 %v97, %v386
    %v388 = vand.u32 %v387, 4294901760
    %v389 = vsub.f32 %v387, %v388
    %v390 = vand.u32 %v389, 4294901760
    %391 = vmatpush1.msra.mxu0 %v390
    %v392 = vand.u32 %v101, 4294901760
    %v393 = vsub.f32 %v101, %v392
    %v394 = vand.u32 %v393, 4294901760
    %v395 = vsub.f32 %v393, %v394
    %v396 = vand.u32 %v395, 4294901760
    %397 = vmatprep.subr.mxu0 %v396
    %v398 = vand.u32 %v100, 4294901760
    %v399 = vsub.f32 %v100, %v398
    %v400 = vand.u32 %v399, 4294901760
    %v401 = vsub.f32 %v399, %v400
    %v402 = vand.u32 %v401, 4294901760
    %403 = vmatpush1.msra.mxu0 %v402
    %v404 = vand.u32 %v104, 4294901760
    %v405 = vsub.f32 %v104, %v404
    %v406 = vand.u32 %v405, 4294901760
    %v407 = vsub.f32 %v405, %v406
    %v408 = vand.u32 %v407, 4294901760
    %409 = vmatprep.subr.mxu0 %v408
    %v410 = vand.u32 %v103, 4294901760
    %v411 = vsub.f32 %v103, %v410
    %v412 = vand.u32 %v411, 4294901760
    %v413 = vsub.f32 %v411, %v412
    %v414 = vand.u32 %v413, 4294901760
    %415 = vmatpush1.msra.mxu0 %v414
    %v416 = vand.u32 %v107, 4294901760
    %v417 = vsub.f32 %v107, %v416
    %v418 = vand.u32 %v417, 4294901760
    %v419 = vsub.f32 %v417, %v418
    %v420 = vand.u32 %v419, 4294901760
    %421 = vmatprep.subr.mxu0 %v420
    %v422 = vand.u32 %v106, 4294901760
    %v423 = vsub.f32 %v106, %v422
    %v424 = vand.u32 %v423, 4294901760
    %v425 = vsub.f32 %v423, %v424
    %v426 = vand.u32 %v425, 4294901760
    %427 = vmatpush1.msra.mxu0 %v426
    %v428 = vand.u32 %v110, 4294901760
    %v429 = vsub.f32 %v110, %v428
    %v430 = vand.u32 %v429, 4294901760
    %v431 = vsub.f32 %v429, %v430
    %v432 = vand.u32 %v431, 4294901760
    %433 = vmatprep.subr.mxu0 %v432
    %v434 = vand.u32 %v109, 4294901760
    %v435 = vsub.f32 %v109, %v434
    %v436 = vand.u32 %v435, 4294901760
    %v437 = vsub.f32 %v435, %v436
    %v438 = vand.u32 %v437, 4294901760
    %439 = vmatpush1.msra.mxu0 %v438
    %440 = vmatprep.subr.mxu0 0.0
    %441 = vmatpush1.msra.mxu0 0.0
    %442 = vmatprep.subr.mxu0 0.0
    %443 = vmatpush1.msra.mxu0 0.0
    %444 = vmatprep.subr.mxu0 0.0
    %445 = vmatpush1.msra.mxu0 0.0
    %446 = vmatprep.subr.mxu0 0.0
    %447 = vmatpush1.msra.mxu0 0.0
    %448 = vmatprep.subr.mxu0 0.0
    %449 = vmatpush1.msra.mxu0 0.0
    %450 = vmatprep.subr.mxu0 0.0
    %451 = vmatpush1.msra.mxu0 0.0
    %452 = vmatprep.subr.mxu0 0.0
    %453 = vmatpush1.msra.mxu0 0.0
    %454 = vmatprep.subr.mxu0 0.0
    %455 = vmatpush1.msra.mxu0 0.0
    %456 = vmatprep.subr.mxu0 0.0
    %457 = vmatpush1.msra.mxu0 0.0
    %458 = vmatprep.subr.mxu0 0.0
    %459 = vmatpush1.msra.mxu0 0.0
    %460 = vmatprep.subr.mxu0 0.0
    %461 = vmatpush1.msra.mxu0 0.0
    %462 = vmatprep.subr.mxu0 0.0
    %463 = vmatpush1.msra.mxu0 0.0
    %464 = vmatprep.subr.mxu0 0.0
    %465 = vmatpush1.msra.mxu0 0.0
    %466 = vmatprep.subr.mxu0 0.0
    %467 = vmatpush1.msra.mxu0 0.0
    %468 = vmatprep.subr.mxu0 0.0
    %469 = vmatpush1.msra.mxu0 0.0
    %470 = vmatprep.subr.mxu0 0.0
    %471 = vmatpush1.msra.mxu0 0.0
    %472 = vmatprep.mubr.f32.mxu0 0.0
    %v473 = vand.u32 %v62, 4294901760
    %474 = vmatmul.mubr.f32.gmra.mrb[0].mxu0 %v473
    %v475 = vpop.f32.mrb[0].mxu0
    %v476 = vadd.f32 %v233, %v475
    %v477 = vpop.f32.mrb[0].mxu0
    %v478 = vadd.f32 %v235, %v477
    %479 = vmatprep.mubr.f32.mxu0 0.0
    %v480 = vand.u32 %v63, 4294901760
    %481 = vmatmul.mubr.f32.gmra.mrb[0].mxu0 %v480
    %v482 = vpop.f32.mrb[0].mxu0
    %v483 = vadd.f32 %v244, %v482
    %v484 = vpop.f32.mrb[0].mxu0
    %v485 = vadd.f32 %v246, %v484
    %486 = vdwg.mxu0
    %v487 = vand.u32 %v65, 4294901760
    %v488 = vsub.f32 %v65, %v487
    %489 = vmatprep.subr.mxu0 %v488
    %v490 = vand.u32 %v64, 4294901760
    %v491 = vsub.f32 %v64, %v490
    %492 = vmatpush1.msra.mxu0 %v491
    %v493 = vand.u32 %v68, 4294901760
    %v494 = vsub.f32 %v68, %v493
    %495 = vmatprep.subr.mxu0 %v494
    %v496 = vand.u32 %v67, 4294901760
    %v497 = vsub.f32 %v67, %v496
    %498 = vmatpush1.msra.mxu0 %v497
    %v499 = vand.u32 %v71, 4294901760
    %v500 = vsub.f32 %v71, %v499
    %501 = vmatprep.subr.mxu0 %v500
    %v502 = vand.u32 %v70, 4294901760
    %v503 = vsub.f32 %v70, %v502
    %504 = vmatpush1.msra.mxu0 %v503
    %v505 = vand.u32 %v74, 4294901760
    %v506 = vsub.f32 %v74, %v505
    %507 = vmatprep.subr.mxu0 %v506
    %v508 = vand.u32 %v73, 4294901760
    %v509 = vsub.f32 %v73, %v508
    %510 = vmatpush1.msra.mxu0 %v509
    %v511 = vand.u32 %v77, 4294901760
    %v512 = vsub.f32 %v77, %v511
    %513 = vmatprep.subr.mxu0 %v512
    %v514 = vand.u32 %v76, 4294901760
    %v515 = vsub.f32 %v76, %v514
    %516 = vmatpush1.msra.mxu0 %v515
    %v517 = vand.u32 %v80, 4294901760
    %v518 = vsub.f32 %v80, %v517
    %519 = vmatprep.subr.mxu0 %v518
    %v520 = vand.u32 %v79, 4294901760
    %v521 = vsub.f32 %v79, %v520
    %522 = vmatpush1.msra.mxu0 %v521
    %v523 = vand.u32 %v83, 4294901760
    %v524 = vsub.f32 %v83, %v523
    %525 = vmatprep.subr.mxu0 %v524
    %v526 = vand.u32 %v82, 4294901760
    %v527 = vsub.f32 %v82, %v526
    %528 = vmatpush1.msra.mxu0 %v527
    %v529 = vand.u32 %v86, 4294901760
    %v530 = vsub.f32 %v86, %v529
    %531 = vmatprep.subr.mxu0 %v530
    %v532 = vand.u32 %v85, 4294901760
    %v533 = vsub.f32 %v85, %v532
    %534 = vmatpush1.msra.mxu0 %v533
    %v535 = vand.u32 %v89, 4294901760
    %v536 = vsub.f32 %v89, %v535
    %537 = vmatprep.subr.mxu0 %v536
    %v538 = vand.u32 %v88, 4294901760
    %v539 = vsub.f32 %v88, %v538
    %540 = vmatpush1.msra.mxu0 %v539
    %v541 = vand.u32 %v92, 4294901760
    %v542 = vsub.f32 %v92, %v541
    %543 = vmatprep.subr.mxu0 %v542
    %v544 = vand.u32 %v91, 4294901760
    %v545 = vsub.f32 %v91, %v544
    %546 = vmatpush1.msra.mxu0 %v545
    %v547 = vand.u32 %v95, 4294901760
    %v548 = vsub.f32 %v95, %v547
    %549 = vmatprep.subr.mxu0 %v548
    %v550 = vand.u32 %v94, 4294901760
    %v551 = vsub.f32 %v94, %v550
    %552 = vmatpush1.msra.mxu0 %v551
    %v553 = vand.u32 %v98, 4294901760
    %v554 = vsub.f32 %v98, %v553
    %555 = vmatprep.subr.mxu0 %v554
    %v556 = vand.u32 %v97, 4294901760
    %v557 = vsub.f32 %v97, %v556
    %558 = vmatpush1.msra.mxu0 %v557
    %v559 = vand.u32 %v101, 4294901760
    %v560 = vsub.f32 %v101, %v559
    %561 = vmatprep.subr.mxu0 %v560
    %v562 = vand.u32 %v100, 4294901760
    %v563 = vsub.f32 %v100, %v562
    %564 = vmatpush1.msra.mxu0 %v563
    %v565 = vand.u32 %v104, 4294901760
    %v566 = vsub.f32 %v104, %v565
    %567 = vmatprep.subr.mxu0 %v566
    %v568 = vand.u32 %v103, 4294901760
    %v569 = vsub.f32 %v103, %v568
    %570 = vmatpush1.msra.mxu0 %v569
    %v571 = vand.u32 %v107, 4294901760
    %v572 = vsub.f32 %v107, %v571
    %573 = vmatprep.subr.mxu0 %v572
    %v574 = vand.u32 %v106, 4294901760
    %v575 = vsub.f32 %v106, %v574
    %576 = vmatpush1.msra.mxu0 %v575
    %v577 = vand.u32 %v110, 4294901760
    %v578 = vsub.f32 %v110, %v577
    %579 = vmatprep.subr.mxu0 %v578
    %v580 = vand.u32 %v109, 4294901760
    %v581 = vsub.f32 %v109, %v580
    %582 = vmatpush1.msra.mxu0 %v581
    %583 = vmatprep.subr.mxu0 0.0
    %584 = vmatpush1.msra.mxu0 0.0
    %585 = vmatprep.subr.mxu0 0.0
    %586 = vmatpush1.msra.mxu0 0.0
    %587 = vmatprep.subr.mxu0 0.0
    %588 = vmatpush1.msra.mxu0 0.0
    %589 = vmatprep.subr.mxu0 0.0
    %590 = vmatpush1.msra.mxu0 0.0
    %591 = vmatprep.subr.mxu0 0.0
    %592 = vmatpush1.msra.mxu0 0.0
    %593 = vmatprep.subr.mxu0 0.0
    %594 = vmatpush1.msra.mxu0 0.0
    %595 = vmatprep.subr.mxu0 0.0
    %596 = vmatpush1.msra.mxu0 0.0
    %597 = vmatprep.subr.mxu0 0.0
    %598 = vmatpush1.msra.mxu0 0.0
    %599 = vmatprep.subr.mxu0 0.0
    %600 = vmatpush1.msra.mxu0 0.0
    %601 = vmatprep.subr.mxu0 0.0
    %602 = vmatpush1.msra.mxu0 0.0
    %603 = vmatprep.subr.mxu0 0.0
    %604 = vmatpush1.msra.mxu0 0.0
    %605 = vmatprep.subr.mxu0 0.0
    %606 = vmatpush1.msra.mxu0 0.0
    %607 = vmatprep.subr.mxu0 0.0
    %608 = vmatpush1.msra.mxu0 0.0
    %609 = vmatprep.subr.mxu0 0.0
    %610 = vmatpush1.msra.mxu0 0.0
    %611 = vmatprep.subr.mxu0 0.0
    %612 = vmatpush1.msra.mxu0 0.0
    %613 = vmatprep.subr.mxu0 0.0
    %614 = vmatpush1.msra.mxu0 0.0
    %615 = vmatprep.mubr.f32.mxu0 0.0
    %v616 = vand.u32 %v62, 4294901760
    %v617 = vsub.f32 %v62, %v616
    %618 = vmatmul.mubr.f32.gmra.mrb[0].mxu0 %v617
    %v619 = vpop.f32.mrb[0].mxu0
    %v620 = vadd.f32 %v476, %v619
    %v621 = vpop.f32.mrb[0].mxu0
    %v622 = vadd.f32 %v478, %v621
    %623 = vmatprep.mubr.f32.mxu0 0.0
    %v624 = vand.u32 %v63, 4294901760
    %v625 = vsub.f32 %v63, %v624
    %626 = vmatmul.mubr.f32.gmra.mrb[0].mxu0 %v625
    %v627 = vpop.f32.mrb[0].mxu0
    %v628 = vadd.f32 %v483, %v627
    %v629 = vpop.f32.mrb[0].mxu0
    %v630 = vadd.f32 %v485, %v629
    %631 = vdwg.mxu0
    %v632 = vand.u32 %v65, 4294901760
    %633 = vmatprep.subr.mxu0 %v632
    %v634 = vand.u32 %v64, 4294901760
    %635 = vmatpush1.msra.mxu0 %v634
    %v636 = vand.u32 %v68, 4294901760
    %637 = vmatprep.subr.mxu0 %v636
    %v638 = vand.u32 %v67, 4294901760
    %639 = vmatpush1.msra.mxu0 %v638
    %v640 = vand.u32 %v71, 4294901760
    %641 = vmatprep.subr.mxu0 %v640
    %v642 = vand.u32 %v70, 4294901760
    %643 = vmatpush1.msra.mxu0 %v642
    %v644 = vand.u32 %v74, 4294901760
    %645 = vmatprep.subr.mxu0 %v644
    %v646 = vand.u32 %v73, 4294901760
    %647 = vmatpush1.msra.mxu0 %v646
    %v648 = vand.u32 %v77, 4294901760
    %649 = vmatprep.subr.mxu0 %v648
    %v650 = vand.u32 %v76, 4294901760
    %651 = vmatpush1.msra.mxu0 %v650
    %v652 = vand.u32 %v80, 4294901760
    %653 = vmatprep.subr.mxu0 %v652
    %v654 = vand.u32 %v79, 4294901760
    %655 = vmatpush1.msra.mxu0 %v654
    %v656 = vand.u32 %v83, 4294901760
    %657 = vmatprep.subr.mxu0 %v656
    %v658 = vand.u32 %v82, 4294901760
    %659 = vmatpush1.msra.mxu0 %v658
    %v660 = vand.u32 %v86, 4294901760
    %661 = vmatprep.subr.mxu0 %v660
    %v662 = vand.u32 %v85, 4294901760
    %663 = vmatpush1.msra.mxu0 %v662
    %v664 = vand.u32 %v89, 4294901760
    %665 = vmatprep.subr.mxu0 %v664
    %v666 = vand.u32 %v88, 4294901760
    %667 = vmatpush1.msra.mxu0 %v666
    %v668 = vand.u32 %v92, 4294901760
    %669 = vmatprep.subr.mxu0 %v668
    %v670 = vand.u32 %v91, 4294901760
    %671 = vmatpush1.msra.mxu0 %v670
    %v672 = vand.u32 %v95, 4294901760
    %673 = vmatprep.subr.mxu0 %v672
    %v674 = vand.u32 %v94, 4294901760
    %675 = vmatpush1.msra.mxu0 %v674
    %v676 = vand.u32 %v98, 4294901760
    %677 = vmatprep.subr.mxu0 %v676
    %v678 = vand.u32 %v97, 4294901760
    %679 = vmatpush1.msra.mxu0 %v678
    %v680 = vand.u32 %v101, 4294901760
    %681 = vmatprep.subr.mxu0 %v680
    %v682 = vand.u32 %v100, 4294901760
    %683 = vmatpush1.msra.mxu0 %v682
    %v684 = vand.u32 %v104, 4294901760
    %685 = vmatprep.subr.mxu0 %v684
    %v686 = vand.u32 %v103, 4294901760
    %687 = vmatpush1.msra.mxu0 %v686
    %v688 = vand.u32 %v107, 4294901760
    %689 = vmatprep.subr.mxu0 %v688
    %v690 = vand.u32 %v106, 4294901760
    %691 = vmatpush1.msra.mxu0 %v690
    %v692 = vand.u32 %v110, 4294901760
    %693 = vmatprep.subr.mxu0 %v692
    %v694 = vand.u32 %v109, 4294901760
    %695 = vmatpush1.msra.mxu0 %v694
    %696 = vmatprep.subr.mxu0 0.0
    %697 = vmatpush1.msra.mxu0 0.0
    %698 = vmatprep.subr.mxu0 0.0
    %699 = vmatpush1.msra.mxu0 0.0
    %700 = vmatprep.subr.mxu0 0.0
    %701 = vmatpush1.msra.mxu0 0.0
    %702 = vmatprep.subr.mxu0 0.0
    %703 = vmatpush1.msra.mxu0 0.0
    %704 = vmatprep.subr.mxu0 0.0
    %705 = vmatpush1.msra.mxu0 0.0
    %706 = vmatprep.subr.mxu0 0.0
    %707 = vmatpush1.msra.mxu0 0.0
    %708 = vmatprep.subr.mxu0 0.0
    %709 = vmatpush1.msra.mxu0 0.0
    %710 = vmatprep.subr.mxu0 0.0
    %711 = vmatpush1.msra.mxu0 0.0
    %712 = vmatprep.subr.mxu0 0.0
    %713 = vmatpush1.msra.mxu0 0.0
    %714 = vmatprep.subr.mxu0 0.0
    %715 = vmatpush1.msra.mxu0 0.0
    %716 = vmatprep.subr.mxu0 0.0
    %717 = vmatpush1.msra.mxu0 0.0
    %718 = vmatprep.subr.mxu0 0.0
    %719 = vmatpush1.msra.mxu0 0.0
    %720 = vmatprep.subr.mxu0 0.0
    %721 = vmatpush1.msra.mxu0 0.0
    %722 = vmatprep.subr.mxu0 0.0
    %723 = vmatpush1.msra.mxu0 0.0
    %724 = vmatprep.subr.mxu0 0.0
    %725 = vmatpush1.msra.mxu0 0.0
    %726 = vmatprep.subr.mxu0 0.0
    %727 = vmatpush1.msra.mxu0 0.0
    %728 = vmatprep.mubr.f32.mxu0 0.0
    %v729 = vand.u32 %v62, 4294901760
    %v730 = vsub.f32 %v62, %v729
    %v731 = vand.u32 %v730, 4294901760
    %732 = vmatmul.mubr.f32.gmra.mrb[0].mxu0 %v731
    %v733 = vpop.f32.mrb[0].mxu0
    %v734 = vadd.f32 %v620, %v733
    %v735 = vpop.f32.mrb[0].mxu0
    %v736 = vadd.f32 %v622, %v735
    %737 = vmatprep.mubr.f32.mxu0 0.0
    %v738 = vand.u32 %v63, 4294901760
    %v739 = vsub.f32 %v63, %v738
    %v740 = vand.u32 %v739, 4294901760
    %741 = vmatmul.mubr.f32.gmra.mrb[0].mxu0 %v740
    %v742 = vpop.f32.mrb[0].mxu0
    %v743 = vadd.f32 %v628, %v742
    %v744 = vpop.f32.mrb[0].mxu0
    %v745 = vadd.f32 %v630, %v744
    %746 = vdwg.mxu0
    %v747 = vand.u32 %v65, 4294901760
    %v748 = vsub.f32 %v65, %v747
    %v749 = vand.u32 %v748, 4294901760
    %750 = vmatprep.subr.mxu0 %v749
    %v751 = vand.u32 %v64, 4294901760
    %v752 = vsub.f32 %v64, %v751
    %v753 = vand.u32 %v752, 4294901760
    %754 = vmatpush1.msra.mxu0 %v753
    %v755 = vand.u32 %v68, 4294901760
    %v756 = vsub.f32 %v68, %v755
    %v757 = vand.u32 %v756, 4294901760
    %758 = vmatprep.subr.mxu0 %v757
    %v759 = vand.u32 %v67, 4294901760
    %v760 = vsub.f32 %v67, %v759
    %v761 = vand.u32 %v760, 4294901760
    %762 = vmatpush1.msra.mxu0 %v761
    %v763 = vand.u32 %v71, 4294901760
    %v764 = vsub.f32 %v71, %v763
    %v765 = vand.u32 %v764, 4294901760
    %766 = vmatprep.subr.mxu0 %v765
    %v767 = vand.u32 %v70, 4294901760
    %v768 = vsub.f32 %v70, %v767
    %v769 = vand.u32 %v768, 4294901760
    %770 = vmatpush1.msra.mxu0 %v769
    %v771 = vand.u32 %v74, 4294901760
    %v772 = vsub.f32 %v74, %v771
    %v773 = vand.u32 %v772, 4294901760
    %774 = vmatprep.subr.mxu0 %v773
    %v775 = vand.u32 %v73, 4294901760
    %v776 = vsub.f32 %v73, %v775
    %v777 = vand.u32 %v776, 4294901760
    %778 = vmatpush1.msra.mxu0 %v777
    %v779 = vand.u32 %v77, 4294901760
    %v780 = vsub.f32 %v77, %v779
    %v781 = vand.u32 %v780, 4294901760
    %782 = vmatprep.subr.mxu0 %v781
    %v783 = vand.u32 %v76, 4294901760
    %v784 = vsub.f32 %v76, %v783
    %v785 = vand.u32 %v784, 4294901760
    %786 = vmatpush1.msra.mxu0 %v785
    %v787 = vand.u32 %v80, 4294901760
    %v788 = vsub.f32 %v80, %v787
    %v789 = vand.u32 %v788, 4294901760
    %790 = vmatprep.subr.mxu0 %v789
    %v791 = vand.u32 %v79, 4294901760
    %v792 = vsub.f32 %v79, %v791
    %v793 = vand.u32 %v792, 4294901760
    %794 = vmatpush1.msra.mxu0 %v793
    %v795 = vand.u32 %v83, 4294901760
    %v796 = vsub.f32 %v83, %v795
    %v797 = vand.u32 %v796, 4294901760
    %798 = vmatprep.subr.mxu0 %v797
    %v799 = vand.u32 %v82, 4294901760
    %v800 = vsub.f32 %v82, %v799
    %v801 = vand.u32 %v800, 4294901760
    %802 = vmatpush1.msra.mxu0 %v801
    %v803 = vand.u32 %v86, 4294901760
    %v804 = vsub.f32 %v86, %v803
    %v805 = vand.u32 %v804, 4294901760
    %806 = vmatprep.subr.mxu0 %v805
    %v807 = vand.u32 %v85, 4294901760
    %v808 = vsub.f32 %v85, %v807
    %v809 = vand.u32 %v808, 4294901760
    %810 = vmatpush1.msra.mxu0 %v809
    %v811 = vand.u32 %v89, 4294901760
    %v812 = vsub.f32 %v89, %v811
    %v813 = vand.u32 %v812, 4294901760
    %814 = vmatprep.subr.mxu0 %v813
    %v815 = vand.u32 %v88, 4294901760
    %v816 = vsub.f32 %v88, %v815
    %v817 = vand.u32 %v816, 4294901760
    %818 = vmatpush1.msra.mxu0 %v817
    %v819 = vand.u32 %v92, 4294901760
    %v820 = vsub.f32 %v92, %v819
    %v821 = vand.u32 %v820, 4294901760
    %822 = vmatprep.subr.mxu0 %v821
    %v823 = vand.u32 %v91, 4294901760
    %v824 = vsub.f32 %v91, %v823
    %v825 = vand.u32 %v824, 4294901760
    %826 = vmatpush1.msra.mxu0 %v825
    %v827 = vand.u32 %v95, 4294901760
    %v828 = vsub.f32 %v95, %v827
    %v829 = vand.u32 %v828, 4294901760
    %830 = vmatprep.subr.mxu0 %v829
    %v831 = vand.u32 %v94, 4294901760
    %v832 = vsub.f32 %v94, %v831
    %v833 = vand.u32 %v832, 4294901760
    %834 = vmatpush1.msra.mxu0 %v833
    %v835 = vand.u32 %v98, 4294901760
    %v836 = vsub.f32 %v98, %v835
    %v837 = vand.u32 %v836, 4294901760
    %838 = vmatprep.subr.mxu0 %v837
    %v839 = vand.u32 %v97, 4294901760
    %v840 = vsub.f32 %v97, %v839
    %v841 = vand.u32 %v840, 4294901760
    %842 = vmatpush1.msra.mxu0 %v841
    %v843 = vand.u32 %v101, 4294901760
    %v844 = vsub.f32 %v101, %v843
    %v845 = vand.u32 %v844, 4294901760
    %846 = vmatprep.subr.mxu0 %v845
    %v847 = vand.u32 %v100, 4294901760
    %v848 = vsub.f32 %v100, %v847
    %v849 = vand.u32 %v848, 4294901760
    %850 = vmatpush1.msra.mxu0 %v849
    %v851 = vand.u32 %v104, 4294901760
    %v852 = vsub.f32 %v104, %v851
    %v853 = vand.u32 %v852, 4294901760
    %854 = vmatprep.subr.mxu0 %v853
    %v855 = vand.u32 %v103, 4294901760
    %v856 = vsub.f32 %v103, %v855
    %v857 = vand.u32 %v856, 4294901760
    %858 = vmatpush1.msra.mxu0 %v857
    %v859 = vand.u32 %v107, 4294901760
    %v860 = vsub.f32 %v107, %v859
    %v861 = vand.u32 %v860, 4294901760
    %862 = vmatprep.subr.mxu0 %v861
    %v863 = vand.u32 %v106, 4294901760
    %v864 = vsub.f32 %v106, %v863
    %v865 = vand.u32 %v864, 4294901760
    %866 = vmatpush1.msra.mxu0 %v865
    %v867 = vand.u32 %v110, 4294901760
    %v868 = vsub.f32 %v110, %v867
    %v869 = vand.u32 %v868, 4294901760
    %870 = vmatprep.subr.mxu0 %v869
    %v871 = vand.u32 %v109, 4294901760
    %v872 = vsub.f32 %v109, %v871
    %v873 = vand.u32 %v872, 4294901760
    %874 = vmatpush1.msra.mxu0 %v873
    %875 = vmatprep.subr.mxu0 0.0
    %876 = vmatpush1.msra.mxu0 0.0
    %877 = vmatprep.subr.mxu0 0.0
    %878 = vmatpush1.msra.mxu0 0.0
    %879 = vmatprep.subr.mxu0 0.0
    %880 = vmatpush1.msra.mxu0 0.0
    %881 = vmatprep.subr.mxu0 0.0
    %882 = vmatpush1.msra.mxu0 0.0
    %883 = vmatprep.subr.mxu0 0.0
    %884 = vmatpush1.msra.mxu0 0.0
    %885 = vmatprep.subr.mxu0 0.0
    %886 = vmatpush1.msra.mxu0 0.0
    %887 = vmatprep.subr.mxu0 0.0
    %888 = vmatpush1.msra.mxu0 0.0
    %889 = vmatprep.subr.mxu0 0.0
    %890 = vmatpush1.msra.mxu0 0.0
    %891 = vmatprep.subr.mxu0 0.0
    %892 = vmatpush1.msra.mxu0 0.0
    %893 = vmatprep.subr.mxu0 0.0
    %894 = vmatpush1.msra.mxu0 0.0
    %895 = vmatprep.subr.mxu0 0.0
    %896 = vmatpush1.msra.mxu0 0.0
    %897 = vmatprep.subr.mxu0 0.0
    %898 = vmatpush1.msra.mxu0 0.0
    %899 = vmatprep.subr.mxu0 0.0
    %900 = vmatpush1.msra.mxu0 0.0
    %901 = vmatprep.subr.mxu0 0.0
    %902 = vmatpush1.msra.mxu0 0.0
    %903 = vmatprep.subr.mxu0 0.0
    %904 = vmatpush1.msra.mxu0 0.0
    %905 = vmatprep.subr.mxu0 0.0
    %906 = vmatpush1.msra.mxu0 0.0
    %907 = vmatprep.mubr.f32.mxu0 0.0
    %v908 = vand.u32 %v62, 4294901760
    %909 = vmatmul.mubr.f32.gmra.mrb[0].mxu0 %v908
    %v910 = vpop.f32.mrb[0].mxu0
    %v911 = vadd.f32 %v734, %v910
    %v912 = vpop.f32.mrb[0].mxu0
    %v913 = vadd.f32 %v736, %v912
    %914 = vmatprep.mubr.f32.mxu0 0.0
    %v915 = vand.u32 %v63, 4294901760
    %916 = vmatmul.mubr.f32.gmra.mrb[0].mxu0 %v915
    %v917 = vpop.f32.mrb[0].mxu0
    %v918 = vadd.f32 %v743, %v917
    %v919 = vpop.f32.mrb[0].mxu0
    %v920 = vadd.f32 %v745, %v919
    %921 = vdwg.mxu0
    %v922 = vand.u32 %v65, 4294901760
    %923 = vmatprep.subr.mxu0 %v922
    %v924 = vand.u32 %v64, 4294901760
    %925 = vmatpush1.msra.mxu0 %v924
    %v926 = vand.u32 %v68, 4294901760
    %927 = vmatprep.subr.mxu0 %v926
    %v928 = vand.u32 %v67, 4294901760
    %929 = vmatpush1.msra.mxu0 %v928
    %v930 = vand.u32 %v71, 4294901760
    %931 = vmatprep.subr.mxu0 %v930
    %v932 = vand.u32 %v70, 4294901760
    %933 = vmatpush1.msra.mxu0 %v932
    %v934 = vand.u32 %v74, 4294901760
    %935 = vmatprep.subr.mxu0 %v934
    %v936 = vand.u32 %v73, 4294901760
    %937 = vmatpush1.msra.mxu0 %v936
    %v938 = vand.u32 %v77, 4294901760
    %939 = vmatprep.subr.mxu0 %v938
    %v940 = vand.u32 %v76, 4294901760
    %941 = vmatpush1.msra.mxu0 %v940
    %v942 = vand.u32 %v80, 4294901760
    %943 = vmatprep.subr.mxu0 %v942
    %v944 = vand.u32 %v79, 4294901760
    %945 = vmatpush1.msra.mxu0 %v944
    %v946 = vand.u32 %v83, 4294901760
    %947 = vmatprep.subr.mxu0 %v946
    %v948 = vand.u32 %v82, 4294901760
    %949 = vmatpush1.msra.mxu0 %v948
    %v950 = vand.u32 %v86, 4294901760
    %951 = vmatprep.subr.mxu0 %v950
    %v952 = vand.u32 %v85, 4294901760
    %953 = vmatpush1.msra.mxu0 %v952
    %v954 = vand.u32 %v89, 4294901760
    %955 = vmatprep.subr.mxu0 %v954
    %v956 = vand.u32 %v88, 4294901760
    %957 = vmatpush1.msra.mxu0 %v956
    %v958 = vand.u32 %v92, 4294901760
    %959 = vmatprep.subr.mxu0 %v958
    %v960 = vand.u32 %v91, 4294901760
    %961 = vmatpush1.msra.mxu0 %v960
    %v962 = vand.u32 %v95, 4294901760
    %963 = vmatprep.subr.mxu0 %v962
    %v964 = vand.u32 %v94, 4294901760
    %965 = vmatpush1.msra.mxu0 %v964
    %v966 = vand.u32 %v98, 4294901760
    %967 = vmatprep.subr.mxu0 %v966
    %v968 = vand.u32 %v97, 4294901760
    %969 = vmatpush1.msra.mxu0 %v968
    %v970 = vand.u32 %v101, 4294901760
    %971 = vmatprep.subr.mxu0 %v970
    %v972 = vand.u32 %v100, 4294901760
    %973 = vmatpush1.msra.mxu0 %v972
    %v974 = vand.u32 %v104, 4294901760
    %975 = vmatprep.subr.mxu0 %v974
    %v976 = vand.u32 %v103, 4294901760
    %977 = vmatpush1.msra.mxu0 %v976
    %v978 = vand.u32 %v107, 4294901760
    %979 = vmatprep.subr.mxu0 %v978
    %v980 = vand.u32 %v106, 4294901760
    %981 = vmatpush1.msra.mxu0 %v980
    %v982 = vand.u32 %v110, 4294901760
    %983 = vmatprep.subr.mxu0 %v982
    %v984 = vand.u32 %v109, 4294901760
    %985 = vmatpush1.msra.mxu0 %v984
    %986 = vmatprep.subr.mxu0 0.0
    %987 = vmatpush1.msra.mxu0 0.0
    %988 = vmatprep.subr.mxu0 0.0
    %989 = vmatpush1.msra.mxu0 0.0
    %990 = vmatprep.subr.mxu0 0.0
    %991 = vmatpush1.msra.mxu0 0.0
    %992 = vmatprep.subr.mxu0 0.0
    %993 = vmatpush1.msra.mxu0 0.0
    %994 = vmatprep.subr.mxu0 0.0
    %995 = vmatpush1.msra.mxu0 0.0
    %996 = vmatprep.subr.mxu0 0.0
    %997 = vmatpush1.msra.mxu0 0.0
    %998 = vmatprep.subr.mxu0 0.0
    %999 = vmatpush1.msra.mxu0 0.0
    %1000 = vmatprep.subr.mxu0 0.0
    %1001 = vmatpush1.msra.mxu0 0.0
    %1002 = vmatprep.subr.mxu0 0.0
    %1003 = vmatpush1.msra.mxu0 0.0
    %1004 = vmatprep.subr.mxu0 0.0
    %1005 = vmatpush1.msra.mxu0 0.0
    %1006 = vmatprep.subr.mxu0 0.0
    %1007 = vmatpush1.msra.mxu0 0.0
    %1008 = vmatprep.subr.mxu0 0.0
    %1009 = vmatpush1.msra.mxu0 0.0
    %1010 = vmatprep.subr.mxu0 0.0
    %1011 = vmatpush1.msra.mxu0 0.0
    %1012 = vmatprep.subr.mxu0 0.0
    %1013 = vmatpush1.msra.mxu0 0.0
    %1014 = vmatprep.subr.mxu0 0.0
    %1015 = vmatpush1.msra.mxu0 0.0
    %1016 = vmatprep.subr.mxu0 0.0
    %1017 = vmatpush1.msra.mxu0 0.0
    %1018 = vmatprep.mubr.f32.mxu0 0.0
    %v1019 = vand.u32 %v62, 4294901760
    %1020 = vmatmul.mubr.f32.gmra.mrb[0].mxu0 %v1019
    %v1021 = vpop.f32.mrb[0].mxu0
    %v1022 = vadd.f32 %v911, %v1021
    %v1023 = vpop.f32.mrb[0].mxu0
    %v1024 = vadd.f32 %v913, %v1023
    %1025 = vmatprep.mubr.f32.mxu0 0.0
    %v1026 = vand.u32 %v63, 4294901760
    %1027 = vmatmul.mubr.f32.gmra.mrb[0].mxu0 %v1026
    %v1028 = vpop.f32.mrb[0].mxu0
    %v1029 = vadd.f32 %v918, %v1028
    %v1030 = vpop.f32.mrb[0].mxu0
    %v1031 = vadd.f32 %v920, %v1030
    %1032 = vdwg.mxu0
    %1033 = vmatprep.subr.mxu0 0.0
    %v1034 = vand.u32 %v66, 4294901760
    %1035 = vmatpush1.msra.mxu0 %v1034
    %1036 = vmatprep.subr.mxu0 0.0
    %v1037 = vand.u32 %v69, 4294901760
    %1038 = vmatpush1.msra.mxu0 %v1037
    %1039 = vmatprep.subr.mxu0 0.0
    %v1040 = vand.u32 %v72, 4294901760
    %1041 = vmatpush1.msra.mxu0 %v1040
    %1042 = vmatprep.subr.mxu0 0.0
    %v1043 = vand.u32 %v75, 4294901760
    %1044 = vmatpush1.msra.mxu0 %v1043
    %1045 = vmatprep.subr.mxu0 0.0
    %v1046 = vand.u32 %v78, 4294901760
    %1047 = vmatpush1.msra.mxu0 %v1046
    %1048 = vmatprep.subr.mxu0 0.0
    %v1049 = vand.u32 %v81, 4294901760
    %1050 = vmatpush1.msra.mxu0 %v1049
    %1051 = vmatprep.subr.mxu0 0.0
    %v1052 = vand.u32 %v84, 4294901760
    %1053 = vmatpush1.msra.mxu0 %v1052
    %1054 = vmatprep.subr.mxu0 0.0
    %v1055 = vand.u32 %v87, 4294901760
    %1056 = vmatpush1.msra.mxu0 %v1055
    %1057 = vmatprep.subr.mxu0 0.0
    %v1058 = vand.u32 %v90, 4294901760
    %1059 = vmatpush1.msra.mxu0 %v1058
    %1060 = vmatprep.subr.mxu0 0.0
    %v1061 = vand.u32 %v93, 4294901760
    %1062 = vmatpush1.msra.mxu0 %v1061
    %1063 = vmatprep.subr.mxu0 0.0
    %v1064 = vand.u32 %v96, 4294901760
    %1065 = vmatpush1.msra.mxu0 %v1064
    %1066 = vmatprep.subr.mxu0 0.0
    %v1067 = vand.u32 %v99, 4294901760
    %1068 = vmatpush1.msra.mxu0 %v1067
    %1069 = vmatprep.subr.mxu0 0.0
    %v1070 = vand.u32 %v102, 4294901760
    %1071 = vmatpush1.msra.mxu0 %v1070
    %1072 = vmatprep.subr.mxu0 0.0
    %v1073 = vand.u32 %v105, 4294901760
    %1074 = vmatpush1.msra.mxu0 %v1073
    %1075 = vmatprep.subr.mxu0 0.0
    %v1076 = vand.u32 %v108, 4294901760
    %1077 = vmatpush1.msra.mxu0 %v1076
    %1078 = vmatprep.subr.mxu0 0.0
    %v1079 = vand.u32 %v111, 4294901760
    %1080 = vmatpush1.msra.mxu0 %v1079
    %1081 = vmatprep.subr.mxu0 0.0
    %1082 = vmatpush1.msra.mxu0 0.0
    %1083 = vmatprep.subr.mxu0 0.0
    %1084 = vmatpush1.msra.mxu0 0.0
    %1085 = vmatprep.subr.mxu0 0.0
    %1086 = vmatpush1.msra.mxu0 0.0
    %1087 = vmatprep.subr.mxu0 0.0
    %1088 = vmatpush1.msra.mxu0 0.0
    %1089 = vmatprep.subr.mxu0 0.0
    %1090 = vmatpush1.msra.mxu0 0.0
    %1091 = vmatprep.subr.mxu0 0.0
    %1092 = vmatpush1.msra.mxu0 0.0
    %1093 = vmatprep.subr.mxu0 0.0
    %1094 = vmatpush1.msra.mxu0 0.0
    %1095 = vmatprep.subr.mxu0 0.0
    %1096 = vmatpush1.msra.mxu0 0.0
    %1097 = vmatprep.subr.mxu0 0.0
    %1098 = vmatpush1.msra.mxu0 0.0
    %1099 = vmatprep.subr.mxu0 0.0
    %1100 = vmatpush1.msra.mxu0 0.0
    %1101 = vmatprep.subr.mxu0 0.0
    %1102 = vmatpush1.msra.mxu0 0.0
    %1103 = vmatprep.subr.mxu0 0.0
    %1104 = vmatpush1.msra.mxu0 0.0
    %1105 = vmatprep.subr.mxu0 0.0
    %1106 = vmatpush1.msra.mxu0 0.0
    %1107 = vmatprep.subr.mxu0 0.0
    %1108 = vmatpush1.msra.mxu0 0.0
    %1109 = vmatprep.subr.mxu0 0.0
    %1110 = vmatpush1.msra.mxu0 0.0
    %1111 = vmatprep.subr.mxu0 0.0
    %1112 = vmatpush1.msra.mxu0 0.0
    %1113 = vmatprep.mubr.f32.mxu0 0.0
    %v1114 = vand.u32 %v62, 4294901760
    %v1115 = vsub.f32 %v62, %v1114
    %v1116 = vand.u32 %v1115, 4294901760
    %v1117 = vsub.f32 %v1115, %v1116
    %v1118 = vand.u32 %v1117, 4294901760
    %1119 = vmatmul.mubr.f32.gmra.mrb[0].mxu0 %v1118
    %v1120 = vpop.f32.mrb[0].mxu0
    %v1121 = vadd.f32 %v125, %v1120
    %v1122 = vpop.f32.mrb[0].mxu0
    %1123 = vmatprep.mubr.f32.mxu0 0.0
    %v1124 = vand.u32 %v63, 4294901760
    %v1125 = vsub.f32 %v63, %v1124
    %v1126 = vand.u32 %v1125, 4294901760
    %v1127 = vsub.f32 %v1125, %v1126
    %v1128 = vand.u32 %v1127, 4294901760
    %1129 = vmatmul.mubr.f32.gmra.mrb[0].mxu0 %v1128
    %v1130 = vpop.f32.mrb[0].mxu0
    %v1131 = vadd.f32 %v125, %v1130
    %v1132 = vpop.f32.mrb[0].mxu0
    %1133 = vdwg.mxu0
    %1134 = vmatprep.subr.mxu0 0.0
    %v1135 = vand.u32 %v66, 4294901760
    %v1136 = vsub.f32 %v66, %v1135
    %v1137 = vand.u32 %v1136, 4294901760
    %v1138 = vsub.f32 %v1136, %v1137
    %v1139 = vand.u32 %v1138, 4294901760
    %1140 = vmatpush1.msra.mxu0 %v1139
    %1141 = vmatprep.subr.mxu0 0.0
    %v1142 = vand.u32 %v69, 4294901760
    %v1143 = vsub.f32 %v69, %v1142
    %v1144 = vand.u32 %v1143, 4294901760
    %v1145 = vsub.f32 %v1143, %v1144
    %v1146 = vand.u32 %v1145, 4294901760
    %1147 = vmatpush1.msra.mxu0 %v1146
    %1148 = vmatprep.subr.mxu0 0.0
    %v1149 = vand.u32 %v72, 4294901760
    %v1150 = vsub.f32 %v72, %v1149
    %v1151 = vand.u32 %v1150, 4294901760
    %v1152 = vsub.f32 %v1150, %v1151
    %v1153 = vand.u32 %v1152, 4294901760
    %1154 = vmatpush1.msra.mxu0 %v1153
    %1155 = vmatprep.subr.mxu0 0.0
    %v1156 = vand.u32 %v75, 4294901760
    %v1157 = vsub.f32 %v75, %v1156
    %v1158 = vand.u32 %v1157, 4294901760
    %v1159 = vsub.f32 %v1157, %v1158
    %v1160 = vand.u32 %v1159, 4294901760
    %1161 = vmatpush1.msra.mxu0 %v1160
    %1162 = vmatprep.subr.mxu0 0.0
    %v1163 = vand.u32 %v78, 4294901760
    %v1164 = vsub.f32 %v78, %v1163
    %v1165 = vand.u32 %v1164, 4294901760
    %v1166 = vsub.f32 %v1164, %v1165
    %v1167 = vand.u32 %v1166, 4294901760
    %1168 = vmatpush1.msra.mxu0 %v1167
    %1169 = vmatprep.subr.mxu0 0.0
    %v1170 = vand.u32 %v81, 4294901760
    %v1171 = vsub.f32 %v81, %v1170
    %v1172 = vand.u32 %v1171, 4294901760
    %v1173 = vsub.f32 %v1171, %v1172
    %v1174 = vand.u32 %v1173, 4294901760
    %1175 = vmatpush1.msra.mxu0 %v1174
    %1176 = vmatprep.subr.mxu0 0.0
    %v1177 = vand.u32 %v84, 4294901760
    %v1178 = vsub.f32 %v84, %v1177
    %v1179 = vand.u32 %v1178, 4294901760
    %v1180 = vsub.f32 %v1178, %v1179
    %v1181 = vand.u32 %v1180, 4294901760
    %1182 = vmatpush1.msra.mxu0 %v1181
    %1183 = vmatprep.subr.mxu0 0.0
    %v1184 = vand.u32 %v87, 4294901760
    %v1185 = vsub.f32 %v87, %v1184
    %v1186 = vand.u32 %v1185, 4294901760
    %v1187 = vsub.f32 %v1185, %v1186
    %v1188 = vand.u32 %v1187, 4294901760
    %1189 = vmatpush1.msra.mxu0 %v1188
    %1190 = vmatprep.subr.mxu0 0.0
    %v1191 = vand.u32 %v90, 4294901760
    %v1192 = vsub.f32 %v90, %v1191
    %v1193 = vand.u32 %v1192, 4294901760
    %v1194 = vsub.f32 %v1192, %v1193
    %v1195 = vand.u32 %v1194, 4294901760
    %1196 = vmatpush1.msra.mxu0 %v1195
    %1197 = vmatprep.subr.mxu0 0.0
    %v1198 = vand.u32 %v93, 4294901760
    %v1199 = vsub.f32 %v93, %v1198
    %v1200 = vand.u32 %v1199, 4294901760
    %v1201 = vsub.f32 %v1199, %v1200
    %v1202 = vand.u32 %v1201, 4294901760
    %1203 = vmatpush1.msra.mxu0 %v1202
    %1204 = vmatprep.subr.mxu0 0.0
    %v1205 = vand.u32 %v96, 4294901760
    %v1206 = vsub.f32 %v96, %v1205
    %v1207 = vand.u32 %v1206, 4294901760
    %v1208 = vsub.f32 %v1206, %v1207
    %v1209 = vand.u32 %v1208, 4294901760
    %1210 = vmatpush1.msra.mxu0 %v1209
    %1211 = vmatprep.subr.mxu0 0.0
    %v1212 = vand.u32 %v99, 4294901760
    %v1213 = vsub.f32 %v99, %v1212
    %v1214 = vand.u32 %v1213, 4294901760
    %v1215 = vsub.f32 %v1213, %v1214
    %v1216 = vand.u32 %v1215, 4294901760
    %1217 = vmatpush1.msra.mxu0 %v1216
    %1218 = vmatprep.subr.mxu0 0.0
    %v1219 = vand.u32 %v102, 4294901760
    %v1220 = vsub.f32 %v102, %v1219
    %v1221 = vand.u32 %v1220, 4294901760
    %v1222 = vsub.f32 %v1220, %v1221
    %v1223 = vand.u32 %v1222, 4294901760
    %1224 = vmatpush1.msra.mxu0 %v1223
    %1225 = vmatprep.subr.mxu0 0.0
    %v1226 = vand.u32 %v105, 4294901760
    %v1227 = vsub.f32 %v105, %v1226
    %v1228 = vand.u32 %v1227, 4294901760
    %v1229 = vsub.f32 %v1227, %v1228
    %v1230 = vand.u32 %v1229, 4294901760
    %1231 = vmatpush1.msra.mxu0 %v1230
    %1232 = vmatprep.subr.mxu0 0.0
    %v1233 = vand.u32 %v108, 4294901760
    %v1234 = vsub.f32 %v108, %v1233
    %v1235 = vand.u32 %v1234, 4294901760
    %v1236 = vsub.f32 %v1234, %v1235
    %v1237 = vand.u32 %v1236, 4294901760
    %1238 = vmatpush1.msra.mxu0 %v1237
    %1239 = vmatprep.subr.mxu0 0.0
    %v1240 = vand.u32 %v111, 4294901760
    %v1241 = vsub.f32 %v111, %v1240
    %v1242 = vand.u32 %v1241, 4294901760
    %v1243 = vsub.f32 %v1241, %v1242
    %v1244 = vand.u32 %v1243, 4294901760
    %1245 = vmatpush1.msra.mxu0 %v1244
    %1246 = vmatprep.subr.mxu0 0.0
    %1247 = vmatpush1.msra.mxu0 0.0
    %1248 = vmatprep.subr.mxu0 0.0
    %1249 = vmatpush1.msra.mxu0 0.0
    %1250 = vmatprep.subr.mxu0 0.0
    %1251 = vmatpush1.msra.mxu0 0.0
    %1252 = vmatprep.subr.mxu0 0.0
    %1253 = vmatpush1.msra.mxu0 0.0
    %1254 = vmatprep.subr.mxu0 0.0
    %1255 = vmatpush1.msra.mxu0 0.0
    %1256 = vmatprep.subr.mxu0 0.0
    %1257 = vmatpush1.msra.mxu0 0.0
    %1258 = vmatprep.subr.mxu0 0.0
    %1259 = vmatpush1.msra.mxu0 0.0
    %1260 = vmatprep.subr.mxu0 0.0
    %1261 = vmatpush1.msra.mxu0 0.0
    %1262 = vmatprep.subr.mxu0 0.0
    %1263 = vmatpush1.msra.mxu0 0.0
    %1264 = vmatprep.subr.mxu0 0.0
    %1265 = vmatpush1.msra.mxu0 0.0
    %1266 = vmatprep.subr.mxu0 0.0
    %1267 = vmatpush1.msra.mxu0 0.0
    %1268 = vmatprep.subr.mxu0 0.0
    %1269 = vmatpush1.msra.mxu0 0.0
    %1270 = vmatprep.subr.mxu0 0.0
    %1271 = vmatpush1.msra.mxu0 0.0
    %1272 = vmatprep.subr.mxu0 0.0
    %1273 = vmatpush1.msra.mxu0 0.0
    %1274 = vmatprep.subr.mxu0 0.0
    %1275 = vmatpush1.msra.mxu0 0.0
    %1276 = vmatprep.subr.mxu0 0.0
    %1277 = vmatpush1.msra.mxu0 0.0
    %1278 = vmatprep.mubr.f32.mxu0 0.0
    %v1279 = vand.u32 %v62, 4294901760
    %1280 = vmatmul.mubr.f32.gmra.mrb[0].mxu0 %v1279
    %v1281 = vpop.f32.mrb[0].mxu0
    %v1282 = vadd.f32 %v1121, %v1281
    %v1283 = vpop.f32.mrb[0].mxu0
    %1284 = vmatprep.mubr.f32.mxu0 0.0
    %v1285 = vand.u32 %v63, 4294901760
    %1286 = vmatmul.mubr.f32.gmra.mrb[0].mxu0 %v1285
    %v1287 = vpop.f32.mrb[0].mxu0
    %v1288 = vadd.f32 %v1131, %v1287
    %v1289 = vpop.f32.mrb[0].mxu0
    %1290 = vdwg.mxu0
    %1291 = vmatprep.subr.mxu0 0.0
    %v1292 = vand.u32 %v66, 4294901760
    %v1293 = vsub.f32 %v66, %v1292
    %1294 = vmatpush1.msra.mxu0 %v1293
    %1295 = vmatprep.subr.mxu0 0.0
    %v1296 = vand.u32 %v69, 4294901760
    %v1297 = vsub.f32 %v69, %v1296
    %1298 = vmatpush1.msra.mxu0 %v1297
    %1299 = vmatprep.subr.mxu0 0.0
    %v1300 = vand.u32 %v72, 4294901760
    %v1301 = vsub.f32 %v72, %v1300
    %1302 = vmatpush1.msra.mxu0 %v1301
    %1303 = vmatprep.subr.mxu0 0.0
    %v1304 = vand.u32 %v75, 4294901760
    %v1305 = vsub.f32 %v75, %v1304
    %1306 = vmatpush1.msra.mxu0 %v1305
    %1307 = vmatprep.subr.mxu0 0.0
    %v1308 = vand.u32 %v78, 4294901760
    %v1309 = vsub.f32 %v78, %v1308
    %1310 = vmatpush1.msra.mxu0 %v1309
    %1311 = vmatprep.subr.mxu0 0.0
    %v1312 = vand.u32 %v81, 4294901760
    %v1313 = vsub.f32 %v81, %v1312
    %1314 = vmatpush1.msra.mxu0 %v1313
    %1315 = vmatprep.subr.mxu0 0.0
    %v1316 = vand.u32 %v84, 4294901760
    %v1317 = vsub.f32 %v84, %v1316
    %1318 = vmatpush1.msra.mxu0 %v1317
    %1319 = vmatprep.subr.mxu0 0.0
    %v1320 = vand.u32 %v87, 4294901760
    %v1321 = vsub.f32 %v87, %v1320
    %1322 = vmatpush1.msra.mxu0 %v1321
    %1323 = vmatprep.subr.mxu0 0.0
    %v1324 = vand.u32 %v90, 4294901760
    %v1325 = vsub.f32 %v90, %v1324
    %1326 = vmatpush1.msra.mxu0 %v1325
    %1327 = vmatprep.subr.mxu0 0.0
    %v1328 = vand.u32 %v93, 4294901760
    %v1329 = vsub.f32 %v93, %v1328
    %1330 = vmatpush1.msra.mxu0 %v1329
    %1331 = vmatprep.subr.mxu0 0.0
    %v1332 = vand.u32 %v96, 4294901760
    %v1333 = vsub.f32 %v96, %v1332
    %1334 = vmatpush1.msra.mxu0 %v1333
    %1335 = vmatprep.subr.mxu0 0.0
    %v1336 = vand.u32 %v99, 4294901760
    %v1337 = vsub.f32 %v99, %v1336
    %1338 = vmatpush1.msra.mxu0 %v1337
    %1339 = vmatprep.subr.mxu0 0.0
    %v1340 = vand.u32 %v102, 4294901760
    %v1341 = vsub.f32 %v102, %v1340
    %1342 = vmatpush1.msra.mxu0 %v1341
    %1343 = vmatprep.subr.mxu0 0.0
    %v1344 = vand.u32 %v105, 4294901760
    %v1345 = vsub.f32 %v105, %v1344
    %1346 = vmatpush1.msra.mxu0 %v1345
    %1347 = vmatprep.subr.mxu0 0.0
    %v1348 = vand.u32 %v108, 4294901760
    %v1349 = vsub.f32 %v108, %v1348
    %1350 = vmatpush1.msra.mxu0 %v1349
    %1351 = vmatprep.subr.mxu0 0.0
    %v1352 = vand.u32 %v111, 4294901760
    %v1353 = vsub.f32 %v111, %v1352
    %1354 = vmatpush1.msra.mxu0 %v1353
    %1355 = vmatprep.subr.mxu0 0.0
    %1356 = vmatpush1.msra.mxu0 0.0
    %1357 = vmatprep.subr.mxu0 0.0
    %1358 = vmatpush1.msra.mxu0 0.0
    %1359 = vmatprep.subr.mxu0 0.0
    %1360 = vmatpush1.msra.mxu0 0.0
    %1361 = vmatprep.subr.mxu0 0.0
    %1362 = vmatpush1.msra.mxu0 0.0
    %1363 = vmatprep.subr.mxu0 0.0
    %1364 = vmatpush1.msra.mxu0 0.0
    %1365 = vmatprep.subr.mxu0 0.0
    %1366 = vmatpush1.msra.mxu0 0.0
    %1367 = vmatprep.subr.mxu0 0.0
    %1368 = vmatpush1.msra.mxu0 0.0
    %1369 = vmatprep.subr.mxu0 0.0
    %1370 = vmatpush1.msra.mxu0 0.0
    %1371 = vmatprep.subr.mxu0 0.0
    %1372 = vmatpush1.msra.mxu0 0.0
    %1373 = vmatprep.subr.mxu0 0.0
    %1374 = vmatpush1.msra.mxu0 0.0
    %1375 = vmatprep.subr.mxu0 0.0
    %1376 = vmatpush1.msra.mxu0 0.0
    %1377 = vmatprep.subr.mxu0 0.0
    %1378 = vmatpush1.msra.mxu0 0.0
    %1379 = vmatprep.subr.mxu0 0.0
    %1380 = vmatpush1.msra.mxu0 0.0
    %1381 = vmatprep.subr.mxu0 0.0
    %1382 = vmatpush1.msra.mxu0 0.0
    %1383 = vmatprep.subr.mxu0 0.0
    %1384 = vmatpush1.msra.mxu0 0.0
    %1385 = vmatprep.subr.mxu0 0.0
    %1386 = vmatpush1.msra.mxu0 0.0
    %1387 = vmatprep.mubr.f32.mxu0 0.0
    %v1388 = vand.u32 %v62, 4294901760
    %v1389 = vsub.f32 %v62, %v1388
    %1390 = vmatmul.mubr.f32.gmra.mrb[0].mxu0 %v1389
    %v1391 = vpop.f32.mrb[0].mxu0
    %v1392 = vadd.f32 %v1282, %v1391
    %v1393 = vpop.f32.mrb[0].mxu0
    %1394 = vmatprep.mubr.f32.mxu0 0.0
    %v1395 = vand.u32 %v63, 4294901760
    %v1396 = vsub.f32 %v63, %v1395
    %1397 = vmatmul.mubr.f32.gmra.mrb[0].mxu0 %v1396
    %v1398 = vpop.f32.mrb[0].mxu0
    %v1399 = vadd.f32 %v1288, %v1398
    %v1400 = vpop.f32.mrb[0].mxu0
    %1401 = vdwg.mxu0
    %1402 = vmatprep.subr.mxu0 0.0
    %v1403 = vand.u32 %v66, 4294901760
    %1404 = vmatpush1.msra.mxu0 %v1403
    %1405 = vmatprep.subr.mxu0 0.0
    %v1406 = vand.u32 %v69, 4294901760
    %1407 = vmatpush1.msra.mxu0 %v1406
    %1408 = vmatprep.subr.mxu0 0.0
    %v1409 = vand.u32 %v72, 4294901760
    %1410 = vmatpush1.msra.mxu0 %v1409
    %1411 = vmatprep.subr.mxu0 0.0
    %v1412 = vand.u32 %v75, 4294901760
    %1413 = vmatpush1.msra.mxu0 %v1412
    %1414 = vmatprep.subr.mxu0 0.0
    %v1415 = vand.u32 %v78, 4294901760
    %1416 = vmatpush1.msra.mxu0 %v1415
    %1417 = vmatprep.subr.mxu0 0.0
    %v1418 = vand.u32 %v81, 4294901760
    %1419 = vmatpush1.msra.mxu0 %v1418
    %1420 = vmatprep.subr.mxu0 0.0
    %v1421 = vand.u32 %v84, 4294901760
    %1422 = vmatpush1.msra.mxu0 %v1421
    %1423 = vmatprep.subr.mxu0 0.0
    %v1424 = vand.u32 %v87, 4294901760
    %1425 = vmatpush1.msra.mxu0 %v1424
    %1426 = vmatprep.subr.mxu0 0.0
    %v1427 = vand.u32 %v90, 4294901760
    %1428 = vmatpush1.msra.mxu0 %v1427
    %1429 = vmatprep.subr.mxu0 0.0
    %v1430 = vand.u32 %v93, 4294901760
    %1431 = vmatpush1.msra.mxu0 %v1430
    %1432 = vmatprep.subr.mxu0 0.0
    %v1433 = vand.u32 %v96, 4294901760
    %1434 = vmatpush1.msra.mxu0 %v1433
    %1435 = vmatprep.subr.mxu0 0.0
    %v1436 = vand.u32 %v99, 4294901760
    %1437 = vmatpush1.msra.mxu0 %v1436
    %1438 = vmatprep.subr.mxu0 0.0
    %v1439 = vand.u32 %v102, 4294901760
    %1440 = vmatpush1.msra.mxu0 %v1439
    %1441 = vmatprep.subr.mxu0 0.0
    %v1442 = vand.u32 %v105, 4294901760
    %1443 = vmatpush1.msra.mxu0 %v1442
    %1444 = vmatprep.subr.mxu0 0.0
    %v1445 = vand.u32 %v108, 4294901760
    %1446 = vmatpush1.msra.mxu0 %v1445
    %1447 = vmatprep.subr.mxu0 0.0
    %v1448 = vand.u32 %v111, 4294901760
    %1449 = vmatpush1.msra.mxu0 %v1448
    %1450 = vmatprep.subr.mxu0 0.0
    %1451 = vmatpush1.msra.mxu0 0.0
    %1452 = vmatprep.subr.mxu0 0.0
    %1453 = vmatpush1.msra.mxu0 0.0
    %1454 = vmatprep.subr.mxu0 0.0
    %1455 = vmatpush1.msra.mxu0 0.0
    %1456 = vmatprep.subr.mxu0 0.0
    %1457 = vmatpush1.msra.mxu0 0.0
    %1458 = vmatprep.subr.mxu0 0.0
    %1459 = vmatpush1.msra.mxu0 0.0
    %1460 = vmatprep.subr.mxu0 0.0
    %1461 = vmatpush1.msra.mxu0 0.0
    %1462 = vmatprep.subr.mxu0 0.0
    %1463 = vmatpush1.msra.mxu0 0.0
    %1464 = vmatprep.subr.mxu0 0.0
    %1465 = vmatpush1.msra.mxu0 0.0
    %1466 = vmatprep.subr.mxu0 0.0
    %1467 = vmatpush1.msra.mxu0 0.0
    %1468 = vmatprep.subr.mxu0 0.0
    %1469 = vmatpush1.msra.mxu0 0.0
    %1470 = vmatprep.subr.mxu0 0.0
    %1471 = vmatpush1.msra.mxu0 0.0
    %1472 = vmatprep.subr.mxu0 0.0
    %1473 = vmatpush1.msra.mxu0 0.0
    %1474 = vmatprep.subr.mxu0 0.0
    %1475 = vmatpush1.msra.mxu0 0.0
    %1476 = vmatprep.subr.mxu0 0.0
    %1477 = vmatpush1.msra.mxu0 0.0
    %1478 = vmatprep.subr.mxu0 0.0
    %1479 = vmatpush1.msra.mxu0 0.0
    %1480 = vmatprep.subr.mxu0 0.0
    %1481 = vmatpush1.msra.mxu0 0.0
    %1482 = vmatprep.mubr.f32.mxu0 0.0
    %v1483 = vand.u32 %v62, 4294901760
    %v1484 = vsub.f32 %v62, %v1483
    %v1485 = vand.u32 %v1484, 4294901760
    %1486 = vmatmul.mubr.f32.gmra.mrb[0].mxu0 %v1485
    %v1487 = vpop.f32.mrb[0].mxu0
    %v1488 = vadd.f32 %v1392, %v1487
    %v1489 = vpop.f32.mrb[0].mxu0
    %1490 = vmatprep.mubr.f32.mxu0 0.0
    %v1491 = vand.u32 %v63, 4294901760
    %v1492 = vsub.f32 %v63, %v1491
    %v1493 = vand.u32 %v1492, 4294901760
    %1494 = vmatmul.mubr.f32.gmra.mrb[0].mxu0 %v1493
    %v1495 = vpop.f32.mrb[0].mxu0
    %v1496 = vadd.f32 %v1399, %v1495
    %v1497 = vpop.f32.mrb[0].mxu0
    %1498 = vdwg.mxu0
    %1499 = vmatprep.subr.mxu0 0.0
    %v1500 = vand.u32 %v66, 4294901760
    %v1501 = vsub.f32 %v66, %v1500
    %v1502 = vand.u32 %v1501, 4294901760
    %1503 = vmatpush1.msra.mxu0 %v1502
    %1504 = vmatprep.subr.mxu0 0.0
    %v1505 = vand.u32 %v69, 4294901760
    %v1506 = vsub.f32 %v69, %v1505
    %v1507 = vand.u32 %v1506, 4294901760
    %1508 = vmatpush1.msra.mxu0 %v1507
    %1509 = vmatprep.subr.mxu0 0.0
    %v1510 = vand.u32 %v72, 4294901760
    %v1511 = vsub.f32 %v72, %v1510
    %v1512 = vand.u32 %v1511, 4294901760
    %1513 = vmatpush1.msra.mxu0 %v1512
    %1514 = vmatprep.subr.mxu0 0.0
    %v1515 = vand.u32 %v75, 4294901760
    %v1516 = vsub.f32 %v75, %v1515
    %v1517 = vand.u32 %v1516, 4294901760
    %1518 = vmatpush1.msra.mxu0 %v1517
    %1519 = vmatprep.subr.mxu0 0.0
    %v1520 = vand.u32 %v78, 4294901760
    %v1521 = vsub.f32 %v78, %v1520
    %v1522 = vand.u32 %v1521, 4294901760
    %1523 = vmatpush1.msra.mxu0 %v1522
    %1524 = vmatprep.subr.mxu0 0.0
    %v1525 = vand.u32 %v81, 4294901760
    %v1526 = vsub.f32 %v81, %v1525
    %v1527 = vand.u32 %v1526, 4294901760
    %1528 = vmatpush1.msra.mxu0 %v1527
    %1529 = vmatprep.subr.mxu0 0.0
    %v1530 = vand.u32 %v84, 4294901760
    %v1531 = vsub.f32 %v84, %v1530
    %v1532 = vand.u32 %v1531, 4294901760
    %1533 = vmatpush1.msra.mxu0 %v1532
    %1534 = vmatprep.subr.mxu0 0.0
    %v1535 = vand.u32 %v87, 4294901760
    %v1536 = vsub.f32 %v87, %v1535
    %v1537 = vand.u32 %v1536, 4294901760
    %1538 = vmatpush1.msra.mxu0 %v1537
    %1539 = vmatprep.subr.mxu0 0.0
    %v1540 = vand.u32 %v90, 4294901760
    %v1541 = vsub.f32 %v90, %v1540
    %v1542 = vand.u32 %v1541, 4294901760
    %1543 = vmatpush1.msra.mxu0 %v1542
    %1544 = vmatprep.subr.mxu0 0.0
    %v1545 = vand.u32 %v93, 4294901760
    %v1546 = vsub.f32 %v93, %v1545
    %v1547 = vand.u32 %v1546, 4294901760
    %1548 = vmatpush1.msra.mxu0 %v1547
    %1549 = vmatprep.subr.mxu0 0.0
    %v1550 = vand.u32 %v96, 4294901760
    %v1551 = vsub.f32 %v96, %v1550
    %v1552 = vand.u32 %v1551, 4294901760
    %1553 = vmatpush1.msra.mxu0 %v1552
    %1554 = vmatprep.subr.mxu0 0.0
    %v1555 = vand.u32 %v99, 4294901760
    %v1556 = vsub.f32 %v99, %v1555
    %v1557 = vand.u32 %v1556, 4294901760
    %1558 = vmatpush1.msra.mxu0 %v1557
    %1559 = vmatprep.subr.mxu0 0.0
    %v1560 = vand.u32 %v102, 4294901760
    %v1561 = vsub.f32 %v102, %v1560
    %v1562 = vand.u32 %v1561, 4294901760
    %1563 = vmatpush1.msra.mxu0 %v1562
    %1564 = vmatprep.subr.mxu0 0.0
    %v1565 = vand.u32 %v105, 4294901760
    %v1566 = vsub.f32 %v105, %v1565
    %v1567 = vand.u32 %v1566, 4294901760
    %1568 = vmatpush1.msra.mxu0 %v1567
    %1569 = vmatprep.subr.mxu0 0.0
    %v1570 = vand.u32 %v108, 4294901760
    %v1571 = vsub.f32 %v108, %v1570
    %v1572 = vand.u32 %v1571, 4294901760
    %1573 = vmatpush1.msra.mxu0 %v1572
    %1574 = vmatprep.subr.mxu0 0.0
    %v1575 = vand.u32 %v111, 4294901760
    %v1576 = vsub.f32 %v111, %v1575
    %v1577 = vand.u32 %v1576, 4294901760
    %1578 = vmatpush1.msra.mxu0 %v1577
    %1579 = vmatprep.subr.mxu0 0.0
    %1580 = vmatpush1.msra.mxu0 0.0
    %1581 = vmatprep.subr.mxu0 0.0
    %1582 = vmatpush1.msra.mxu0 0.0
    %1583 = vmatprep.subr.mxu0 0.0
    %1584 = vmatpush1.msra.mxu0 0.0
    %1585 = vmatprep.subr.mxu0 0.0
    %1586 = vmatpush1.msra.mxu0 0.0
    %1587 = vmatprep.subr.mxu0 0.0
    %1588 = vmatpush1.msra.mxu0 0.0
    %1589 = vmatprep.subr.mxu0 0.0
    %1590 = vmatpush1.msra.mxu0 0.0
    %1591 = vmatprep.subr.mxu0 0.0
    %1592 = vmatpush1.msra.mxu0 0.0
    %1593 = vmatprep.subr.mxu0 0.0
    %1594 = vmatpush1.msra.mxu0 0.0
    %1595 = vmatprep.subr.mxu0 0.0
    %1596 = vmatpush1.msra.mxu0 0.0
    %1597 = vmatprep.subr.mxu0 0.0
    %1598 = vmatpush1.msra.mxu0 0.0
    %1599 = vmatprep.subr.mxu0 0.0
    %1600 = vmatpush1.msra.mxu0 0.0
    %1601 = vmatprep.subr.mxu0 0.0
    %1602 = vmatpush1.msra.mxu0 0.0
    %1603 = vmatprep.subr.mxu0 0.0
    %1604 = vmatpush1.msra.mxu0 0.0
    %1605 = vmatprep.subr.mxu0 0.0
    %1606 = vmatpush1.msra.mxu0 0.0
    %1607 = vmatprep.subr.mxu0 0.0
    %1608 = vmatpush1.msra.mxu0 0.0
    %1609 = vmatprep.subr.mxu0 0.0
    %1610 = vmatpush1.msra.mxu0 0.0
    %1611 = vmatprep.mubr.f32.mxu0 0.0
    %v1612 = vand.u32 %v62, 4294901760
    %1613 = vmatmul.mubr.f32.gmra.mrb[0].mxu0 %v1612
    %v1614 = vpop.f32.mrb[0].mxu0
    %v1615 = vadd.f32 %v1488, %v1614
    %v1616 = vpop.f32.mrb[0].mxu0
    %1617 = vmatprep.mubr.f32.mxu0 0.0
    %v1618 = vand.u32 %v63, 4294901760
    %1619 = vmatmul.mubr.f32.gmra.mrb[0].mxu0 %v1618
    %v1620 = vpop.f32.mrb[0].mxu0
    %v1621 = vadd.f32 %v1496, %v1620
    %v1622 = vpop.f32.mrb[0].mxu0
    %1623 = vdwg.mxu0
    %1624 = vmatprep.subr.mxu0 0.0
    %v1625 = vand.u32 %v66, 4294901760
    %1626 = vmatpush1.msra.mxu0 %v1625
    %1627 = vmatprep.subr.mxu0 0.0
    %v1628 = vand.u32 %v69, 4294901760
    %1629 = vmatpush1.msra.mxu0 %v1628
    %1630 = vmatprep.subr.mxu0 0.0
    %v1631 = vand.u32 %v72, 4294901760
    %1632 = vmatpush1.msra.mxu0 %v1631
    %1633 = vmatprep.subr.mxu0 0.0
    %v1634 = vand.u32 %v75, 4294901760
    %1635 = vmatpush1.msra.mxu0 %v1634
    %1636 = vmatprep.subr.mxu0 0.0
    %v1637 = vand.u32 %v78, 4294901760
    %1638 = vmatpush1.msra.mxu0 %v1637
    %1639 = vmatprep.subr.mxu0 0.0
    %v1640 = vand.u32 %v81, 4294901760
    %1641 = vmatpush1.msra.mxu0 %v1640
    %1642 = vmatprep.subr.mxu0 0.0
    %v1643 = vand.u32 %v84, 4294901760
    %1644 = vmatpush1.msra.mxu0 %v1643
    %1645 = vmatprep.subr.mxu0 0.0
    %v1646 = vand.u32 %v87, 4294901760
    %1647 = vmatpush1.msra.mxu0 %v1646
    %1648 = vmatprep.subr.mxu0 0.0
    %v1649 = vand.u32 %v90, 4294901760
    %1650 = vmatpush1.msra.mxu0 %v1649
    %1651 = vmatprep.subr.mxu0 0.0
    %v1652 = vand.u32 %v93, 4294901760
    %1653 = vmatpush1.msra.mxu0 %v1652
    %1654 = vmatprep.subr.mxu0 0.0
    %v1655 = vand.u32 %v96, 4294901760
    %1656 = vmatpush1.msra.mxu0 %v1655
    %1657 = vmatprep.subr.mxu0 0.0
    %v1658 = vand.u32 %v99, 4294901760
    %1659 = vmatpush1.msra.mxu0 %v1658
    %1660 = vmatprep.subr.mxu0 0.0
    %v1661 = vand.u32 %v102, 4294901760
    %1662 = vmatpush1.msra.mxu0 %v1661
    %1663 = vmatprep.subr.mxu0 0.0
    %v1664 = vand.u32 %v105, 4294901760
    %1665 = vmatpush1.msra.mxu0 %v1664
    %1666 = vmatprep.subr.mxu0 0.0
    %v1667 = vand.u32 %v108, 4294901760
    %1668 = vmatpush1.msra.mxu0 %v1667
    %1669 = vmatprep.subr.mxu0 0.0
    %v1670 = vand.u32 %v111, 4294901760
    %1671 = vmatpush1.msra.mxu0 %v1670
    %1672 = vmatprep.subr.mxu0 0.0
    %1673 = vmatpush1.msra.mxu0 0.0
    %1674 = vmatprep.subr.mxu0 0.0
    %1675 = vmatpush1.msra.mxu0 0.0
    %1676 = vmatprep.subr.mxu0 0.0
    %1677 = vmatpush1.msra.mxu0 0.0
    %1678 = vmatprep.subr.mxu0 0.0
    %1679 = vmatpush1.msra.mxu0 0.0
    %1680 = vmatprep.subr.mxu0 0.0
    %1681 = vmatpush1.msra.mxu0 0.0
    %1682 = vmatprep.subr.mxu0 0.0
    %1683 = vmatpush1.msra.mxu0 0.0
    %1684 = vmatprep.subr.mxu0 0.0
    %1685 = vmatpush1.msra.mxu0 0.0
    %1686 = vmatprep.subr.mxu0 0.0
    %1687 = vmatpush1.msra.mxu0 0.0
    %1688 = vmatprep.subr.mxu0 0.0
    %1689 = vmatpush1.msra.mxu0 0.0
    %1690 = vmatprep.subr.mxu0 0.0
    %1691 = vmatpush1.msra.mxu0 0.0
    %1692 = vmatprep.subr.mxu0 0.0
    %1693 = vmatpush1.msra.mxu0 0.0
    %1694 = vmatprep.subr.mxu0 0.0
    %1695 = vmatpush1.msra.mxu0 0.0
    %1696 = vmatprep.subr.mxu0 0.0
    %1697 = vmatpush1.msra.mxu0 0.0
    %1698 = vmatprep.subr.mxu0 0.0
    %1699 = vmatpush1.msra.mxu0 0.0
    %1700 = vmatprep.subr.mxu0 0.0
    %1701 = vmatpush1.msra.mxu0 0.0
    %1702 = vmatprep.subr.mxu0 0.0
    %1703 = vmatpush1.msra.mxu0 0.0
    %1704 = vmatprep.mubr.f32.mxu0 0.0
    %v1705 = vand.u32 %v62, 4294901760
    %1706 = vmatmul.mubr.f32.gmra.mrb[0].mxu0 %v1705
    %v1707 = vpop.f32.mrb[0].mxu0
    %v1708 = vadd.f32 %v1615, %v1707
    %v1709 = vpop.f32.mrb[0].mxu0
    %1710 = vmatprep.mubr.f32.mxu0 0.0
    %v1711 = vand.u32 %v63, 4294901760
    %1712 = vmatmul.mubr.f32.gmra.mrb[0].mxu0 %v1711
    %v1713 = vpop.f32.mrb[0].mxu0
    %v1714 = vadd.f32 %v1621, %v1713
    %v1715 = vpop.f32.mrb[0].mxu0
    %1716 = vdwg.mxu0
    %1718 = vrot.lane.b32.xlu0 %v1022, 64
    %v1719 = vpop.permute.xlu0 %1718
    %1721 = vrot.lane.b32.xlu0 %v1029, 64
    %v1722 = vpop.permute.xlu0 %1721
    %1724 = vrot.lane.b32.xlu0 %v1024, 64
    %v1725 = vpop.permute.xlu0 %1724
    %1727 = vrot.lane.b32.xlu0 %v1031, 64
    %v1728 = vpop.permute.xlu0 %1727
    %1730 = vrot.lane.b32.xlu0 %v1708, 64
    %v1731 = vpop.permute.xlu0 %1730
    %1734 = vrot.lane.b32.xlu0 %v1714, 64
    %v1735 = vpop.permute.xlu0 %1734
    %vm1737 = vcmask 523264
    %v1738 = vsel %vm1737, %v1022, 0
    %v1740 = vsel %vm1737, %v1024, 0
    %1742 = vmatprep.subr.mxu0 0.0
    %v1743 = vand.u32 %v1740, 4294901760
    %1744 = vmatpush1.xpose.msra.mxu0 %v1743
    %1745 = vmatprep.subr.mxu0 0.0
    %1746 = vmatpush1.xpose.msra.mxu0 0.0
    %1747 = vmatprep.subr.mxu0 0.0
    %1748 = vmatpush1.xpose.msra.mxu0 0.0
    %1749 = vmatprep.subr.mxu0 0.0
    %1750 = vmatpush1.xpose.msra.mxu0 0.0
    %1751 = vmatprep.subr.mxu0 0.0
    %1752 = vmatpush1.xpose.msra.mxu0 0.0
    %1753 = vmatprep.subr.mxu0 0.0
    %1754 = vmatpush1.xpose.msra.mxu0 0.0
    %1755 = vmatprep.subr.mxu0 0.0
    %1756 = vmatpush1.xpose.msra.mxu0 0.0
    %1757 = vmatprep.subr.mxu0 0.0
    %1758 = vmatpush1.xpose.msra.mxu0 0.0
    %1759 = vmatprep.subr.mxu0 0.0
    %1760 = vmatpush1.xpose.msra.mxu0 0.0
    %1761 = vmatprep.subr.mxu0 0.0
    %1762 = vmatpush1.xpose.msra.mxu0 0.0
    %1763 = vmatprep.subr.mxu0 0.0
    %1764 = vmatpush1.xpose.msra.mxu0 0.0
    %1765 = vmatprep.subr.mxu0 0.0
    %1766 = vmatpush1.xpose.msra.mxu0 0.0
    %1767 = vmatprep.subr.mxu0 0.0
    %1768 = vmatpush1.xpose.msra.mxu0 0.0
    %1769 = vmatprep.subr.mxu0 0.0
    %1770 = vmatpush1.xpose.msra.mxu0 0.0
    %1771 = vmatprep.subr.mxu0 0.0
    %1772 = vmatpush1.xpose.msra.mxu0 0.0
    %1773 = vmatprep.subr.mxu0 0.0
    %1774 = vmatpush1.xpose.msra.mxu0 0.0
    %1775 = vmatprep.subr.mxu0 0.0
    %1776 = vmatpush1.xpose.msra.mxu0 0.0
    %1777 = vmatprep.subr.mxu0 0.0
    %1778 = vmatpush1.xpose.msra.mxu0 0.0
    %1779 = vmatprep.subr.mxu0 0.0
    %1780 = vmatpush1.xpose.msra.mxu0 0.0
    %1781 = vmatprep.subr.mxu0 0.0
    %1782 = vmatpush1.xpose.msra.mxu0 0.0
    %1783 = vmatprep.subr.mxu0 0.0
    %1784 = vmatpush1.xpose.msra.mxu0 0.0
    %1785 = vmatprep.subr.mxu0 0.0
    %1786 = vmatpush1.xpose.msra.mxu0 0.0
    %1787 = vmatprep.subr.mxu0 0.0
    %1788 = vmatpush1.xpose.msra.mxu0 0.0
    %1789 = vmatprep.subr.mxu0 0.0
    %1790 = vmatpush1.xpose.msra.mxu0 0.0
    %1791 = vmatprep.subr.mxu0 0.0
    %1792 = vmatpush1.xpose.msra.mxu0 0.0
    %1793 = vmatprep.subr.mxu0 0.0
    %1794 = vmatpush1.xpose.msra.mxu0 0.0
    %1795 = vmatprep.subr.mxu0 0.0
    %1796 = vmatpush1.xpose.msra.mxu0 0.0
    %1797 = vmatprep.subr.mxu0 0.0
    %1798 = vmatpush1.xpose.msra.mxu0 0.0
    %1799 = vmatprep.subr.mxu0 0.0
    %1800 = vmatpush1.xpose.msra.mxu0 0.0
    %1801 = vmatprep.subr.mxu0 0.0
    %1802 = vmatpush1.xpose.msra.mxu0 0.0
    %1803 = vmatprep.subr.mxu0 0.0
    %1804 = vmatpush1.xpose.msra.mxu0 0.0
    %1805 = vmatprep.subr.mxu0 0.0
    %1806 = vmatpush1.xpose.msra.mxu0 0.0
    %1807 = vmatprep.mubr.f32.mxu0 0.0
    %v1808 = vand.u32 %v1738, 4294901760
    %v1809 = vsub.f32 %v1738, %v1808
    %v1810 = vand.u32 %v1809, 4294901760
    %v1811 = vsub.f32 %v1809, %v1810
    %v1812 = vand.u32 %v1811, 4294901760
    %1813 = vmatmul.mubr.f32.gmra.mrb[0].mxu0 %v1812
    %v1814 = vpop.f32.mrb[0].mxu0
    %v1815 = vadd.f32 0.0, %v1814
    %v1816 = vpop.f32.mrb[0].mxu0
    %1817 = vdwg.mxu0
    %1818 = vmatprep.subr.mxu0 0.0
    %v1819 = vand.u32 %v1740, 4294901760
    %v1820 = vsub.f32 %v1740, %v1819
    %v1821 = vand.u32 %v1820, 4294901760
    %v1822 = vsub.f32 %v1820, %v1821
    %v1823 = vand.u32 %v1822, 4294901760
    %1824 = vmatpush1.xpose.msra.mxu0 %v1823
    %1825 = vmatprep.subr.mxu0 0.0
    %1826 = vmatpush1.xpose.msra.mxu0 0.0
    %1827 = vmatprep.subr.mxu0 0.0
    %1828 = vmatpush1.xpose.msra.mxu0 0.0
    %1829 = vmatprep.subr.mxu0 0.0
    %1830 = vmatpush1.xpose.msra.mxu0 0.0
    %1831 = vmatprep.subr.mxu0 0.0
    %1832 = vmatpush1.xpose.msra.mxu0 0.0
    %1833 = vmatprep.subr.mxu0 0.0
    %1834 = vmatpush1.xpose.msra.mxu0 0.0
    %1835 = vmatprep.subr.mxu0 0.0
    %1836 = vmatpush1.xpose.msra.mxu0 0.0
    %1837 = vmatprep.subr.mxu0 0.0
    %1838 = vmatpush1.xpose.msra.mxu0 0.0
    %1839 = vmatprep.subr.mxu0 0.0
    %1840 = vmatpush1.xpose.msra.mxu0 0.0
    %1841 = vmatprep.subr.mxu0 0.0
    %1842 = vmatpush1.xpose.msra.mxu0 0.0
    %1843 = vmatprep.subr.mxu0 0.0
    %1844 = vmatpush1.xpose.msra.mxu0 0.0
    %1845 = vmatprep.subr.mxu0 0.0
    %1846 = vmatpush1.xpose.msra.mxu0 0.0
    %1847 = vmatprep.subr.mxu0 0.0
    %1848 = vmatpush1.xpose.msra.mxu0 0.0
    %1849 = vmatprep.subr.mxu0 0.0
    %1850 = vmatpush1.xpose.msra.mxu0 0.0
    %1851 = vmatprep.subr.mxu0 0.0
    %1852 = vmatpush1.xpose.msra.mxu0 0.0
    %1853 = vmatprep.subr.mxu0 0.0
    %1854 = vmatpush1.xpose.msra.mxu0 0.0
    %1855 = vmatprep.subr.mxu0 0.0
    %1856 = vmatpush1.xpose.msra.mxu0 0.0
    %1857 = vmatprep.subr.mxu0 0.0
    %1858 = vmatpush1.xpose.msra.mxu0 0.0
    %1859 = vmatprep.subr.mxu0 0.0
    %1860 = vmatpush1.xpose.msra.mxu0 0.0
    %1861 = vmatprep.subr.mxu0 0.0
    %1862 = vmatpush1.xpose.msra.mxu0 0.0
    %1863 = vmatprep.subr.mxu0 0.0
    %1864 = vmatpush1.xpose.msra.mxu0 0.0
    %1865 = vmatprep.subr.mxu0 0.0
    %1866 = vmatpush1.xpose.msra.mxu0 0.0
    %1867 = vmatprep.subr.mxu0 0.0
    %1868 = vmatpush1.xpose.msra.mxu0 0.0
    %1869 = vmatprep.subr.mxu0 0.0
    %1870 = vmatpush1.xpose.msra.mxu0 0.0
    %1871 = vmatprep.subr.mxu0 0.0
    %1872 = vmatpush1.xpose.msra.mxu0 0.0
    %1873 = vmatprep.subr.mxu0 0.0
    %1874 = vmatpush1.xpose.msra.mxu0 0.0
    %1875 = vmatprep.subr.mxu0 0.0
    %1876 = vmatpush1.xpose.msra.mxu0 0.0
    %1877 = vmatprep.subr.mxu0 0.0
    %1878 = vmatpush1.xpose.msra.mxu0 0.0
    %1879 = vmatprep.subr.mxu0 0.0
    %1880 = vmatpush1.xpose.msra.mxu0 0.0
    %1881 = vmatprep.subr.mxu0 0.0
    %1882 = vmatpush1.xpose.msra.mxu0 0.0
    %1883 = vmatprep.subr.mxu0 0.0
    %1884 = vmatpush1.xpose.msra.mxu0 0.0
    %1885 = vmatprep.subr.mxu0 0.0
    %1886 = vmatpush1.xpose.msra.mxu0 0.0
    %1887 = vmatprep.mubr.f32.mxu0 0.0
    %v1888 = vand.u32 %v1738, 4294901760
    %1889 = vmatmul.mubr.f32.gmra.mrb[0].mxu0 %v1888
    %v1890 = vpop.f32.mrb[0].mxu0
    %v1891 = vadd.f32 %v1815, %v1890
    %v1892 = vpop.f32.mrb[0].mxu0
    %1893 = vdwg.mxu0
    %1894 = vmatprep.subr.mxu0 0.0
    %v1895 = vand.u32 %v1740, 4294901760
    %v1896 = vsub.f32 %v1740, %v1895
    %1897 = vmatpush1.xpose.msra.mxu0 %v1896
    %1898 = vmatprep.subr.mxu0 0.0
    %1899 = vmatpush1.xpose.msra.mxu0 0.0
    %1900 = vmatprep.subr.mxu0 0.0
    %1901 = vmatpush1.xpose.msra.mxu0 0.0
    %1902 = vmatprep.subr.mxu0 0.0
    %1903 = vmatpush1.xpose.msra.mxu0 0.0
    %1904 = vmatprep.subr.mxu0 0.0
    %1905 = vmatpush1.xpose.msra.mxu0 0.0
    %1906 = vmatprep.subr.mxu0 0.0
    %1907 = vmatpush1.xpose.msra.mxu0 0.0
    %1908 = vmatprep.subr.mxu0 0.0
    %1909 = vmatpush1.xpose.msra.mxu0 0.0
    %1910 = vmatprep.subr.mxu0 0.0
    %1911 = vmatpush1.xpose.msra.mxu0 0.0
    %1912 = vmatprep.subr.mxu0 0.0
    %1913 = vmatpush1.xpose.msra.mxu0 0.0
    %1914 = vmatprep.subr.mxu0 0.0
    %1915 = vmatpush1.xpose.msra.mxu0 0.0
    %1916 = vmatprep.subr.mxu0 0.0
    %1917 = vmatpush1.xpose.msra.mxu0 0.0
    %1918 = vmatprep.subr.mxu0 0.0
    %1919 = vmatpush1.xpose.msra.mxu0 0.0
    %1920 = vmatprep.subr.mxu0 0.0
    %1921 = vmatpush1.xpose.msra.mxu0 0.0
    %1922 = vmatprep.subr.mxu0 0.0
    %1923 = vmatpush1.xpose.msra.mxu0 0.0
    %1924 = vmatprep.subr.mxu0 0.0
    %1925 = vmatpush1.xpose.msra.mxu0 0.0
    %1926 = vmatprep.subr.mxu0 0.0
    %1927 = vmatpush1.xpose.msra.mxu0 0.0
    %1928 = vmatprep.subr.mxu0 0.0
    %1929 = vmatpush1.xpose.msra.mxu0 0.0
    %1930 = vmatprep.subr.mxu0 0.0
    %1931 = vmatpush1.xpose.msra.mxu0 0.0
    %1932 = vmatprep.subr.mxu0 0.0
    %1933 = vmatpush1.xpose.msra.mxu0 0.0
    %1934 = vmatprep.subr.mxu0 0.0
    %1935 = vmatpush1.xpose.msra.mxu0 0.0
    %1936 = vmatprep.subr.mxu0 0.0
    %1937 = vmatpush1.xpose.msra.mxu0 0.0
    %1938 = vmatprep.subr.mxu0 0.0
    %1939 = vmatpush1.xpose.msra.mxu0 0.0
    %1940 = vmatprep.subr.mxu0 0.0
    %1941 = vmatpush1.xpose.msra.mxu0 0.0
    %1942 = vmatprep.subr.mxu0 0.0
    %1943 = vmatpush1.xpose.msra.mxu0 0.0
    %1944 = vmatprep.subr.mxu0 0.0
    %1945 = vmatpush1.xpose.msra.mxu0 0.0
    %1946 = vmatprep.subr.mxu0 0.0
    %1947 = vmatpush1.xpose.msra.mxu0 0.0
    %1948 = vmatprep.subr.mxu0 0.0
    %1949 = vmatpush1.xpose.msra.mxu0 0.0
    %1950 = vmatprep.subr.mxu0 0.0
    %1951 = vmatpush1.xpose.msra.mxu0 0.0
    %1952 = vmatprep.subr.mxu0 0.0
    %1953 = vmatpush1.xpose.msra.mxu0 0.0
    %1954 = vmatprep.subr.mxu0 0.0
    %1955 = vmatpush1.xpose.msra.mxu0 0.0
    %1956 = vmatprep.subr.mxu0 0.0
    %1957 = vmatpush1.xpose.msra.mxu0 0.0
    %1958 = vmatprep.subr.mxu0 0.0
    %1959 = vmatpush1.xpose.msra.mxu0 0.0
    %1960 = vmatprep.mubr.f32.mxu0 0.0
    %v1961 = vand.u32 %v1738, 4294901760
    %v1962 = vsub.f32 %v1738, %v1961
    %1963 = vmatmul.mubr.f32.gmra.mrb[0].mxu0 %v1962
    %v1964 = vpop.f32.mrb[0].mxu0
    %v1965 = vadd.f32 %v1891, %v1964
    %v1966 = vpop.f32.mrb[0].mxu0
    %1967 = vdwg.mxu0
    %1968 = vmatprep.subr.mxu0 0.0
    %v1969 = vand.u32 %v1740, 4294901760
    %1970 = vmatpush1.xpose.msra.mxu0 %v1969
    %1971 = vmatprep.subr.mxu0 0.0
    %1972 = vmatpush1.xpose.msra.mxu0 0.0
    %1973 = vmatprep.subr.mxu0 0.0
    %1974 = vmatpush1.xpose.msra.mxu0 0.0
    %1975 = vmatprep.subr.mxu0 0.0
    %1976 = vmatpush1.xpose.msra.mxu0 0.0
    %1977 = vmatprep.subr.mxu0 0.0
    %1978 = vmatpush1.xpose.msra.mxu0 0.0
    %1979 = vmatprep.subr.mxu0 0.0
    %1980 = vmatpush1.xpose.msra.mxu0 0.0
    %1981 = vmatprep.subr.mxu0 0.0
    %1982 = vmatpush1.xpose.msra.mxu0 0.0
    %1983 = vmatprep.subr.mxu0 0.0
    %1984 = vmatpush1.xpose.msra.mxu0 0.0
    %1985 = vmatprep.subr.mxu0 0.0
    %1986 = vmatpush1.xpose.msra.mxu0 0.0
    %1987 = vmatprep.subr.mxu0 0.0
    %1988 = vmatpush1.xpose.msra.mxu0 0.0
    %1989 = vmatprep.subr.mxu0 0.0
    %1990 = vmatpush1.xpose.msra.mxu0 0.0
    %1991 = vmatprep.subr.mxu0 0.0
    %1992 = vmatpush1.xpose.msra.mxu0 0.0
    %1993 = vmatprep.subr.mxu0 0.0
    %1994 = vmatpush1.xpose.msra.mxu0 0.0
    %1995 = vmatprep.subr.mxu0 0.0
    %1996 = vmatpush1.xpose.msra.mxu0 0.0
    %1997 = vmatprep.subr.mxu0 0.0
    %1998 = vmatpush1.xpose.msra.mxu0 0.0
    %1999 = vmatprep.subr.mxu0 0.0
    %2000 = vmatpush1.xpose.msra.mxu0 0.0
    %2001 = vmatprep.subr.mxu0 0.0
    %2002 = vmatpush1.xpose.msra.mxu0 0.0
    %2003 = vmatprep.subr.mxu0 0.0
    %2004 = vmatpush1.xpose.msra.mxu0 0.0
    %2005 = vmatprep.subr.mxu0 0.0
    %2006 = vmatpush1.xpose.msra.mxu0 0.0
    %2007 = vmatprep.subr.mxu0 0.0
    %2008 = vmatpush1.xpose.msra.mxu0 0.0
    %2009 = vmatprep.subr.mxu0 0.0
    %2010 = vmatpush1.xpose.msra.mxu0 0.0
    %2011 = vmatprep.subr.mxu0 0.0
    %2012 = vmatpush1.xpose.msra.mxu0 0.0
    %2013 = vmatprep.subr.mxu0 0.0
    %2014 = vmatpush1.xpose.msra.mxu0 0.0
    %2015 = vmatprep.subr.mxu0 0.0
    %2016 = vmatpush1.xpose.msra.mxu0 0.0
    %2017 = vmatprep.subr.mxu0 0.0
    %2018 = vmatpush1.xpose.msra.mxu0 0.0
    %2019 = vmatprep.subr.mxu0 0.0
    %2020 = vmatpush1.xpose.msra.mxu0 0.0
    %2021 = vmatprep.subr.mxu0 0.0
    %2022 = vmatpush1.xpose.msra.mxu0 0.0
    %2023 = vmatprep.subr.mxu0 0.0
    %2024 = vmatpush1.xpose.msra.mxu0 0.0
    %2025 = vmatprep.subr.mxu0 0.0
    %2026 = vmatpush1.xpose.msra.mxu0 0.0
    %2027 = vmatprep.subr.mxu0 0.0
    %2028 = vmatpush1.xpose.msra.mxu0 0.0
    %2029 = vmatprep.subr.mxu0 0.0
    %2030 = vmatpush1.xpose.msra.mxu0 0.0
    %2031 = vmatprep.subr.mxu0 0.0
    %2032 = vmatpush1.xpose.msra.mxu0 0.0
    %2033 = vmatprep.mubr.f32.mxu0 0.0
    %v2034 = vand.u32 %v1738, 4294901760
    %v2035 = vsub.f32 %v1738, %v2034
    %v2036 = vand.u32 %v2035, 4294901760
    %2037 = vmatmul.mubr.f32.gmra.mrb[0].mxu0 %v2036
    %v2038 = vpop.f32.mrb[0].mxu0
    %v2039 = vadd.f32 %v1965, %v2038
    %v2040 = vpop.f32.mrb[0].mxu0
    %2041 = vdwg.mxu0
    %2042 = vmatprep.subr.mxu0 0.0
    %v2043 = vand.u32 %v1740, 4294901760
    %v2044 = vsub.f32 %v1740, %v2043
    %v2045 = vand.u32 %v2044, 4294901760
    %2046 = vmatpush1.xpose.msra.mxu0 %v2045
    %2047 = vmatprep.subr.mxu0 0.0
    %2048 = vmatpush1.xpose.msra.mxu0 0.0
    %2049 = vmatprep.subr.mxu0 0.0
    %2050 = vmatpush1.xpose.msra.mxu0 0.0
    %2051 = vmatprep.subr.mxu0 0.0
    %2052 = vmatpush1.xpose.msra.mxu0 0.0
    %2053 = vmatprep.subr.mxu0 0.0
    %2054 = vmatpush1.xpose.msra.mxu0 0.0
    %2055 = vmatprep.subr.mxu0 0.0
    %2056 = vmatpush1.xpose.msra.mxu0 0.0
    %2057 = vmatprep.subr.mxu0 0.0
    %2058 = vmatpush1.xpose.msra.mxu0 0.0
    %2059 = vmatprep.subr.mxu0 0.0
    %2060 = vmatpush1.xpose.msra.mxu0 0.0
    %2061 = vmatprep.subr.mxu0 0.0
    %2062 = vmatpush1.xpose.msra.mxu0 0.0
    %2063 = vmatprep.subr.mxu0 0.0
    %2064 = vmatpush1.xpose.msra.mxu0 0.0
    %2065 = vmatprep.subr.mxu0 0.0
    %2066 = vmatpush1.xpose.msra.mxu0 0.0
    %2067 = vmatprep.subr.mxu0 0.0
    %2068 = vmatpush1.xpose.msra.mxu0 0.0
    %2069 = vmatprep.subr.mxu0 0.0
    %2070 = vmatpush1.xpose.msra.mxu0 0.0
    %2071 = vmatprep.subr.mxu0 0.0
    %2072 = vmatpush1.xpose.msra.mxu0 0.0
    %2073 = vmatprep.subr.mxu0 0.0
    %2074 = vmatpush1.xpose.msra.mxu0 0.0
    %2075 = vmatprep.subr.mxu0 0.0
    %2076 = vmatpush1.xpose.msra.mxu0 0.0
    %2077 = vmatprep.subr.mxu0 0.0
    %2078 = vmatpush1.xpose.msra.mxu0 0.0
    %2079 = vmatprep.subr.mxu0 0.0
    %2080 = vmatpush1.xpose.msra.mxu0 0.0
    %2081 = vmatprep.subr.mxu0 0.0
    %2082 = vmatpush1.xpose.msra.mxu0 0.0
    %2083 = vmatprep.subr.mxu0 0.0
    %2084 = vmatpush1.xpose.msra.mxu0 0.0
    %2085 = vmatprep.subr.mxu0 0.0
    %2086 = vmatpush1.xpose.msra.mxu0 0.0
    %2087 = vmatprep.subr.mxu0 0.0
    %2088 = vmatpush1.xpose.msra.mxu0 0.0
    %2089 = vmatprep.subr.mxu0 0.0
    %2090 = vmatpush1.xpose.msra.mxu0 0.0
    %2091 = vmatprep.subr.mxu0 0.0
    %2092 = vmatpush1.xpose.msra.mxu0 0.0
    %2093 = vmatprep.subr.mxu0 0.0
    %2094 = vmatpush1.xpose.msra.mxu0 0.0
    %2095 = vmatprep.subr.mxu0 0.0
    %2096 = vmatpush1.xpose.msra.mxu0 0.0
    %2097 = vmatprep.subr.mxu0 0.0
    %2098 = vmatpush1.xpose.msra.mxu0 0.0
    %2099 = vmatprep.subr.mxu0 0.0
    %2100 = vmatpush1.xpose.msra.mxu0 0.0
    %2101 = vmatprep.subr.mxu0 0.0
    %2102 = vmatpush1.xpose.msra.mxu0 0.0
    %2103 = vmatprep.subr.mxu0 0.0
    %2104 = vmatpush1.xpose.msra.mxu0 0.0
    %2105 = vmatprep.subr.mxu0 0.0
    %2106 = vmatpush1.xpose.msra.mxu0 0.0
    %2107 = vmatprep.subr.mxu0 0.0
    %2108 = vmatpush1.xpose.msra.mxu0 0.0
    %2109 = vmatprep.mubr.f32.mxu0 0.0
    %v2110 = vand.u32 %v1738, 4294901760
    %2111 = vmatmul.mubr.f32.gmra.mrb[0].mxu0 %v2110
    %v2112 = vpop.f32.mrb[0].mxu0
    %v2113 = vadd.f32 %v2039, %v2112
    %v2114 = vpop.f32.mrb[0].mxu0
    %2115 = vdwg.mxu0
    %2116 = vmatprep.subr.mxu0 0.0
    %v2117 = vand.u32 %v1740, 4294901760
    %2118 = vmatpush1.xpose.msra.mxu0 %v2117
    %2119 = vmatprep.subr.mxu0 0.0
    %2120 = vmatpush1.xpose.msra.mxu0 0.0
    %2121 = vmatprep.subr.mxu0 0.0
    %2122 = vmatpush1.xpose.msra.mxu0 0.0
    %2123 = vmatprep.subr.mxu0 0.0
    %2124 = vmatpush1.xpose.msra.mxu0 0.0
    %2125 = vmatprep.subr.mxu0 0.0
    %2126 = vmatpush1.xpose.msra.mxu0 0.0
    %2127 = vmatprep.subr.mxu0 0.0
    %2128 = vmatpush1.xpose.msra.mxu0 0.0
    %2129 = vmatprep.subr.mxu0 0.0
    %2130 = vmatpush1.xpose.msra.mxu0 0.0
    %2131 = vmatprep.subr.mxu0 0.0
    %2132 = vmatpush1.xpose.msra.mxu0 0.0
    %2133 = vmatprep.subr.mxu0 0.0
    %2134 = vmatpush1.xpose.msra.mxu0 0.0
    %2135 = vmatprep.subr.mxu0 0.0
    %2136 = vmatpush1.xpose.msra.mxu0 0.0
    %2137 = vmatprep.subr.mxu0 0.0
    %2138 = vmatpush1.xpose.msra.mxu0 0.0
    %2139 = vmatprep.subr.mxu0 0.0
    %2140 = vmatpush1.xpose.msra.mxu0 0.0
    %2141 = vmatprep.subr.mxu0 0.0
    %2142 = vmatpush1.xpose.msra.mxu0 0.0
    %2143 = vmatprep.subr.mxu0 0.0
    %2144 = vmatpush1.xpose.msra.mxu0 0.0
    %2145 = vmatprep.subr.mxu0 0.0
    %2146 = vmatpush1.xpose.msra.mxu0 0.0
    %2147 = vmatprep.subr.mxu0 0.0
    %2148 = vmatpush1.xpose.msra.mxu0 0.0
    %2149 = vmatprep.subr.mxu0 0.0
    %2150 = vmatpush1.xpose.msra.mxu0 0.0
    %2151 = vmatprep.subr.mxu0 0.0
    %2152 = vmatpush1.xpose.msra.mxu0 0.0
    %2153 = vmatprep.subr.mxu0 0.0
    %2154 = vmatpush1.xpose.msra.mxu0 0.0
    %2155 = vmatprep.subr.mxu0 0.0
    %2156 = vmatpush1.xpose.msra.mxu0 0.0
    %2157 = vmatprep.subr.mxu0 0.0
    %2158 = vmatpush1.xpose.msra.mxu0 0.0
    %2159 = vmatprep.subr.mxu0 0.0
    %2160 = vmatpush1.xpose.msra.mxu0 0.0
    %2161 = vmatprep.subr.mxu0 0.0
    %2162 = vmatpush1.xpose.msra.mxu0 0.0
    %2163 = vmatprep.subr.mxu0 0.0
    %2164 = vmatpush1.xpose.msra.mxu0 0.0
    %2165 = vmatprep.subr.mxu0 0.0
    %2166 = vmatpush1.xpose.msra.mxu0 0.0
    %2167 = vmatprep.subr.mxu0 0.0
    %2168 = vmatpush1.xpose.msra.mxu0 0.0
    %2169 = vmatprep.subr.mxu0 0.0
    %2170 = vmatpush1.xpose.msra.mxu0 0.0
    %2171 = vmatprep.subr.mxu0 0.0
    %2172 = vmatpush1.xpose.msra.mxu0 0.0
    %2173 = vmatprep.subr.mxu0 0.0
    %2174 = vmatpush1.xpose.msra.mxu0 0.0
    %2175 = vmatprep.subr.mxu0 0.0
    %2176 = vmatpush1.xpose.msra.mxu0 0.0
    %2177 = vmatprep.subr.mxu0 0.0
    %2178 = vmatpush1.xpose.msra.mxu0 0.0
    %2179 = vmatprep.subr.mxu0 0.0
    %2180 = vmatpush1.xpose.msra.mxu0 0.0
    %2181 = vmatprep.mubr.f32.mxu0 0.0
    %v2182 = vand.u32 %v1738, 4294901760
    %2183 = vmatmul.mubr.f32.gmra.mrb[0].mxu0 %v2182
    %v2184 = vpop.f32.mrb[0].mxu0
    %v2185 = vadd.f32 %v2113, %v2184
    %v2186 = vpop.f32.mrb[0].mxu0
    %2187 = vdwg.mxu0
    %v2188 = vsel %vm1737, %v1719, 0
    %v2190 = vsel %vm1737, %v1725, 0
    %2192 = vmatprep.subr.mxu0 0.0
    %v2193 = vand.u32 %v2190, 4294901760
    %2194 = vmatpush1.xpose.msra.mxu0 %v2193
    %2195 = vmatprep.subr.mxu0 0.0
    %2196 = vmatpush1.xpose.msra.mxu0 0.0
    %2197 = vmatprep.subr.mxu0 0.0
    %2198 = vmatpush1.xpose.msra.mxu0 0.0
    %2199 = vmatprep.subr.mxu0 0.0
    %2200 = vmatpush1.xpose.msra.mxu0 0.0
    %2201 = vmatprep.subr.mxu0 0.0
    %2202 = vmatpush1.xpose.msra.mxu0 0.0
    %2203 = vmatprep.subr.mxu0 0.0
    %2204 = vmatpush1.xpose.msra.mxu0 0.0
    %2205 = vmatprep.subr.mxu0 0.0
    %2206 = vmatpush1.xpose.msra.mxu0 0.0
    %2207 = vmatprep.subr.mxu0 0.0
    %2208 = vmatpush1.xpose.msra.mxu0 0.0
    %2209 = vmatprep.subr.mxu0 0.0
    %2210 = vmatpush1.xpose.msra.mxu0 0.0
    %2211 = vmatprep.subr.mxu0 0.0
    %2212 = vmatpush1.xpose.msra.mxu0 0.0
    %2213 = vmatprep.subr.mxu0 0.0
    %2214 = vmatpush1.xpose.msra.mxu0 0.0
    %2215 = vmatprep.subr.mxu0 0.0
    %2216 = vmatpush1.xpose.msra.mxu0 0.0
    %2217 = vmatprep.subr.mxu0 0.0
    %2218 = vmatpush1.xpose.msra.mxu0 0.0
    %2219 = vmatprep.subr.mxu0 0.0
    %2220 = vmatpush1.xpose.msra.mxu0 0.0
    %2221 = vmatprep.subr.mxu0 0.0
    %2222 = vmatpush1.xpose.msra.mxu0 0.0
    %2223 = vmatprep.subr.mxu0 0.0
    %2224 = vmatpush1.xpose.msra.mxu0 0.0
    %2225 = vmatprep.subr.mxu0 0.0
    %2226 = vmatpush1.xpose.msra.mxu0 0.0
    %2227 = vmatprep.subr.mxu0 0.0
    %2228 = vmatpush1.xpose.msra.mxu0 0.0
    %2229 = vmatprep.subr.mxu0 0.0
    %2230 = vmatpush1.xpose.msra.mxu0 0.0
    %2231 = vmatprep.subr.mxu0 0.0
    %2232 = vmatpush1.xpose.msra.mxu0 0.0
    %2233 = vmatprep.subr.mxu0 0.0
    %2234 = vmatpush1.xpose.msra.mxu0 0.0
    %2235 = vmatprep.subr.mxu0 0.0
    %2236 = vmatpush1.xpose.msra.mxu0 0.0
    %2237 = vmatprep.subr.mxu0 0.0
    %2238 = vmatpush1.xpose.msra.mxu0 0.0
    %2239 = vmatprep.subr.mxu0 0.0
    %2240 = vmatpush1.xpose.msra.mxu0 0.0
    %2241 = vmatprep.subr.mxu0 0.0
    %2242 = vmatpush1.xpose.msra.mxu0 0.0
    %2243 = vmatprep.subr.mxu0 0.0
    %2244 = vmatpush1.xpose.msra.mxu0 0.0
    %2245 = vmatprep.subr.mxu0 0.0
    %2246 = vmatpush1.xpose.msra.mxu0 0.0
    %2247 = vmatprep.subr.mxu0 0.0
    %2248 = vmatpush1.xpose.msra.mxu0 0.0
    %2249 = vmatprep.subr.mxu0 0.0
    %2250 = vmatpush1.xpose.msra.mxu0 0.0
    %2251 = vmatprep.subr.mxu0 0.0
    %2252 = vmatpush1.xpose.msra.mxu0 0.0
    %2253 = vmatprep.subr.mxu0 0.0
    %2254 = vmatpush1.xpose.msra.mxu0 0.0
    %2255 = vmatprep.subr.mxu0 0.0
    %2256 = vmatpush1.xpose.msra.mxu0 0.0
    %2257 = vmatprep.mubr.f32.mxu0 0.0
    %v2258 = vand.u32 %v2188, 4294901760
    %v2259 = vsub.f32 %v2188, %v2258
    %v2260 = vand.u32 %v2259, 4294901760
    %v2261 = vsub.f32 %v2259, %v2260
    %v2262 = vand.u32 %v2261, 4294901760
    %2263 = vmatmul.mubr.f32.gmra.mrb[0].mxu0 %v2262
    %v2264 = vpop.f32.mrb[0].mxu0
    %v2265 = vadd.f32 0.0, %v2264
    %v2266 = vpop.f32.mrb[0].mxu0
    %2267 = vdwg.mxu0
    %2268 = vmatprep.subr.mxu0 0.0
    %v2269 = vand.u32 %v2190, 4294901760
    %v2270 = vsub.f32 %v2190, %v2269
    %v2271 = vand.u32 %v2270, 4294901760
    %v2272 = vsub.f32 %v2270, %v2271
    %v2273 = vand.u32 %v2272, 4294901760
    %2274 = vmatpush1.xpose.msra.mxu0 %v2273
    %2275 = vmatprep.subr.mxu0 0.0
    %2276 = vmatpush1.xpose.msra.mxu0 0.0
    %2277 = vmatprep.subr.mxu0 0.0
    %2278 = vmatpush1.xpose.msra.mxu0 0.0
    %2279 = vmatprep.subr.mxu0 0.0
    %2280 = vmatpush1.xpose.msra.mxu0 0.0
    %2281 = vmatprep.subr.mxu0 0.0
    %2282 = vmatpush1.xpose.msra.mxu0 0.0
    %2283 = vmatprep.subr.mxu0 0.0
    %2284 = vmatpush1.xpose.msra.mxu0 0.0
    %2285 = vmatprep.subr.mxu0 0.0
    %2286 = vmatpush1.xpose.msra.mxu0 0.0
    %2287 = vmatprep.subr.mxu0 0.0
    %2288 = vmatpush1.xpose.msra.mxu0 0.0
    %2289 = vmatprep.subr.mxu0 0.0
    %2290 = vmatpush1.xpose.msra.mxu0 0.0
    %2291 = vmatprep.subr.mxu0 0.0
    %2292 = vmatpush1.xpose.msra.mxu0 0.0
    %2293 = vmatprep.subr.mxu0 0.0
    %2294 = vmatpush1.xpose.msra.mxu0 0.0
    %2295 = vmatprep.subr.mxu0 0.0
    %2296 = vmatpush1.xpose.msra.mxu0 0.0
    %2297 = vmatprep.subr.mxu0 0.0
    %2298 = vmatpush1.xpose.msra.mxu0 0.0
    %2299 = vmatprep.subr.mxu0 0.0
    %2300 = vmatpush1.xpose.msra.mxu0 0.0
    %2301 = vmatprep.subr.mxu0 0.0
    %2302 = vmatpush1.xpose.msra.mxu0 0.0
    %2303 = vmatprep.subr.mxu0 0.0
    %2304 = vmatpush1.xpose.msra.mxu0 0.0
    %2305 = vmatprep.subr.mxu0 0.0
    %2306 = vmatpush1.xpose.msra.mxu0 0.0
    %2307 = vmatprep.subr.mxu0 0.0
    %2308 = vmatpush1.xpose.msra.mxu0 0.0
    %2309 = vmatprep.subr.mxu0 0.0
    %2310 = vmatpush1.xpose.msra.mxu0 0.0
    %2311 = vmatprep.subr.mxu0 0.0
    %2312 = vmatpush1.xpose.msra.mxu0 0.0
    %2313 = vmatprep.subr.mxu0 0.0
    %2314 = vmatpush1.xpose.msra.mxu0 0.0
    %2315 = vmatprep.subr.mxu0 0.0
    %2316 = vmatpush1.xpose.msra.mxu0 0.0
    %2317 = vmatprep.subr.mxu0 0.0
    %2318 = vmatpush1.xpose.msra.mxu0 0.0
    %2319 = vmatprep.subr.mxu0 0.0
    %2320 = vmatpush1.xpose.msra.mxu0 0.0
    %2321 = vmatprep.subr.mxu0 0.0
    %2322 = vmatpush1.xpose.msra.mxu0 0.0
    %2323 = vmatprep.subr.mxu0 0.0
    %2324 = vmatpush1.xpose.msra.mxu0 0.0
    %2325 = vmatprep.subr.mxu0 0.0
    %2326 = vmatpush1.xpose.msra.mxu0 0.0
    %2327 = vmatprep.subr.mxu0 0.0
    %2328 = vmatpush1.xpose.msra.mxu0 0.0
    %2329 = vmatprep.subr.mxu0 0.0
    %2330 = vmatpush1.xpose.msra.mxu0 0.0
    %2331 = vmatprep.subr.mxu0 0.0
    %2332 = vmatpush1.xpose.msra.mxu0 0.0
    %2333 = vmatprep.subr.mxu0 0.0
    %2334 = vmatpush1.xpose.msra.mxu0 0.0
    %2335 = vmatprep.subr.mxu0 0.0
    %2336 = vmatpush1.xpose.msra.mxu0 0.0
    %2337 = vmatprep.mubr.f32.mxu0 0.0
    %v2338 = vand.u32 %v2188, 4294901760
    %2339 = vmatmul.mubr.f32.gmra.mrb[0].mxu0 %v2338
    %v2340 = vpop.f32.mrb[0].mxu0
    %v2341 = vadd.f32 %v2265, %v2340
    %v2342 = vpop.f32.mrb[0].mxu0
    %2343 = vdwg.mxu0
    %2344 = vmatprep.subr.mxu0 0.0
    %v2345 = vand.u32 %v2190, 4294901760
    %v2346 = vsub.f32 %v2190, %v2345
    %2347 = vmatpush1.xpose.msra.mxu0 %v2346
    %2348 = vmatprep.subr.mxu0 0.0
    %2349 = vmatpush1.xpose.msra.mxu0 0.0
    %2350 = vmatprep.subr.mxu0 0.0
    %2351 = vmatpush1.xpose.msra.mxu0 0.0
    %2352 = vmatprep.subr.mxu0 0.0
    %2353 = vmatpush1.xpose.msra.mxu0 0.0
    %2354 = vmatprep.subr.mxu0 0.0
    %2355 = vmatpush1.xpose.msra.mxu0 0.0
    %2356 = vmatprep.subr.mxu0 0.0
    %2357 = vmatpush1.xpose.msra.mxu0 0.0
    %2358 = vmatprep.subr.mxu0 0.0
    %2359 = vmatpush1.xpose.msra.mxu0 0.0
    %2360 = vmatprep.subr.mxu0 0.0
    %2361 = vmatpush1.xpose.msra.mxu0 0.0
    %2362 = vmatprep.subr.mxu0 0.0
    %2363 = vmatpush1.xpose.msra.mxu0 0.0
    %2364 = vmatprep.subr.mxu0 0.0
    %2365 = vmatpush1.xpose.msra.mxu0 0.0
    %2366 = vmatprep.subr.mxu0 0.0
    %2367 = vmatpush1.xpose.msra.mxu0 0.0
    %2368 = vmatprep.subr.mxu0 0.0
    %2369 = vmatpush1.xpose.msra.mxu0 0.0
    %2370 = vmatprep.subr.mxu0 0.0
    %2371 = vmatpush1.xpose.msra.mxu0 0.0
    %2372 = vmatprep.subr.mxu0 0.0
    %2373 = vmatpush1.xpose.msra.mxu0 0.0
    %2374 = vmatprep.subr.mxu0 0.0
    %2375 = vmatpush1.xpose.msra.mxu0 0.0
    %2376 = vmatprep.subr.mxu0 0.0
    %2377 = vmatpush1.xpose.msra.mxu0 0.0
    %2378 = vmatprep.subr.mxu0 0.0
    %2379 = vmatpush1.xpose.msra.mxu0 0.0
    %2380 = vmatprep.subr.mxu0 0.0
    %2381 = vmatpush1.xpose.msra.mxu0 0.0
    %2382 = vmatprep.subr.mxu0 0.0
    %2383 = vmatpush1.xpose.msra.mxu0 0.0
    %2384 = vmatprep.subr.mxu0 0.0
    %2385 = vmatpush1.xpose.msra.mxu0 0.0
    %2386 = vmatprep.subr.mxu0 0.0
    %2387 = vmatpush1.xpose.msra.mxu0 0.0
    %2388 = vmatprep.subr.mxu0 0.0
    %2389 = vmatpush1.xpose.msra.mxu0 0.0
    %2390 = vmatprep.subr.mxu0 0.0
    %2391 = vmatpush1.xpose.msra.mxu0 0.0
    %2392 = vmatprep.subr.mxu0 0.0
    %2393 = vmatpush1.xpose.msra.mxu0 0.0
    %2394 = vmatprep.subr.mxu0 0.0
    %2395 = vmatpush1.xpose.msra.mxu0 0.0
    %2396 = vmatprep.subr.mxu0 0.0
    %2397 = vmatpush1.xpose.msra.mxu0 0.0
    %2398 = vmatprep.subr.mxu0 0.0
    %2399 = vmatpush1.xpose.msra.mxu0 0.0
    %2400 = vmatprep.subr.mxu0 0.0
    %2401 = vmatpush1.xpose.msra.mxu0 0.0
    %2402 = vmatprep.subr.mxu0 0.0
    %2403 = vmatpush1.xpose.msra.mxu0 0.0
    %2404 = vmatprep.subr.mxu0 0.0
    %2405 = vmatpush1.xpose.msra.mxu0 0.0
    %2406 = vmatprep.subr.mxu0 0.0
    %2407 = vmatpush1.xpose.msra.mxu0 0.0
    %2408 = vmatprep.subr.mxu0 0.0
    %2409 = vmatpush1.xpose.msra.mxu0 0.0
    %2410 = vmatprep.mubr.f32.mxu0 0.0
    %v2411 = vand.u32 %v2188, 4294901760
    %v2412 = vsub.f32 %v2188, %v2411
    %2413 = vmatmul.mubr.f32.gmra.mrb[0].mxu0 %v2412
    %v2414 = vpop.f32.mrb[0].mxu0
    %v2415 = vadd.f32 %v2341, %v2414
    %v2416 = vpop.f32.mrb[0].mxu0
    %2417 = vdwg.mxu0
    %2418 = vmatprep.subr.mxu0 0.0
    %v2419 = vand.u32 %v2190, 4294901760
    %2420 = vmatpush1.xpose.msra.mxu0 %v2419
    %2421 = vmatprep.subr.mxu0 0.0
    %2422 = vmatpush1.xpose.msra.mxu0 0.0
    %2423 = vmatprep.subr.mxu0 0.0
    %2424 = vmatpush1.xpose.msra.mxu0 0.0
    %2425 = vmatprep.subr.mxu0 0.0
    %2426 = vmatpush1.xpose.msra.mxu0 0.0
    %2427 = vmatprep.subr.mxu0 0.0
    %2428 = vmatpush1.xpose.msra.mxu0 0.0
    %2429 = vmatprep.subr.mxu0 0.0
    %2430 = vmatpush1.xpose.msra.mxu0 0.0
    %2431 = vmatprep.subr.mxu0 0.0
    %2432 = vmatpush1.xpose.msra.mxu0 0.0
    %2433 = vmatprep.subr.mxu0 0.0
    %2434 = vmatpush1.xpose.msra.mxu0 0.0
    %2435 = vmatprep.subr.mxu0 0.0
    %2436 = vmatpush1.xpose.msra.mxu0 0.0
    %2437 = vmatprep.subr.mxu0 0.0
    %2438 = vmatpush1.xpose.msra.mxu0 0.0
    %2439 = vmatprep.subr.mxu0 0.0
    %2440 = vmatpush1.xpose.msra.mxu0 0.0
    %2441 = vmatprep.subr.mxu0 0.0
    %2442 = vmatpush1.xpose.msra.mxu0 0.0
    %2443 = vmatprep.subr.mxu0 0.0
    %2444 = vmatpush1.xpose.msra.mxu0 0.0
    %2445 = vmatprep.subr.mxu0 0.0
    %2446 = vmatpush1.xpose.msra.mxu0 0.0
    %2447 = vmatprep.subr.mxu0 0.0
    %2448 = vmatpush1.xpose.msra.mxu0 0.0
    %2449 = vmatprep.subr.mxu0 0.0
    %2450 = vmatpush1.xpose.msra.mxu0 0.0
    %2451 = vmatprep.subr.mxu0 0.0
    %2452 = vmatpush1.xpose.msra.mxu0 0.0
    %2453 = vmatprep.subr.mxu0 0.0
    %2454 = vmatpush1.xpose.msra.mxu0 0.0
    %2455 = vmatprep.subr.mxu0 0.0
    %2456 = vmatpush1.xpose.msra.mxu0 0.0
    %2457 = vmatprep.subr.mxu0 0.0
    %2458 = vmatpush1.xpose.msra.mxu0 0.0
    %2459 = vmatprep.subr.mxu0 0.0
    %2460 = vmatpush1.xpose.msra.mxu0 0.0
    %2461 = vmatprep.subr.mxu0 0.0
    %2462 = vmatpush1.xpose.msra.mxu0 0.0
    %2463 = vmatprep.subr.mxu0 0.0
    %2464 = vmatpush1.xpose.msra.mxu0 0.0
    %2465 = vmatprep.subr.mxu0 0.0
    %2466 = vmatpush1.xpose.msra.mxu0 0.0
    %2467 = vmatprep.subr.mxu0 0.0
    %2468 = vmatpush1.xpose.msra.mxu0 0.0
    %2469 = vmatprep.subr.mxu0 0.0
    %2470 = vmatpush1.xpose.msra.mxu0 0.0
    %2471 = vmatprep.subr.mxu0 0.0
    %2472 = vmatpush1.xpose.msra.mxu0 0.0
    %2473 = vmatprep.subr.mxu0 0.0
    %2474 = vmatpush1.xpose.msra.mxu0 0.0
    %2475 = vmatprep.subr.mxu0 0.0
    %2476 = vmatpush1.xpose.msra.mxu0 0.0
    %2477 = vmatprep.subr.mxu0 0.0
    %2478 = vmatpush1.xpose.msra.mxu0 0.0
    %2479 = vmatprep.subr.mxu0 0.0
    %2480 = vmatpush1.xpose.msra.mxu0 0.0
    %2481 = vmatprep.subr.mxu0 0.0
    %2482 = vmatpush1.xpose.msra.mxu0 0.0
    %2483 = vmatprep.mubr.f32.mxu0 0.0
    %v2484 = vand.u32 %v2188, 4294901760
    %v2485 = vsub.f32 %v2188, %v2484
    %v2486 = vand.u32 %v2485, 4294901760
    %2487 = vmatmul.mubr.f32.gmra.mrb[0].mxu0 %v2486
    %v2488 = vpop.f32.mrb[0].mxu0
    %v2489 = vadd.f32 %v2415, %v2488
    %v2490 = vpop.f32.mrb[0].mxu0
    %2491 = vdwg.mxu0
    %2492 = vmatprep.subr.mxu0 0.0
    %v2493 = vand.u32 %v2190, 4294901760
    %v2494 = vsub.f32 %v2190, %v2493
    %v2495 = vand.u32 %v2494, 4294901760
    %2496 = vmatpush1.xpose.msra.mxu0 %v2495
    %2497 = vmatprep.subr.mxu0 0.0
    %2498 = vmatpush1.xpose.msra.mxu0 0.0
    %2499 = vmatprep.subr.mxu0 0.0
    %2500 = vmatpush1.xpose.msra.mxu0 0.0
    %2501 = vmatprep.subr.mxu0 0.0
    %2502 = vmatpush1.xpose.msra.mxu0 0.0
    %2503 = vmatprep.subr.mxu0 0.0
    %2504 = vmatpush1.xpose.msra.mxu0 0.0
    %2505 = vmatprep.subr.mxu0 0.0
    %2506 = vmatpush1.xpose.msra.mxu0 0.0
    %2507 = vmatprep.subr.mxu0 0.0
    %2508 = vmatpush1.xpose.msra.mxu0 0.0
    %2509 = vmatprep.subr.mxu0 0.0
    %2510 = vmatpush1.xpose.msra.mxu0 0.0
    %2511 = vmatprep.subr.mxu0 0.0
    %2512 = vmatpush1.xpose.msra.mxu0 0.0
    %2513 = vmatprep.subr.mxu0 0.0
    %2514 = vmatpush1.xpose.msra.mxu0 0.0
    %2515 = vmatprep.subr.mxu0 0.0
    %2516 = vmatpush1.xpose.msra.mxu0 0.0
    %2517 = vmatprep.subr.mxu0 0.0
    %2518 = vmatpush1.xpose.msra.mxu0 0.0
    %2519 = vmatprep.subr.mxu0 0.0
    %2520 = vmatpush1.xpose.msra.mxu0 0.0
    %2521 = vmatprep.subr.mxu0 0.0
    %2522 = vmatpush1.xpose.msra.mxu0 0.0
    %2523 = vmatprep.subr.mxu0 0.0
    %2524 = vmatpush1.xpose.msra.mxu0 0.0
    %2525 = vmatprep.subr.mxu0 0.0
    %2526 = vmatpush1.xpose.msra.mxu0 0.0
    %2527 = vmatprep.subr.mxu0 0.0
    %2528 = vmatpush1.xpose.msra.mxu0 0.0
    %2529 = vmatprep.subr.mxu0 0.0
    %2530 = vmatpush1.xpose.msra.mxu0 0.0
    %2531 = vmatprep.subr.mxu0 0.0
    %2532 = vmatpush1.xpose.msra.mxu0 0.0
    %2533 = vmatprep.subr.mxu0 0.0
    %2534 = vmatpush1.xpose.msra.mxu0 0.0
    %2535 = vmatprep.subr.mxu0 0.0
    %2536 = vmatpush1.xpose.msra.mxu0 0.0
    %2537 = vmatprep.subr.mxu0 0.0
    %2538 = vmatpush1.xpose.msra.mxu0 0.0
    %2539 = vmatprep.subr.mxu0 0.0
    %2540 = vmatpush1.xpose.msra.mxu0 0.0
    %2541 = vmatprep.subr.mxu0 0.0
    %2542 = vmatpush1.xpose.msra.mxu0 0.0
    %2543 = vmatprep.subr.mxu0 0.0
    %2544 = vmatpush1.xpose.msra.mxu0 0.0
    %2545 = vmatprep.subr.mxu0 0.0
    %2546 = vmatpush1.xpose.msra.mxu0 0.0
    %2547 = vmatprep.subr.mxu0 0.0
    %2548 = vmatpush1.xpose.msra.mxu0 0.0
    %2549 = vmatprep.subr.mxu0 0.0
    %2550 = vmatpush1.xpose.msra.mxu0 0.0
    %2551 = vmatprep.subr.mxu0 0.0
    %2552 = vmatpush1.xpose.msra.mxu0 0.0
    %2553 = vmatprep.subr.mxu0 0.0
    %2554 = vmatpush1.xpose.msra.mxu0 0.0
    %2555 = vmatprep.subr.mxu0 0.0
    %2556 = vmatpush1.xpose.msra.mxu0 0.0
    %2557 = vmatprep.subr.mxu0 0.0
    %2558 = vmatpush1.xpose.msra.mxu0 0.0
    %2559 = vmatprep.mubr.f32.mxu0 0.0
    %v2560 = vand.u32 %v2188, 4294901760
    %2561 = vmatmul.mubr.f32.gmra.mrb[0].mxu0 %v2560
    %v2562 = vpop.f32.mrb[0].mxu0
    %v2563 = vadd.f32 %v2489, %v2562
    %v2564 = vpop.f32.mrb[0].mxu0
    %2565 = vdwg.mxu0
    %2566 = vmatprep.subr.mxu0 0.0
    %v2567 = vand.u32 %v2190, 4294901760
    %2568 = vmatpush1.xpose.msra.mxu0 %v2567
    %2569 = vmatprep.subr.mxu0 0.0
    %2570 = vmatpush1.xpose.msra.mxu0 0.0
    %2571 = vmatprep.subr.mxu0 0.0
    %2572 = vmatpush1.xpose.msra.mxu0 0.0
    %2573 = vmatprep.subr.mxu0 0.0
    %2574 = vmatpush1.xpose.msra.mxu0 0.0
    %2575 = vmatprep.subr.mxu0 0.0
    %2576 = vmatpush1.xpose.msra.mxu0 0.0
    %2577 = vmatprep.subr.mxu0 0.0
    %2578 = vmatpush1.xpose.msra.mxu0 0.0
    %2579 = vmatprep.subr.mxu0 0.0
    %2580 = vmatpush1.xpose.msra.mxu0 0.0
    %2581 = vmatprep.subr.mxu0 0.0
    %2582 = vmatpush1.xpose.msra.mxu0 0.0
    %2583 = vmatprep.subr.mxu0 0.0
    %2584 = vmatpush1.xpose.msra.mxu0 0.0
    %2585 = vmatprep.subr.mxu0 0.0
    %2586 = vmatpush1.xpose.msra.mxu0 0.0
    %2587 = vmatprep.subr.mxu0 0.0
    %2588 = vmatpush1.xpose.msra.mxu0 0.0
    %2589 = vmatprep.subr.mxu0 0.0
    %2590 = vmatpush1.xpose.msra.mxu0 0.0
    %2591 = vmatprep.subr.mxu0 0.0
    %2592 = vmatpush1.xpose.msra.mxu0 0.0
    %2593 = vmatprep.subr.mxu0 0.0
    %2594 = vmatpush1.xpose.msra.mxu0 0.0
    %2595 = vmatprep.subr.mxu0 0.0
    %2596 = vmatpush1.xpose.msra.mxu0 0.0
    %2597 = vmatprep.subr.mxu0 0.0
    %2598 = vmatpush1.xpose.msra.mxu0 0.0
    %2599 = vmatprep.subr.mxu0 0.0
    %2600 = vmatpush1.xpose.msra.mxu0 0.0
    %2601 = vmatprep.subr.mxu0 0.0
    %2602 = vmatpush1.xpose.msra.mxu0 0.0
    %2603 = vmatprep.subr.mxu0 0.0
    %2604 = vmatpush1.xpose.msra.mxu0 0.0
    %2605 = vmatprep.subr.mxu0 0.0
    %2606 = vmatpush1.xpose.msra.mxu0 0.0
    %2607 = vmatprep.subr.mxu0 0.0
    %2608 = vmatpush1.xpose.msra.mxu0 0.0
    %2609 = vmatprep.subr.mxu0 0.0
    %2610 = vmatpush1.xpose.msra.mxu0 0.0
    %2611 = vmatprep.subr.mxu0 0.0
    %2612 = vmatpush1.xpose.msra.mxu0 0.0
    %2613 = vmatprep.subr.mxu0 0.0
    %2614 = vmatpush1.xpose.msra.mxu0 0.0
    %2615 = vmatprep.subr.mxu0 0.0
    %2616 = vmatpush1.xpose.msra.mxu0 0.0
    %2617 = vmatprep.subr.mxu0 0.0
    %2618 = vmatpush1.xpose.msra.mxu0 0.0
    %2619 = vmatprep.subr.mxu0 0.0
    %2620 = vmatpush1.xpose.msra.mxu0 0.0
    %2621 = vmatprep.subr.mxu0 0.0
    %2622 = vmatpush1.xpose.msra.mxu0 0.0
    %2623 = vmatprep.subr.mxu0 0.0
    %2624 = vmatpush1.xpose.msra.mxu0 0.0
    %2625 = vmatprep.subr.mxu0 0.0
    %2626 = vmatpush1.xpose.msra.mxu0 0.0
    %2627 = vmatprep.subr.mxu0 0.0
    %2628 = vmatpush1.xpose.msra.mxu0 0.0
    %2629 = vmatprep.subr.mxu0 0.0
    %2630 = vmatpush1.xpose.msra.mxu0 0.0
    %2631 = vmatprep.mubr.f32.mxu0 0.0
    %v2632 = vand.u32 %v2188, 4294901760
    %2633 = vmatmul.mubr.f32.gmra.mrb[0].mxu0 %v2632
    %v2634 = vpop.f32.mrb[0].mxu0
    %v2635 = vadd.f32 %v2563, %v2634
    %v2636 = vpop.f32.mrb[0].mxu0
    %2637 = vdwg.mxu0
    %v2638 = vsel %vm1737, %v1029, 0
    %v2640 = vsel %vm1737, %v1031, 0
    %2642 = vmatprep.subr.mxu0 0.0
    %v2643 = vand.u32 %v2640, 4294901760
    %2644 = vmatpush1.xpose.msra.mxu0 %v2643
    %2645 = vmatprep.subr.mxu0 0.0
    %2646 = vmatpush1.xpose.msra.mxu0 0.0
    %2647 = vmatprep.subr.mxu0 0.0
    %2648 = vmatpush1.xpose.msra.mxu0 0.0
    %2649 = vmatprep.subr.mxu0 0.0
    %2650 = vmatpush1.xpose.msra.mxu0 0.0
    %2651 = vmatprep.subr.mxu0 0.0
    %2652 = vmatpush1.xpose.msra.mxu0 0.0
    %2653 = vmatprep.subr.mxu0 0.0
    %2654 = vmatpush1.xpose.msra.mxu0 0.0
    %2655 = vmatprep.subr.mxu0 0.0
    %2656 = vmatpush1.xpose.msra.mxu0 0.0
    %2657 = vmatprep.subr.mxu0 0.0
    %2658 = vmatpush1.xpose.msra.mxu0 0.0
    %2659 = vmatprep.subr.mxu0 0.0
    %2660 = vmatpush1.xpose.msra.mxu0 0.0
    %2661 = vmatprep.subr.mxu0 0.0
    %2662 = vmatpush1.xpose.msra.mxu0 0.0
    %2663 = vmatprep.subr.mxu0 0.0
    %2664 = vmatpush1.xpose.msra.mxu0 0.0
    %2665 = vmatprep.subr.mxu0 0.0
    %2666 = vmatpush1.xpose.msra.mxu0 0.0
    %2667 = vmatprep.subr.mxu0 0.0
    %2668 = vmatpush1.xpose.msra.mxu0 0.0
    %2669 = vmatprep.subr.mxu0 0.0
    %2670 = vmatpush1.xpose.msra.mxu0 0.0
    %2671 = vmatprep.subr.mxu0 0.0
    %2672 = vmatpush1.xpose.msra.mxu0 0.0
    %2673 = vmatprep.subr.mxu0 0.0
    %2674 = vmatpush1.xpose.msra.mxu0 0.0
    %2675 = vmatprep.subr.mxu0 0.0
    %2676 = vmatpush1.xpose.msra.mxu0 0.0
    %2677 = vmatprep.subr.mxu0 0.0
    %2678 = vmatpush1.xpose.msra.mxu0 0.0
    %2679 = vmatprep.subr.mxu0 0.0
    %2680 = vmatpush1.xpose.msra.mxu0 0.0
    %2681 = vmatprep.subr.mxu0 0.0
    %2682 = vmatpush1.xpose.msra.mxu0 0.0
    %2683 = vmatprep.subr.mxu0 0.0
    %2684 = vmatpush1.xpose.msra.mxu0 0.0
    %2685 = vmatprep.subr.mxu0 0.0
    %2686 = vmatpush1.xpose.msra.mxu0 0.0
    %2687 = vmatprep.subr.mxu0 0.0
    %2688 = vmatpush1.xpose.msra.mxu0 0.0
    %2689 = vmatprep.subr.mxu0 0.0
    %2690 = vmatpush1.xpose.msra.mxu0 0.0
    %2691 = vmatprep.subr.mxu0 0.0
    %2692 = vmatpush1.xpose.msra.mxu0 0.0
    %2693 = vmatprep.subr.mxu0 0.0
    %2694 = vmatpush1.xpose.msra.mxu0 0.0
    %2695 = vmatprep.subr.mxu0 0.0
    %2696 = vmatpush1.xpose.msra.mxu0 0.0
    %2697 = vmatprep.subr.mxu0 0.0
    %2698 = vmatpush1.xpose.msra.mxu0 0.0
    %2699 = vmatprep.subr.mxu0 0.0
    %2700 = vmatpush1.xpose.msra.mxu0 0.0
    %2701 = vmatprep.subr.mxu0 0.0
    %2702 = vmatpush1.xpose.msra.mxu0 0.0
    %2703 = vmatprep.subr.mxu0 0.0
    %2704 = vmatpush1.xpose.msra.mxu0 0.0
    %2705 = vmatprep.subr.mxu0 0.0
    %2706 = vmatpush1.xpose.msra.mxu0 0.0
    %2707 = vmatprep.mubr.f32.mxu0 0.0
    %v2708 = vand.u32 %v2638, 4294901760
    %v2709 = vsub.f32 %v2638, %v2708
    %v2710 = vand.u32 %v2709, 4294901760
    %v2711 = vsub.f32 %v2709, %v2710
    %v2712 = vand.u32 %v2711, 4294901760
    %2713 = vmatmul.mubr.f32.gmra.mrb[0].mxu0 %v2712
    %v2714 = vpop.f32.mrb[0].mxu0
    %v2715 = vadd.f32 0.0, %v2714
    %v2716 = vpop.f32.mrb[0].mxu0
    %2717 = vdwg.mxu0
    %2718 = vmatprep.subr.mxu0 0.0
    %v2719 = vand.u32 %v2640, 4294901760
    %v2720 = vsub.f32 %v2640, %v2719
    %v2721 = vand.u32 %v2720, 4294901760
    %v2722 = vsub.f32 %v2720, %v2721
    %v2723 = vand.u32 %v2722, 4294901760
    %2724 = vmatpush1.xpose.msra.mxu0 %v2723
    %2725 = vmatprep.subr.mxu0 0.0
    %2726 = vmatpush1.xpose.msra.mxu0 0.0
    %2727 = vmatprep.subr.mxu0 0.0
    %2728 = vmatpush1.xpose.msra.mxu0 0.0
    %2729 = vmatprep.subr.mxu0 0.0
    %2730 = vmatpush1.xpose.msra.mxu0 0.0
    %2731 = vmatprep.subr.mxu0 0.0
    %2732 = vmatpush1.xpose.msra.mxu0 0.0
    %2733 = vmatprep.subr.mxu0 0.0
    %2734 = vmatpush1.xpose.msra.mxu0 0.0
    %2735 = vmatprep.subr.mxu0 0.0
    %2736 = vmatpush1.xpose.msra.mxu0 0.0
    %2737 = vmatprep.subr.mxu0 0.0
    %2738 = vmatpush1.xpose.msra.mxu0 0.0
    %2739 = vmatprep.subr.mxu0 0.0
    %2740 = vmatpush1.xpose.msra.mxu0 0.0
    %2741 = vmatprep.subr.mxu0 0.0
    %2742 = vmatpush1.xpose.msra.mxu0 0.0
    %2743 = vmatprep.subr.mxu0 0.0
    %2744 = vmatpush1.xpose.msra.mxu0 0.0
    %2745 = vmatprep.subr.mxu0 0.0
    %2746 = vmatpush1.xpose.msra.mxu0 0.0
    %2747 = vmatprep.subr.mxu0 0.0
    %2748 = vmatpush1.xpose.msra.mxu0 0.0
    %2749 = vmatprep.subr.mxu0 0.0
    %2750 = vmatpush1.xpose.msra.mxu0 0.0
    %2751 = vmatprep.subr.mxu0 0.0
    %2752 = vmatpush1.xpose.msra.mxu0 0.0
    %2753 = vmatprep.subr.mxu0 0.0
    %2754 = vmatpush1.xpose.msra.mxu0 0.0
    %2755 = vmatprep.subr.mxu0 0.0
    %2756 = vmatpush1.xpose.msra.mxu0 0.0
    %2757 = vmatprep.subr.mxu0 0.0
    %2758 = vmatpush1.xpose.msra.mxu0 0.0
    %2759 = vmatprep.subr.mxu0 0.0
    %2760 = vmatpush1.xpose.msra.mxu0 0.0
    %2761 = vmatprep.subr.mxu0 0.0
    %2762 = vmatpush1.xpose.msra.mxu0 0.0
    %2763 = vmatprep.subr.mxu0 0.0
    %2764 = vmatpush1.xpose.msra.mxu0 0.0
    %2765 = vmatprep.subr.mxu0 0.0
    %2766 = vmatpush1.xpose.msra.mxu0 0.0
    %2767 = vmatprep.subr.mxu0 0.0
    %2768 = vmatpush1.xpose.msra.mxu0 0.0
    %2769 = vmatprep.subr.mxu0 0.0
    %2770 = vmatpush1.xpose.msra.mxu0 0.0
    %2771 = vmatprep.subr.mxu0 0.0
    %2772 = vmatpush1.xpose.msra.mxu0 0.0
    %2773 = vmatprep.subr.mxu0 0.0
    %2774 = vmatpush1.xpose.msra.mxu0 0.0
    %2775 = vmatprep.subr.mxu0 0.0
    %2776 = vmatpush1.xpose.msra.mxu0 0.0
    %2777 = vmatprep.subr.mxu0 0.0
    %2778 = vmatpush1.xpose.msra.mxu0 0.0
    %2779 = vmatprep.subr.mxu0 0.0
    %2780 = vmatpush1.xpose.msra.mxu0 0.0
    %2781 = vmatprep.subr.mxu0 0.0
    %2782 = vmatpush1.xpose.msra.mxu0 0.0
    %2783 = vmatprep.subr.mxu0 0.0
    %2784 = vmatpush1.xpose.msra.mxu0 0.0
    %2785 = vmatprep.subr.mxu0 0.0
    %2786 = vmatpush1.xpose.msra.mxu0 0.0
    %2787 = vmatprep.mubr.f32.mxu0 0.0
    %v2788 = vand.u32 %v2638, 4294901760
    %2789 = vmatmul.mubr.f32.gmra.mrb[0].mxu0 %v2788
    %v2790 = vpop.f32.mrb[0].mxu0
    %v2791 = vadd.f32 %v2715, %v2790
    %v2792 = vpop.f32.mrb[0].mxu0
    %2793 = vdwg.mxu0
    %2794 = vmatprep.subr.mxu0 0.0
    %v2795 = vand.u32 %v2640, 4294901760
    %v2796 = vsub.f32 %v2640, %v2795
    %2797 = vmatpush1.xpose.msra.mxu0 %v2796
    %2798 = vmatprep.subr.mxu0 0.0
    %2799 = vmatpush1.xpose.msra.mxu0 0.0
    %2800 = vmatprep.subr.mxu0 0.0
    %2801 = vmatpush1.xpose.msra.mxu0 0.0
    %2802 = vmatprep.subr.mxu0 0.0
    %2803 = vmatpush1.xpose.msra.mxu0 0.0
    %2804 = vmatprep.subr.mxu0 0.0
    %2805 = vmatpush1.xpose.msra.mxu0 0.0
    %2806 = vmatprep.subr.mxu0 0.0
    %2807 = vmatpush1.xpose.msra.mxu0 0.0
    %2808 = vmatprep.subr.mxu0 0.0
    %2809 = vmatpush1.xpose.msra.mxu0 0.0
    %2810 = vmatprep.subr.mxu0 0.0
    %2811 = vmatpush1.xpose.msra.mxu0 0.0
    %2812 = vmatprep.subr.mxu0 0.0
    %2813 = vmatpush1.xpose.msra.mxu0 0.0
    %2814 = vmatprep.subr.mxu0 0.0
    %2815 = vmatpush1.xpose.msra.mxu0 0.0
    %2816 = vmatprep.subr.mxu0 0.0
    %2817 = vmatpush1.xpose.msra.mxu0 0.0
    %2818 = vmatprep.subr.mxu0 0.0
    %2819 = vmatpush1.xpose.msra.mxu0 0.0
    %2820 = vmatprep.subr.mxu0 0.0
    %2821 = vmatpush1.xpose.msra.mxu0 0.0
    %2822 = vmatprep.subr.mxu0 0.0
    %2823 = vmatpush1.xpose.msra.mxu0 0.0
    %2824 = vmatprep.subr.mxu0 0.0
    %2825 = vmatpush1.xpose.msra.mxu0 0.0
    %2826 = vmatprep.subr.mxu0 0.0
    %2827 = vmatpush1.xpose.msra.mxu0 0.0
    %2828 = vmatprep.subr.mxu0 0.0
    %2829 = vmatpush1.xpose.msra.mxu0 0.0
    %2830 = vmatprep.subr.mxu0 0.0
    %2831 = vmatpush1.xpose.msra.mxu0 0.0
    %2832 = vmatprep.subr.mxu0 0.0
    %2833 = vmatpush1.xpose.msra.mxu0 0.0
    %2834 = vmatprep.subr.mxu0 0.0
    %2835 = vmatpush1.xpose.msra.mxu0 0.0
    %2836 = vmatprep.subr.mxu0 0.0
    %2837 = vmatpush1.xpose.msra.mxu0 0.0
    %2838 = vmatprep.subr.mxu0 0.0
    %2839 = vmatpush1.xpose.msra.mxu0 0.0
    %2840 = vmatprep.subr.mxu0 0.0
    %2841 = vmatpush1.xpose.msra.mxu0 0.0
    %2842 = vmatprep.subr.mxu0 0.0
    %2843 = vmatpush1.xpose.msra.mxu0 0.0
    %2844 = vmatprep.subr.mxu0 0.0
    %2845 = vmatpush1.xpose.msra.mxu0 0.0
    %2846 = vmatprep.subr.mxu0 0.0
    %2847 = vmatpush1.xpose.msra.mxu0 0.0
    %2848 = vmatprep.subr.mxu0 0.0
    %2849 = vmatpush1.xpose.msra.mxu0 0.0
    %2850 = vmatprep.subr.mxu0 0.0
    %2851 = vmatpush1.xpose.msra.mxu0 0.0
    %2852 = vmatprep.subr.mxu0 0.0
    %2853 = vmatpush1.xpose.msra.mxu0 0.0
    %2854 = vmatprep.subr.mxu0 0.0
    %2855 = vmatpush1.xpose.msra.mxu0 0.0
    %2856 = vmatprep.subr.mxu0 0.0
    %2857 = vmatpush1.xpose.msra.mxu0 0.0
    %2858 = vmatprep.subr.mxu0 0.0
    %2859 = vmatpush1.xpose.msra.mxu0 0.0
    %2860 = vmatprep.mubr.f32.mxu0 0.0
    %v2861 = vand.u32 %v2638, 4294901760
    %v2862 = vsub.f32 %v2638, %v2861
    %2863 = vmatmul.mubr.f32.gmra.mrb[0].mxu0 %v2862
    %v2864 = vpop.f32.mrb[0].mxu0
    %v2865 = vadd.f32 %v2791, %v2864
    %v2866 = vpop.f32.mrb[0].mxu0
    %2867 = vdwg.mxu0
    %2868 = vmatprep.subr.mxu0 0.0
    %v2869 = vand.u32 %v2640, 4294901760
    %2870 = vmatpush1.xpose.msra.mxu0 %v2869
    %2871 = vmatprep.subr.mxu0 0.0
    %2872 = vmatpush1.xpose.msra.mxu0 0.0
    %2873 = vmatprep.subr.mxu0 0.0
    %2874 = vmatpush1.xpose.msra.mxu0 0.0
    %2875 = vmatprep.subr.mxu0 0.0
    %2876 = vmatpush1.xpose.msra.mxu0 0.0
    %2877 = vmatprep.subr.mxu0 0.0
    %2878 = vmatpush1.xpose.msra.mxu0 0.0
    %2879 = vmatprep.subr.mxu0 0.0
    %2880 = vmatpush1.xpose.msra.mxu0 0.0
    %2881 = vmatprep.subr.mxu0 0.0
    %2882 = vmatpush1.xpose.msra.mxu0 0.0
    %2883 = vmatprep.subr.mxu0 0.0
    %2884 = vmatpush1.xpose.msra.mxu0 0.0
    %2885 = vmatprep.subr.mxu0 0.0
    %2886 = vmatpush1.xpose.msra.mxu0 0.0
    %2887 = vmatprep.subr.mxu0 0.0
    %2888 = vmatpush1.xpose.msra.mxu0 0.0
    %2889 = vmatprep.subr.mxu0 0.0
    %2890 = vmatpush1.xpose.msra.mxu0 0.0
    %2891 = vmatprep.subr.mxu0 0.0
    %2892 = vmatpush1.xpose.msra.mxu0 0.0
    %2893 = vmatprep.subr.mxu0 0.0
    %2894 = vmatpush1.xpose.msra.mxu0 0.0
    %2895 = vmatprep.subr.mxu0 0.0
    %2896 = vmatpush1.xpose.msra.mxu0 0.0
    %2897 = vmatprep.subr.mxu0 0.0
    %2898 = vmatpush1.xpose.msra.mxu0 0.0
    %2899 = vmatprep.subr.mxu0 0.0
    %2900 = vmatpush1.xpose.msra.mxu0 0.0
    %2901 = vmatprep.subr.mxu0 0.0
    %2902 = vmatpush1.xpose.msra.mxu0 0.0
    %2903 = vmatprep.subr.mxu0 0.0
    %2904 = vmatpush1.xpose.msra.mxu0 0.0
    %2905 = vmatprep.subr.mxu0 0.0
    %2906 = vmatpush1.xpose.msra.mxu0 0.0
    %2907 = vmatprep.subr.mxu0 0.0
    %2908 = vmatpush1.xpose.msra.mxu0 0.0
    %2909 = vmatprep.subr.mxu0 0.0
    %2910 = vmatpush1.xpose.msra.mxu0 0.0
    %2911 = vmatprep.subr.mxu0 0.0
    %2912 = vmatpush1.xpose.msra.mxu0 0.0
    %2913 = vmatprep.subr.mxu0 0.0
    %2914 = vmatpush1.xpose.msra.mxu0 0.0
    %2915 = vmatprep.subr.mxu0 0.0
    %2916 = vmatpush1.xpose.msra.mxu0 0.0
    %2917 = vmatprep.subr.mxu0 0.0
    %2918 = vmatpush1.xpose.msra.mxu0 0.0
    %2919 = vmatprep.subr.mxu0 0.0
    %2920 = vmatpush1.xpose.msra.mxu0 0.0
    %2921 = vmatprep.subr.mxu0 0.0
    %2922 = vmatpush1.xpose.msra.mxu0 0.0
    %2923 = vmatprep.subr.mxu0 0.0
    %2924 = vmatpush1.xpose.msra.mxu0 0.0
    %2925 = vmatprep.subr.mxu0 0.0
    %2926 = vmatpush1.xpose.msra.mxu0 0.0
    %2927 = vmatprep.subr.mxu0 0.0
    %2928 = vmatpush1.xpose.msra.mxu0 0.0
    %2929 = vmatprep.subr.mxu0 0.0
    %2930 = vmatpush1.xpose.msra.mxu0 0.0
    %2931 = vmatprep.subr.mxu0 0.0
    %2932 = vmatpush1.xpose.msra.mxu0 0.0
    %2933 = vmatprep.mubr.f32.mxu0 0.0
    %v2934 = vand.u32 %v2638, 4294901760
    %v2935 = vsub.f32 %v2638, %v2934
    %v2936 = vand.u32 %v2935, 4294901760
    %2937 = vmatmul.mubr.f32.gmra.mrb[0].mxu0 %v2936
    %v2938 = vpop.f32.mrb[0].mxu0
    %v2939 = vadd.f32 %v2865, %v2938
    %v2940 = vpop.f32.mrb[0].mxu0
    %2941 = vdwg.mxu0
    %2942 = vmatprep.subr.mxu0 0.0
    %v2943 = vand.u32 %v2640, 4294901760
    %v2944 = vsub.f32 %v2640, %v2943
    %v2945 = vand.u32 %v2944, 4294901760
    %2946 = vmatpush1.xpose.msra.mxu0 %v2945
    %2947 = vmatprep.subr.mxu0 0.0
    %2948 = vmatpush1.xpose.msra.mxu0 0.0
    %2949 = vmatprep.subr.mxu0 0.0
    %2950 = vmatpush1.xpose.msra.mxu0 0.0
    %2951 = vmatprep.subr.mxu0 0.0
    %2952 = vmatpush1.xpose.msra.mxu0 0.0
    %2953 = vmatprep.subr.mxu0 0.0
    %2954 = vmatpush1.xpose.msra.mxu0 0.0
    %2955 = vmatprep.subr.mxu0 0.0
    %2956 = vmatpush1.xpose.msra.mxu0 0.0
    %2957 = vmatprep.subr.mxu0 0.0
    %2958 = vmatpush1.xpose.msra.mxu0 0.0
    %2959 = vmatprep.subr.mxu0 0.0
    %2960 = vmatpush1.xpose.msra.mxu0 0.0
    %2961 = vmatprep.subr.mxu0 0.0
    %2962 = vmatpush1.xpose.msra.mxu0 0.0
    %2963 = vmatprep.subr.mxu0 0.0
    %2964 = vmatpush1.xpose.msra.mxu0 0.0
    %2965 = vmatprep.subr.mxu0 0.0
    %2966 = vmatpush1.xpose.msra.mxu0 0.0
    %2967 = vmatprep.subr.mxu0 0.0
    %2968 = vmatpush1.xpose.msra.mxu0 0.0
    %2969 = vmatprep.subr.mxu0 0.0
    %2970 = vmatpush1.xpose.msra.mxu0 0.0
    %2971 = vmatprep.subr.mxu0 0.0
    %2972 = vmatpush1.xpose.msra.mxu0 0.0
    %2973 = vmatprep.subr.mxu0 0.0
    %2974 = vmatpush1.xpose.msra.mxu0 0.0
    %2975 = vmatprep.subr.mxu0 0.0
    %2976 = vmatpush1.xpose.msra.mxu0 0.0
    %2977 = vmatprep.subr.mxu0 0.0
    %2978 = vmatpush1.xpose.msra.mxu0 0.0
    %2979 = vmatprep.subr.mxu0 0.0
    %2980 = vmatpush1.xpose.msra.mxu0 0.0
    %2981 = vmatprep.subr.mxu0 0.0
    %2982 = vmatpush1.xpose.msra.mxu0 0.0
    %2983 = vmatprep.subr.mxu0 0.0
    %2984 = vmatpush1.xpose.msra.mxu0 0.0
    %2985 = vmatprep.subr.mxu0 0.0
    %2986 = vmatpush1.xpose.msra.mxu0 0.0
    %2987 = vmatprep.subr.mxu0 0.0
    %2988 = vmatpush1.xpose.msra.mxu0 0.0
    %2989 = vmatprep.subr.mxu0 0.0
    %2990 = vmatpush1.xpose.msra.mxu0 0.0
    %2991 = vmatprep.subr.mxu0 0.0
    %2992 = vmatpush1.xpose.msra.mxu0 0.0
    %2993 = vmatprep.subr.mxu0 0.0
    %2994 = vmatpush1.xpose.msra.mxu0 0.0
    %2995 = vmatprep.subr.mxu0 0.0
    %2996 = vmatpush1.xpose.msra.mxu0 0.0
    %2997 = vmatprep.subr.mxu0 0.0
    %2998 = vmatpush1.xpose.msra.mxu0 0.0
    %2999 = vmatprep.subr.mxu0 0.0
    %3000 = vmatpush1.xpose.msra.mxu0 0.0
    %3001 = vmatprep.subr.mxu0 0.0
    %3002 = vmatpush1.xpose.msra.mxu0 0.0
    %3003 = vmatprep.subr.mxu0 0.0
    %3004 = vmatpush1.xpose.msra.mxu0 0.0
    %3005 = vmatprep.subr.mxu0 0.0
    %3006 = vmatpush1.xpose.msra.mxu0 0.0
    %3007 = vmatprep.subr.mxu0 0.0
    %3008 = vmatpush1.xpose.msra.mxu0 0.0
    %3009 = vmatprep.mubr.f32.mxu0 0.0
    %v3010 = vand.u32 %v2638, 4294901760
    %3011 = vmatmul.mubr.f32.gmra.mrb[0].mxu0 %v3010
    %v3012 = vpop.f32.mrb[0].mxu0
    %v3013 = vadd.f32 %v2939, %v3012
    %v3014 = vpop.f32.mrb[0].mxu0
    %3015 = vdwg.mxu0
    %3016 = vmatprep.subr.mxu0 0.0
    %v3017 = vand.u32 %v2640, 4294901760
    %3018 = vmatpush1.xpose.msra.mxu0 %v3017
    %3019 = vmatprep.subr.mxu0 0.0
    %3020 = vmatpush1.xpose.msra.mxu0 0.0
    %3021 = vmatprep.subr.mxu0 0.0
    %3022 = vmatpush1.xpose.msra.mxu0 0.0
    %3023 = vmatprep.subr.mxu0 0.0
    %3024 = vmatpush1.xpose.msra.mxu0 0.0
    %3025 = vmatprep.subr.mxu0 0.0
    %3026 = vmatpush1.xpose.msra.mxu0 0.0
    %3027 = vmatprep.subr.mxu0 0.0
    %3028 = vmatpush1.xpose.msra.mxu0 0.0
    %3029 = vmatprep.subr.mxu0 0.0
    %3030 = vmatpush1.xpose.msra.mxu0 0.0
    %3031 = vmatprep.subr.mxu0 0.0
    %3032 = vmatpush1.xpose.msra.mxu0 0.0
    %3033 = vmatprep.subr.mxu0 0.0
    %3034 = vmatpush1.xpose.msra.mxu0 0.0
    %3035 = vmatprep.subr.mxu0 0.0
    %3036 = vmatpush1.xpose.msra.mxu0 0.0
    %3037 = vmatprep.subr.mxu0 0.0
    %3038 = vmatpush1.xpose.msra.mxu0 0.0
    %3039 = vmatprep.subr.mxu0 0.0
    %3040 = vmatpush1.xpose.msra.mxu0 0.0
    %3041 = vmatprep.subr.mxu0 0.0
    %3042 = vmatpush1.xpose.msra.mxu0 0.0
    %3043 = vmatprep.subr.mxu0 0.0
    %3044 = vmatpush1.xpose.msra.mxu0 0.0
    %3045 = vmatprep.subr.mxu0 0.0
    %3046 = vmatpush1.xpose.msra.mxu0 0.0
    %3047 = vmatprep.subr.mxu0 0.0
    %3048 = vmatpush1.xpose.msra.mxu0 0.0
    %3049 = vmatprep.subr.mxu0 0.0
    %3050 = vmatpush1.xpose.msra.mxu0 0.0
    %3051 = vmatprep.subr.mxu0 0.0
    %3052 = vmatpush1.xpose.msra.mxu0 0.0
    %3053 = vmatprep.subr.mxu0 0.0
    %3054 = vmatpush1.xpose.msra.mxu0 0.0
    %3055 = vmatprep.subr.mxu0 0.0
    %3056 = vmatpush1.xpose.msra.mxu0 0.0
    %3057 = vmatprep.subr.mxu0 0.0
    %3058 = vmatpush1.xpose.msra.mxu0 0.0
    %3059 = vmatprep.subr.mxu0 0.0
    %3060 = vmatpush1.xpose.msra.mxu0 0.0
    %3061 = vmatprep.subr.mxu0 0.0
    %3062 = vmatpush1.xpose.msra.mxu0 0.0
    %3063 = vmatprep.subr.mxu0 0.0
    %3064 = vmatpush1.xpose.msra.mxu0 0.0
    %3065 = vmatprep.subr.mxu0 0.0
    %3066 = vmatpush1.xpose.msra.mxu0 0.0
    %3067 = vmatprep.subr.mxu0 0.0
    %3068 = vmatpush1.xpose.msra.mxu0 0.0
    %3069 = vmatprep.subr.mxu0 0.0
    %3070 = vmatpush1.xpose.msra.mxu0 0.0
    %3071 = vmatprep.subr.mxu0 0.0
    %3072 = vmatpush1.xpose.msra.mxu0 0.0
    %3073 = vmatprep.subr.mxu0 0.0
    %3074 = vmatpush1.xpose.msra.mxu0 0.0
    %3075 = vmatprep.subr.mxu0 0.0
    %3076 = vmatpush1.xpose.msra.mxu0 0.0
    %3077 = vmatprep.subr.mxu0 0.0
    %3078 = vmatpush1.xpose.msra.mxu0 0.0
    %3079 = vmatprep.subr.mxu0 0.0
    %3080 = vmatpush1.xpose.msra.mxu0 0.0
    %3081 = vmatprep.mubr.f32.mxu0 0.0
    %v3082 = vand.u32 %v2638, 4294901760
    %3083 = vmatmul.mubr.f32.gmra.mrb[0].mxu0 %v3082
    %v3084 = vpop.f32.mrb[0].mxu0
    %v3085 = vadd.f32 %v3013, %v3084
    %v3086 = vpop.f32.mrb[0].mxu0
    %3087 = vdwg.mxu0
    %v3088 = vsel %vm1737, %v1722, 0
    %v3090 = vsel %vm1737, %v1728, 0
    %3092 = vmatprep.subr.mxu0 0.0
    %v3093 = vand.u32 %v3090, 4294901760
    %3094 = vmatpush1.xpose.msra.mxu0 %v3093
    %3095 = vmatprep.subr.mxu0 0.0
    %3096 = vmatpush1.xpose.msra.mxu0 0.0
    %3097 = vmatprep.subr.mxu0 0.0
    %3098 = vmatpush1.xpose.msra.mxu0 0.0
    %3099 = vmatprep.subr.mxu0 0.0
    %3100 = vmatpush1.xpose.msra.mxu0 0.0
    %3101 = vmatprep.subr.mxu0 0.0
    %3102 = vmatpush1.xpose.msra.mxu0 0.0
    %3103 = vmatprep.subr.mxu0 0.0
    %3104 = vmatpush1.xpose.msra.mxu0 0.0
    %3105 = vmatprep.subr.mxu0 0.0
    %3106 = vmatpush1.xpose.msra.mxu0 0.0
    %3107 = vmatprep.subr.mxu0 0.0
    %3108 = vmatpush1.xpose.msra.mxu0 0.0
    %3109 = vmatprep.subr.mxu0 0.0
    %3110 = vmatpush1.xpose.msra.mxu0 0.0
    %3111 = vmatprep.subr.mxu0 0.0
    %3112 = vmatpush1.xpose.msra.mxu0 0.0
    %3113 = vmatprep.subr.mxu0 0.0
    %3114 = vmatpush1.xpose.msra.mxu0 0.0
    %3115 = vmatprep.subr.mxu0 0.0
    %3116 = vmatpush1.xpose.msra.mxu0 0.0
    %3117 = vmatprep.subr.mxu0 0.0
    %3118 = vmatpush1.xpose.msra.mxu0 0.0
    %3119 = vmatprep.subr.mxu0 0.0
    %3120 = vmatpush1.xpose.msra.mxu0 0.0
    %3121 = vmatprep.subr.mxu0 0.0
    %3122 = vmatpush1.xpose.msra.mxu0 0.0
    %3123 = vmatprep.subr.mxu0 0.0
    %3124 = vmatpush1.xpose.msra.mxu0 0.0
    %3125 = vmatprep.subr.mxu0 0.0
    %3126 = vmatpush1.xpose.msra.mxu0 0.0
    %3127 = vmatprep.subr.mxu0 0.0
    %3128 = vmatpush1.xpose.msra.mxu0 0.0
    %3129 = vmatprep.subr.mxu0 0.0
    %3130 = vmatpush1.xpose.msra.mxu0 0.0
    %3131 = vmatprep.subr.mxu0 0.0
    %3132 = vmatpush1.xpose.msra.mxu0 0.0
    %3133 = vmatprep.subr.mxu0 0.0
    %3134 = vmatpush1.xpose.msra.mxu0 0.0
    %3135 = vmatprep.subr.mxu0 0.0
    %3136 = vmatpush1.xpose.msra.mxu0 0.0
    %3137 = vmatprep.subr.mxu0 0.0
    %3138 = vmatpush1.xpose.msra.mxu0 0.0
    %3139 = vmatprep.subr.mxu0 0.0
    %3140 = vmatpush1.xpose.msra.mxu0 0.0
    %3141 = vmatprep.subr.mxu0 0.0
    %3142 = vmatpush1.xpose.msra.mxu0 0.0
    %3143 = vmatprep.subr.mxu0 0.0
    %3144 = vmatpush1.xpose.msra.mxu0 0.0
    %3145 = vmatprep.subr.mxu0 0.0
    %3146 = vmatpush1.xpose.msra.mxu0 0.0
    %3147 = vmatprep.subr.mxu0 0.0
    %3148 = vmatpush1.xpose.msra.mxu0 0.0
    %3149 = vmatprep.subr.mxu0 0.0
    %3150 = vmatpush1.xpose.msra.mxu0 0.0
    %3151 = vmatprep.subr.mxu0 0.0
    %3152 = vmatpush1.xpose.msra.mxu0 0.0
    %3153 = vmatprep.subr.mxu0 0.0
    %3154 = vmatpush1.xpose.msra.mxu0 0.0
    %3155 = vmatprep.subr.mxu0 0.0
    %3156 = vmatpush1.xpose.msra.mxu0 0.0
    %3157 = vmatprep.mubr.f32.mxu0 0.0
    %v3158 = vand.u32 %v3088, 4294901760
    %v3159 = vsub.f32 %v3088, %v3158
    %v3160 = vand.u32 %v3159, 4294901760
    %v3161 = vsub.f32 %v3159, %v3160
    %v3162 = vand.u32 %v3161, 4294901760
    %3163 = vmatmul.mubr.f32.gmra.mrb[0].mxu0 %v3162
    %v3164 = vpop.f32.mrb[0].mxu0
    %v3165 = vadd.f32 0.0, %v3164
    %v3166 = vpop.f32.mrb[0].mxu0
    %3167 = vdwg.mxu0
    %3168 = vmatprep.subr.mxu0 0.0
    %v3169 = vand.u32 %v3090, 4294901760
    %v3170 = vsub.f32 %v3090, %v3169
    %v3171 = vand.u32 %v3170, 4294901760
    %v3172 = vsub.f32 %v3170, %v3171
    %v3173 = vand.u32 %v3172, 4294901760
    %3174 = vmatpush1.xpose.msra.mxu0 %v3173
    %3175 = vmatprep.subr.mxu0 0.0
    %3176 = vmatpush1.xpose.msra.mxu0 0.0
    %3177 = vmatprep.subr.mxu0 0.0
    %3178 = vmatpush1.xpose.msra.mxu0 0.0
    %3179 = vmatprep.subr.mxu0 0.0
    %3180 = vmatpush1.xpose.msra.mxu0 0.0
    %3181 = vmatprep.subr.mxu0 0.0
    %3182 = vmatpush1.xpose.msra.mxu0 0.0
    %3183 = vmatprep.subr.mxu0 0.0
    %3184 = vmatpush1.xpose.msra.mxu0 0.0
    %3185 = vmatprep.subr.mxu0 0.0
    %3186 = vmatpush1.xpose.msra.mxu0 0.0
    %3187 = vmatprep.subr.mxu0 0.0
    %3188 = vmatpush1.xpose.msra.mxu0 0.0
    %3189 = vmatprep.subr.mxu0 0.0
    %3190 = vmatpush1.xpose.msra.mxu0 0.0
    %3191 = vmatprep.subr.mxu0 0.0
    %3192 = vmatpush1.xpose.msra.mxu0 0.0
    %3193 = vmatprep.subr.mxu0 0.0
    %3194 = vmatpush1.xpose.msra.mxu0 0.0
    %3195 = vmatprep.subr.mxu0 0.0
    %3196 = vmatpush1.xpose.msra.mxu0 0.0
    %3197 = vmatprep.subr.mxu0 0.0
    %3198 = vmatpush1.xpose.msra.mxu0 0.0
    %3199 = vmatprep.subr.mxu0 0.0
    %3200 = vmatpush1.xpose.msra.mxu0 0.0
    %3201 = vmatprep.subr.mxu0 0.0
    %3202 = vmatpush1.xpose.msra.mxu0 0.0
    %3203 = vmatprep.subr.mxu0 0.0
    %3204 = vmatpush1.xpose.msra.mxu0 0.0
    %3205 = vmatprep.subr.mxu0 0.0
    %3206 = vmatpush1.xpose.msra.mxu0 0.0
    %3207 = vmatprep.subr.mxu0 0.0
    %3208 = vmatpush1.xpose.msra.mxu0 0.0
    %3209 = vmatprep.subr.mxu0 0.0
    %3210 = vmatpush1.xpose.msra.mxu0 0.0
    %3211 = vmatprep.subr.mxu0 0.0
    %3212 = vmatpush1.xpose.msra.mxu0 0.0
    %3213 = vmatprep.subr.mxu0 0.0
    %3214 = vmatpush1.xpose.msra.mxu0 0.0
    %3215 = vmatprep.subr.mxu0 0.0
    %3216 = vmatpush1.xpose.msra.mxu0 0.0
    %3217 = vmatprep.subr.mxu0 0.0
    %3218 = vmatpush1.xpose.msra.mxu0 0.0
    %3219 = vmatprep.subr.mxu0 0.0
    %3220 = vmatpush1.xpose.msra.mxu0 0.0
    %3221 = vmatprep.subr.mxu0 0.0
    %3222 = vmatpush1.xpose.msra.mxu0 0.0
    %3223 = vmatprep.subr.mxu0 0.0
    %3224 = vmatpush1.xpose.msra.mxu0 0.0
    %3225 = vmatprep.subr.mxu0 0.0
    %3226 = vmatpush1.xpose.msra.mxu0 0.0
    %3227 = vmatprep.subr.mxu0 0.0
    %3228 = vmatpush1.xpose.msra.mxu0 0.0
    %3229 = vmatprep.subr.mxu0 0.0
    %3230 = vmatpush1.xpose.msra.mxu0 0.0
    %3231 = vmatprep.subr.mxu0 0.0
    %3232 = vmatpush1.xpose.msra.mxu0 0.0
    %3233 = vmatprep.subr.mxu0 0.0
    %3234 = vmatpush1.xpose.msra.mxu0 0.0
    %3235 = vmatprep.subr.mxu0 0.0
    %3236 = vmatpush1.xpose.msra.mxu0 0.0
    %3237 = vmatprep.mubr.f32.mxu0 0.0
    %v3238 = vand.u32 %v3088, 4294901760
    %3239 = vmatmul.mubr.f32.gmra.mrb[0].mxu0 %v3238
    %v3240 = vpop.f32.mrb[0].mxu0
    %v3241 = vadd.f32 %v3165, %v3240
    %v3242 = vpop.f32.mrb[0].mxu0
    %3243 = vdwg.mxu0
    %3244 = vmatprep.subr.mxu0 0.0
    %v3245 = vand.u32 %v3090, 4294901760
    %v3246 = vsub.f32 %v3090, %v3245
    %3247 = vmatpush1.xpose.msra.mxu0 %v3246
    %3248 = vmatprep.subr.mxu0 0.0
    %3249 = vmatpush1.xpose.msra.mxu0 0.0
    %3250 = vmatprep.subr.mxu0 0.0
    %3251 = vmatpush1.xpose.msra.mxu0 0.0
    %3252 = vmatprep.subr.mxu0 0.0
    %3253 = vmatpush1.xpose.msra.mxu0 0.0
    %3254 = vmatprep.subr.mxu0 0.0
    %3255 = vmatpush1.xpose.msra.mxu0 0.0
    %3256 = vmatprep.subr.mxu0 0.0
    %3257 = vmatpush1.xpose.msra.mxu0 0.0
    %3258 = vmatprep.subr.mxu0 0.0
    %3259 = vmatpush1.xpose.msra.mxu0 0.0
    %3260 = vmatprep.subr.mxu0 0.0
    %3261 = vmatpush1.xpose.msra.mxu0 0.0
    %3262 = vmatprep.subr.mxu0 0.0
    %3263 = vmatpush1.xpose.msra.mxu0 0.0
    %3264 = vmatprep.subr.mxu0 0.0
    %3265 = vmatpush1.xpose.msra.mxu0 0.0
    %3266 = vmatprep.subr.mxu0 0.0
    %3267 = vmatpush1.xpose.msra.mxu0 0.0
    %3268 = vmatprep.subr.mxu0 0.0
    %3269 = vmatpush1.xpose.msra.mxu0 0.0
    %3270 = vmatprep.subr.mxu0 0.0
    %3271 = vmatpush1.xpose.msra.mxu0 0.0
    %3272 = vmatprep.subr.mxu0 0.0
    %3273 = vmatpush1.xpose.msra.mxu0 0.0
    %3274 = vmatprep.subr.mxu0 0.0
    %3275 = vmatpush1.xpose.msra.mxu0 0.0
    %3276 = vmatprep.subr.mxu0 0.0
    %3277 = vmatpush1.xpose.msra.mxu0 0.0
    %3278 = vmatprep.subr.mxu0 0.0
    %3279 = vmatpush1.xpose.msra.mxu0 0.0
    %3280 = vmatprep.subr.mxu0 0.0
    %3281 = vmatpush1.xpose.msra.mxu0 0.0
    %3282 = vmatprep.subr.mxu0 0.0
    %3283 = vmatpush1.xpose.msra.mxu0 0.0
    %3284 = vmatprep.subr.mxu0 0.0
    %3285 = vmatpush1.xpose.msra.mxu0 0.0
    %3286 = vmatprep.subr.mxu0 0.0
    %3287 = vmatpush1.xpose.msra.mxu0 0.0
    %3288 = vmatprep.subr.mxu0 0.0
    %3289 = vmatpush1.xpose.msra.mxu0 0.0
    %3290 = vmatprep.subr.mxu0 0.0
    %3291 = vmatpush1.xpose.msra.mxu0 0.0
    %3292 = vmatprep.subr.mxu0 0.0
    %3293 = vmatpush1.xpose.msra.mxu0 0.0
    %3294 = vmatprep.subr.mxu0 0.0
    %3295 = vmatpush1.xpose.msra.mxu0 0.0
    %3296 = vmatprep.subr.mxu0 0.0
    %3297 = vmatpush1.xpose.msra.mxu0 0.0
    %3298 = vmatprep.subr.mxu0 0.0
    %3299 = vmatpush1.xpose.msra.mxu0 0.0
    %3300 = vmatprep.subr.mxu0 0.0
    %3301 = vmatpush1.xpose.msra.mxu0 0.0
    %3302 = vmatprep.subr.mxu0 0.0
    %3303 = vmatpush1.xpose.msra.mxu0 0.0
    %3304 = vmatprep.subr.mxu0 0.0
    %3305 = vmatpush1.xpose.msra.mxu0 0.0
    %3306 = vmatprep.subr.mxu0 0.0
    %3307 = vmatpush1.xpose.msra.mxu0 0.0
    %3308 = vmatprep.subr.mxu0 0.0
    %3309 = vmatpush1.xpose.msra.mxu0 0.0
    %3310 = vmatprep.mubr.f32.mxu0 0.0
    %v3311 = vand.u32 %v3088, 4294901760
    %v3312 = vsub.f32 %v3088, %v3311
    %3313 = vmatmul.mubr.f32.gmra.mrb[0].mxu0 %v3312
    %v3314 = vpop.f32.mrb[0].mxu0
    %v3315 = vadd.f32 %v3241, %v3314
    %v3316 = vpop.f32.mrb[0].mxu0
    %3317 = vdwg.mxu0
    %3318 = vmatprep.subr.mxu0 0.0
    %v3319 = vand.u32 %v3090, 4294901760
    %3320 = vmatpush1.xpose.msra.mxu0 %v3319
    %3321 = vmatprep.subr.mxu0 0.0
    %3322 = vmatpush1.xpose.msra.mxu0 0.0
    %3323 = vmatprep.subr.mxu0 0.0
    %3324 = vmatpush1.xpose.msra.mxu0 0.0
    %3325 = vmatprep.subr.mxu0 0.0
    %3326 = vmatpush1.xpose.msra.mxu0 0.0
    %3327 = vmatprep.subr.mxu0 0.0
    %3328 = vmatpush1.xpose.msra.mxu0 0.0
    %3329 = vmatprep.subr.mxu0 0.0
    %3330 = vmatpush1.xpose.msra.mxu0 0.0
    %3331 = vmatprep.subr.mxu0 0.0
    %3332 = vmatpush1.xpose.msra.mxu0 0.0
    %3333 = vmatprep.subr.mxu0 0.0
    %3334 = vmatpush1.xpose.msra.mxu0 0.0
    %3335 = vmatprep.subr.mxu0 0.0
    %3336 = vmatpush1.xpose.msra.mxu0 0.0
    %3337 = vmatprep.subr.mxu0 0.0
    %3338 = vmatpush1.xpose.msra.mxu0 0.0
    %3339 = vmatprep.subr.mxu0 0.0
    %3340 = vmatpush1.xpose.msra.mxu0 0.0
    %3341 = vmatprep.subr.mxu0 0.0
    %3342 = vmatpush1.xpose.msra.mxu0 0.0
    %3343 = vmatprep.subr.mxu0 0.0
    %3344 = vmatpush1.xpose.msra.mxu0 0.0
    %3345 = vmatprep.subr.mxu0 0.0
    %3346 = vmatpush1.xpose.msra.mxu0 0.0
    %3347 = vmatprep.subr.mxu0 0.0
    %3348 = vmatpush1.xpose.msra.mxu0 0.0
    %3349 = vmatprep.subr.mxu0 0.0
    %3350 = vmatpush1.xpose.msra.mxu0 0.0
    %3351 = vmatprep.subr.mxu0 0.0
    %3352 = vmatpush1.xpose.msra.mxu0 0.0
    %3353 = vmatprep.subr.mxu0 0.0
    %3354 = vmatpush1.xpose.msra.mxu0 0.0
    %3355 = vmatprep.subr.mxu0 0.0
    %3356 = vmatpush1.xpose.msra.mxu0 0.0
    %3357 = vmatprep.subr.mxu0 0.0
    %3358 = vmatpush1.xpose.msra.mxu0 0.0
    %3359 = vmatprep.subr.mxu0 0.0
    %3360 = vmatpush1.xpose.msra.mxu0 0.0
    %3361 = vmatprep.subr.mxu0 0.0
    %3362 = vmatpush1.xpose.msra.mxu0 0.0
    %3363 = vmatprep.subr.mxu0 0.0
    %3364 = vmatpush1.xpose.msra.mxu0 0.0
    %3365 = vmatprep.subr.mxu0 0.0
    %3366 = vmatpush1.xpose.msra.mxu0 0.0
    %3367 = vmatprep.subr.mxu0 0.0
    %3368 = vmatpush1.xpose.msra.mxu0 0.0
    %3369 = vmatprep.subr.mxu0 0.0
    %3370 = vmatpush1.xpose.msra.mxu0 0.0
    %3371 = vmatprep.subr.mxu0 0.0
    %3372 = vmatpush1.xpose.msra.mxu0 0.0
    %3373 = vmatprep.subr.mxu0 0.0
    %3374 = vmatpush1.xpose.msra.mxu0 0.0
    %3375 = vmatprep.subr.mxu0 0.0
    %3376 = vmatpush1.xpose.msra.mxu0 0.0
    %3377 = vmatprep.subr.mxu0 0.0
    %3378 = vmatpush1.xpose.msra.mxu0 0.0
    %3379 = vmatprep.subr.mxu0 0.0
    %3380 = vmatpush1.xpose.msra.mxu0 0.0
    %3381 = vmatprep.subr.mxu0 0.0
    %3382 = vmatpush1.xpose.msra.mxu0 0.0
    %3383 = vmatprep.mubr.f32.mxu0 0.0
    %v3384 = vand.u32 %v3088, 4294901760
    %v3385 = vsub.f32 %v3088, %v3384
    %v3386 = vand.u32 %v3385, 4294901760
    %3387 = vmatmul.mubr.f32.gmra.mrb[0].mxu0 %v3386
    %v3388 = vpop.f32.mrb[0].mxu0
    %v3389 = vadd.f32 %v3315, %v3388
    %v3390 = vpop.f32.mrb[0].mxu0
    %3391 = vdwg.mxu0
    %3392 = vmatprep.subr.mxu0 0.0
    %v3393 = vand.u32 %v3090, 4294901760
    %v3394 = vsub.f32 %v3090, %v3393
    %v3395 = vand.u32 %v3394, 4294901760
    %3396 = vmatpush1.xpose.msra.mxu0 %v3395
    %3397 = vmatprep.subr.mxu0 0.0
    %3398 = vmatpush1.xpose.msra.mxu0 0.0
    %3399 = vmatprep.subr.mxu0 0.0
    %3400 = vmatpush1.xpose.msra.mxu0 0.0
    %3401 = vmatprep.subr.mxu0 0.0
    %3402 = vmatpush1.xpose.msra.mxu0 0.0
    %3403 = vmatprep.subr.mxu0 0.0
    %3404 = vmatpush1.xpose.msra.mxu0 0.0
    %3405 = vmatprep.subr.mxu0 0.0
    %3406 = vmatpush1.xpose.msra.mxu0 0.0
    %3407 = vmatprep.subr.mxu0 0.0
    %3408 = vmatpush1.xpose.msra.mxu0 0.0
    %3409 = vmatprep.subr.mxu0 0.0
    %3410 = vmatpush1.xpose.msra.mxu0 0.0
    %3411 = vmatprep.subr.mxu0 0.0
    %3412 = vmatpush1.xpose.msra.mxu0 0.0
    %3413 = vmatprep.subr.mxu0 0.0
    %3414 = vmatpush1.xpose.msra.mxu0 0.0
    %3415 = vmatprep.subr.mxu0 0.0
    %3416 = vmatpush1.xpose.msra.mxu0 0.0
    %3417 = vmatprep.subr.mxu0 0.0
    %3418 = vmatpush1.xpose.msra.mxu0 0.0
    %3419 = vmatprep.subr.mxu0 0.0
    %3420 = vmatpush1.xpose.msra.mxu0 0.0
    %3421 = vmatprep.subr.mxu0 0.0
    %3422 = vmatpush1.xpose.msra.mxu0 0.0
    %3423 = vmatprep.subr.mxu0 0.0
    %3424 = vmatpush1.xpose.msra.mxu0 0.0
    %3425 = vmatprep.subr.mxu0 0.0
    %3426 = vmatpush1.xpose.msra.mxu0 0.0
    %3427 = vmatprep.subr.mxu0 0.0
    %3428 = vmatpush1.xpose.msra.mxu0 0.0
    %3429 = vmatprep.subr.mxu0 0.0
    %3430 = vmatpush1.xpose.msra.mxu0 0.0
    %3431 = vmatprep.subr.mxu0 0.0
    %3432 = vmatpush1.xpose.msra.mxu0 0.0
    %3433 = vmatprep.subr.mxu0 0.0
    %3434 = vmatpush1.xpose.msra.mxu0 0.0
    %3435 = vmatprep.subr.mxu0 0.0
    %3436 = vmatpush1.xpose.msra.mxu0 0.0
    %3437 = vmatprep.subr.mxu0 0.0
    %3438 = vmatpush1.xpose.msra.mxu0 0.0
    %3439 = vmatprep.subr.mxu0 0.0
    %3440 = vmatpush1.xpose.msra.mxu0 0.0
    %3441 = vmatprep.subr.mxu0 0.0
    %3442 = vmatpush1.xpose.msra.mxu0 0.0
    %3443 = vmatprep.subr.mxu0 0.0
    %3444 = vmatpush1.xpose.msra.mxu0 0.0
    %3445 = vmatprep.subr.mxu0 0.0
    %3446 = vmatpush1.xpose.msra.mxu0 0.0
    %3447 = vmatprep.subr.mxu0 0.0
    %3448 = vmatpush1.xpose.msra.mxu0 0.0
    %3449 = vmatprep.subr.mxu0 0.0
    %3450 = vmatpush1.xpose.msra.mxu0 0.0
    %3451 = vmatprep.subr.mxu0 0.0
    %3452 = vmatpush1.xpose.msra.mxu0 0.0
    %3453 = vmatprep.subr.mxu0 0.0
    %3454 = vmatpush1.xpose.msra.mxu0 0.0
    %3455 = vmatprep.subr.mxu0 0.0
    %3456 = vmatpush1.xpose.msra.mxu0 0.0
    %3457 = vmatprep.subr.mxu0 0.0
    %3458 = vmatpush1.xpose.msra.mxu0 0.0
    %3459 = vmatprep.mubr.f32.mxu0 0.0
    %v3460 = vand.u32 %v3088, 4294901760
    %3461 = vmatmul.mubr.f32.gmra.mrb[0].mxu0 %v3460
    %v3462 = vpop.f32.mrb[0].mxu0
    %v3463 = vadd.f32 %v3389, %v3462
    %v3464 = vpop.f32.mrb[0].mxu0
    %3465 = vdwg.mxu0
    %3466 = vmatprep.subr.mxu0 0.0
    %v3467 = vand.u32 %v3090, 4294901760
    %3468 = vmatpush1.xpose.msra.mxu0 %v3467
    %3469 = vmatprep.subr.mxu0 0.0
    %3470 = vmatpush1.xpose.msra.mxu0 0.0
    %3471 = vmatprep.subr.mxu0 0.0
    %3472 = vmatpush1.xpose.msra.mxu0 0.0
    %3473 = vmatprep.subr.mxu0 0.0
    %3474 = vmatpush1.xpose.msra.mxu0 0.0
    %3475 = vmatprep.subr.mxu0 0.0
    %3476 = vmatpush1.xpose.msra.mxu0 0.0
    %3477 = vmatprep.subr.mxu0 0.0
    %3478 = vmatpush1.xpose.msra.mxu0 0.0
    %3479 = vmatprep.subr.mxu0 0.0
    %3480 = vmatpush1.xpose.msra.mxu0 0.0
    %3481 = vmatprep.subr.mxu0 0.0
    %3482 = vmatpush1.xpose.msra.mxu0 0.0
    %3483 = vmatprep.subr.mxu0 0.0
    %3484 = vmatpush1.xpose.msra.mxu0 0.0
    %3485 = vmatprep.subr.mxu0 0.0
    %3486 = vmatpush1.xpose.msra.mxu0 0.0
    %3487 = vmatprep.subr.mxu0 0.0
    %3488 = vmatpush1.xpose.msra.mxu0 0.0
    %3489 = vmatprep.subr.mxu0 0.0
    %3490 = vmatpush1.xpose.msra.mxu0 0.0
    %3491 = vmatprep.subr.mxu0 0.0
    %3492 = vmatpush1.xpose.msra.mxu0 0.0
    %3493 = vmatprep.subr.mxu0 0.0
    %3494 = vmatpush1.xpose.msra.mxu0 0.0
    %3495 = vmatprep.subr.mxu0 0.0
    %3496 = vmatpush1.xpose.msra.mxu0 0.0
    %3497 = vmatprep.subr.mxu0 0.0
    %3498 = vmatpush1.xpose.msra.mxu0 0.0
    %3499 = vmatprep.subr.mxu0 0.0
    %3500 = vmatpush1.xpose.msra.mxu0 0.0
    %3501 = vmatprep.subr.mxu0 0.0
    %3502 = vmatpush1.xpose.msra.mxu0 0.0
    %3503 = vmatprep.subr.mxu0 0.0
    %3504 = vmatpush1.xpose.msra.mxu0 0.0
    %3505 = vmatprep.subr.mxu0 0.0
    %3506 = vmatpush1.xpose.msra.mxu0 0.0
    %3507 = vmatprep.subr.mxu0 0.0
    %3508 = vmatpush1.xpose.msra.mxu0 0.0
    %3509 = vmatprep.subr.mxu0 0.0
    %3510 = vmatpush1.xpose.msra.mxu0 0.0
    %3511 = vmatprep.subr.mxu0 0.0
    %3512 = vmatpush1.xpose.msra.mxu0 0.0
    %3513 = vmatprep.subr.mxu0 0.0
    %3514 = vmatpush1.xpose.msra.mxu0 0.0
    %3515 = vmatprep.subr.mxu0 0.0
    %3516 = vmatpush1.xpose.msra.mxu0 0.0
    %3517 = vmatprep.subr.mxu0 0.0
    %3518 = vmatpush1.xpose.msra.mxu0 0.0
    %3519 = vmatprep.subr.mxu0 0.0
    %3520 = vmatpush1.xpose.msra.mxu0 0.0
    %3521 = vmatprep.subr.mxu0 0.0
    %3522 = vmatpush1.xpose.msra.mxu0 0.0
    %3523 = vmatprep.subr.mxu0 0.0
    %3524 = vmatpush1.xpose.msra.mxu0 0.0
    %3525 = vmatprep.subr.mxu0 0.0
    %3526 = vmatpush1.xpose.msra.mxu0 0.0
    %3527 = vmatprep.subr.mxu0 0.0
    %3528 = vmatpush1.xpose.msra.mxu0 0.0
    %3529 = vmatprep.subr.mxu0 0.0
    %3530 = vmatpush1.xpose.msra.mxu0 0.0
    %3531 = vmatprep.mubr.f32.mxu0 0.0
    %v3532 = vand.u32 %v3088, 4294901760
    %3533 = vmatmul.mubr.f32.gmra.mrb[0].mxu0 %v3532
    %v3534 = vpop.f32.mrb[0].mxu0
    %v3535 = vadd.f32 %v3463, %v3534
    %v3536 = vpop.f32.mrb[0].mxu0
    %3537 = vdwg.mxu0
    %vm3538 = vcmask 64512
    %v3539 = vsel %vm3538, %v2185, -inf
    %3540 = vmax.xlane.f32.xlu0 %v3539
    %v3541 = vpop.xlane.xlu0 %3540
    %v3542 = vsel %vm3538, %v2635, -inf
    %3543 = vmax.xlane.f32.xlu0 %v3542
    %v3544 = vpop.xlane.xlu0 %3543
    %v3545 = vsel %vm3538, %v3085, -inf
    %3546 = vmax.xlane.f32.xlu0 %v3545
    %v3547 = vpop.xlane.xlu0 %3546
    %v3548 = vsel %vm3538, %v3535, -inf
    %3549 = vmax.xlane.f32.xlu0 %v3548
    %v3550 = vpop.xlane.xlu0 %3549
    %v3551 = vsub.f32 %v2185, %v3541
    %v3552 = vsub.f32 %v2635, %v3544
    %v3553 = vsub.f32 %v3085, %v3547
    %v3554 = vsub.f32 %v3535, %v3550
    %v3555 = vmul.f32 %v3551, 1.442695
    %v3556 = vpow.pop %v3555
    %v3557 = vmul.f32 %v3552, 1.442695
    %v3558 = vpow.pop %v3557
    %v3559 = vmul.f32 %v3553, 1.442695
    %v3560 = vpow.pop %v3559
    %v3561 = vmul.f32 %v3554, 1.442695
    %v3562 = vpow.pop %v3561
    %v3563 = vsel %vm3538, %v3556, 0.0
    %3564 = vadd.xlane.f32.xlu0 %v3563
    %v3565 = vpop.xlane.xlu0 %3564
    %v3566 = vsel %vm3538, %v3558, 0.0
    %3567 = vadd.xlane.f32.xlu0 %v3566
    %v3568 = vpop.xlane.xlu0 %3567
    %v3569 = vsel %vm3538, %v3560, 0.0
    %3570 = vadd.xlane.f32.xlu0 %v3569
    %v3571 = vpop.xlane.xlu0 %3570
    %v3572 = vsel %vm3538, %v3562, 0.0
    %3573 = vadd.xlane.f32.xlu0 %v3572
    %v3574 = vpop.xlane.xlu0 %3573
    %v3575 = vrcp.pop %v3565
    %v3576 = vmul.f32 %v3556, %v3575
    %v3577 = vrcp.pop %v3568
    %v3578 = vmul.f32 %v3558, %v3577
    %v3579 = vrcp.pop %v3571
    %v3580 = vmul.f32 %v3560, %v3579
    %v3581 = vrcp.pop %v3574
    %v3582 = vmul.f32 %v3562, %v3581
    %v3584 = vsel %vm3538, %v3576, 0
    %3586 = vmatprep.subr.mxu0 0.0
    %v3587 = vand.u32 %v1708, 4294901760
    %3588 = vmatpush1.msra.mxu0 %v3587
    %3589 = vmatprep.subr.mxu0 0.0
    %3590 = vmatpush1.msra.mxu0 0.0
    %3591 = vmatprep.subr.mxu0 0.0
    %3592 = vmatpush1.msra.mxu0 0.0
    %3593 = vmatprep.subr.mxu0 0.0
    %3594 = vmatpush1.msra.mxu0 0.0
    %3595 = vmatprep.subr.mxu0 0.0
    %3596 = vmatpush1.msra.mxu0 0.0
    %3597 = vmatprep.subr.mxu0 0.0
    %3598 = vmatpush1.msra.mxu0 0.0
    %3599 = vmatprep.subr.mxu0 0.0
    %3600 = vmatpush1.msra.mxu0 0.0
    %3601 = vmatprep.subr.mxu0 0.0
    %3602 = vmatpush1.msra.mxu0 0.0
    %3603 = vmatprep.subr.mxu0 0.0
    %3604 = vmatpush1.msra.mxu0 0.0
    %3605 = vmatprep.subr.mxu0 0.0
    %3606 = vmatpush1.msra.mxu0 0.0
    %3607 = vmatprep.subr.mxu0 0.0
    %3608 = vmatpush1.msra.mxu0 0.0
    %3609 = vmatprep.subr.mxu0 0.0
    %3610 = vmatpush1.msra.mxu0 0.0
    %3611 = vmatprep.subr.mxu0 0.0
    %3612 = vmatpush1.msra.mxu0 0.0
    %3613 = vmatprep.subr.mxu0 0.0
    %3614 = vmatpush1.msra.mxu0 0.0
    %3615 = vmatprep.subr.mxu0 0.0
    %3616 = vmatpush1.msra.mxu0 0.0
    %3617 = vmatprep.subr.mxu0 0.0
    %3618 = vmatpush1.msra.mxu0 0.0
    %3619 = vmatprep.subr.mxu0 0.0
    %3620 = vmatpush1.msra.mxu0 0.0
    %3621 = vmatprep.subr.mxu0 0.0
    %3622 = vmatpush1.msra.mxu0 0.0
    %3623 = vmatprep.subr.mxu0 0.0
    %3624 = vmatpush1.msra.mxu0 0.0
    %3625 = vmatprep.subr.mxu0 0.0
    %3626 = vmatpush1.msra.mxu0 0.0
    %3627 = vmatprep.subr.mxu0 0.0
    %3628 = vmatpush1.msra.mxu0 0.0
    %3629 = vmatprep.subr.mxu0 0.0
    %3630 = vmatpush1.msra.mxu0 0.0
    %3631 = vmatprep.subr.mxu0 0.0
    %3632 = vmatpush1.msra.mxu0 0.0
    %3633 = vmatprep.subr.mxu0 0.0
    %3634 = vmatpush1.msra.mxu0 0.0
    %3635 = vmatprep.subr.mxu0 0.0
    %3636 = vmatpush1.msra.mxu0 0.0
    %3637 = vmatprep.subr.mxu0 0.0
    %3638 = vmatpush1.msra.mxu0 0.0
    %3639 = vmatprep.subr.mxu0 0.0
    %3640 = vmatpush1.msra.mxu0 0.0
    %3641 = vmatprep.subr.mxu0 0.0
    %3642 = vmatpush1.msra.mxu0 0.0
    %3643 = vmatprep.subr.mxu0 0.0
    %3644 = vmatpush1.msra.mxu0 0.0
    %3645 = vmatprep.subr.mxu0 0.0
    %3646 = vmatpush1.msra.mxu0 0.0
    %3647 = vmatprep.subr.mxu0 0.0
    %3648 = vmatpush1.msra.mxu0 0.0
    %3649 = vmatprep.subr.mxu0 0.0
    %3650 = vmatpush1.msra.mxu0 0.0
    %3651 = vmatprep.mubr.f32.mxu0 0.0
    %v3652 = vand.u32 %v3584, 4294901760
    %v3653 = vsub.f32 %v3584, %v3652
    %v3654 = vand.u32 %v3653, 4294901760
    %v3655 = vsub.f32 %v3653, %v3654
    %v3656 = vand.u32 %v3655, 4294901760
    %3657 = vmatmul.mubr.f32.gmra.mrb[0].mxu0 %v3656
    %v3658 = vpop.f32.mrb[0].mxu0
    %v3659 = vadd.f32 0.0, %v3658
    %v3660 = vpop.f32.mrb[0].mxu0
    %3661 = vdwg.mxu0
    %3662 = vmatprep.subr.mxu0 0.0
    %v3663 = vand.u32 %v1708, 4294901760
    %v3664 = vsub.f32 %v1708, %v3663
    %v3665 = vand.u32 %v3664, 4294901760
    %v3666 = vsub.f32 %v3664, %v3665
    %v3667 = vand.u32 %v3666, 4294901760
    %3668 = vmatpush1.msra.mxu0 %v3667
    %3669 = vmatprep.subr.mxu0 0.0
    %3670 = vmatpush1.msra.mxu0 0.0
    %3671 = vmatprep.subr.mxu0 0.0
    %3672 = vmatpush1.msra.mxu0 0.0
    %3673 = vmatprep.subr.mxu0 0.0
    %3674 = vmatpush1.msra.mxu0 0.0
    %3675 = vmatprep.subr.mxu0 0.0
    %3676 = vmatpush1.msra.mxu0 0.0
    %3677 = vmatprep.subr.mxu0 0.0
    %3678 = vmatpush1.msra.mxu0 0.0
    %3679 = vmatprep.subr.mxu0 0.0
    %3680 = vmatpush1.msra.mxu0 0.0
    %3681 = vmatprep.subr.mxu0 0.0
    %3682 = vmatpush1.msra.mxu0 0.0
    %3683 = vmatprep.subr.mxu0 0.0
    %3684 = vmatpush1.msra.mxu0 0.0
    %3685 = vmatprep.subr.mxu0 0.0
    %3686 = vmatpush1.msra.mxu0 0.0
    %3687 = vmatprep.subr.mxu0 0.0
    %3688 = vmatpush1.msra.mxu0 0.0
    %3689 = vmatprep.subr.mxu0 0.0
    %3690 = vmatpush1.msra.mxu0 0.0
    %3691 = vmatprep.subr.mxu0 0.0
    %3692 = vmatpush1.msra.mxu0 0.0
    %3693 = vmatprep.subr.mxu0 0.0
    %3694 = vmatpush1.msra.mxu0 0.0
    %3695 = vmatprep.subr.mxu0 0.0
    %3696 = vmatpush1.msra.mxu0 0.0
    %3697 = vmatprep.subr.mxu0 0.0
    %3698 = vmatpush1.msra.mxu0 0.0
    %3699 = vmatprep.subr.mxu0 0.0
    %3700 = vmatpush1.msra.mxu0 0.0
    %3701 = vmatprep.subr.mxu0 0.0
    %3702 = vmatpush1.msra.mxu0 0.0
    %3703 = vmatprep.subr.mxu0 0.0
    %3704 = vmatpush1.msra.mxu0 0.0
    %3705 = vmatprep.subr.mxu0 0.0
    %3706 = vmatpush1.msra.mxu0 0.0
    %3707 = vmatprep.subr.mxu0 0.0
    %3708 = vmatpush1.msra.mxu0 0.0
    %3709 = vmatprep.subr.mxu0 0.0
    %3710 = vmatpush1.msra.mxu0 0.0
    %3711 = vmatprep.subr.mxu0 0.0
    %3712 = vmatpush1.msra.mxu0 0.0
    %3713 = vmatprep.subr.mxu0 0.0
    %3714 = vmatpush1.msra.mxu0 0.0
    %3715 = vmatprep.subr.mxu0 0.0
    %3716 = vmatpush1.msra.mxu0 0.0
    %3717 = vmatprep.subr.mxu0 0.0
    %3718 = vmatpush1.msra.mxu0 0.0
    %3719 = vmatprep.subr.mxu0 0.0
    %3720 = vmatpush1.msra.mxu0 0.0
    %3721 = vmatprep.subr.mxu0 0.0
    %3722 = vmatpush1.msra.mxu0 0.0
    %3723 = vmatprep.subr.mxu0 0.0
    %3724 = vmatpush1.msra.mxu0 0.0
    %3725 = vmatprep.subr.mxu0 0.0
    %3726 = vmatpush1.msra.mxu0 0.0
    %3727 = vmatprep.subr.mxu0 0.0
    %3728 = vmatpush1.msra.mxu0 0.0
    %3729 = vmatprep.subr.mxu0 0.0
    %3730 = vmatpush1.msra.mxu0 0.0
    %3731 = vmatprep.mubr.f32.mxu0 0.0
    %v3732 = vand.u32 %v3584, 4294901760
    %3733 = vmatmul.mubr.f32.gmra.mrb[0].mxu0 %v3732
    %v3734 = vpop.f32.mrb[0].mxu0
    %v3735 = vadd.f32 %v3659, %v3734
    %v3736 = vpop.f32.mrb[0].mxu0
    %3737 = vdwg.mxu0
    %3738 = vmatprep.subr.mxu0 0.0
    %v3739 = vand.u32 %v1708, 4294901760
    %v3740 = vsub.f32 %v1708, %v3739
    %3741 = vmatpush1.msra.mxu0 %v3740
    %3742 = vmatprep.subr.mxu0 0.0
    %3743 = vmatpush1.msra.mxu0 0.0
    %3744 = vmatprep.subr.mxu0 0.0
    %3745 = vmatpush1.msra.mxu0 0.0
    %3746 = vmatprep.subr.mxu0 0.0
    %3747 = vmatpush1.msra.mxu0 0.0
    %3748 = vmatprep.subr.mxu0 0.0
    %3749 = vmatpush1.msra.mxu0 0.0
    %3750 = vmatprep.subr.mxu0 0.0
    %3751 = vmatpush1.msra.mxu0 0.0
    %3752 = vmatprep.subr.mxu0 0.0
    %3753 = vmatpush1.msra.mxu0 0.0
    %3754 = vmatprep.subr.mxu0 0.0
    %3755 = vmatpush1.msra.mxu0 0.0
    %3756 = vmatprep.subr.mxu0 0.0
    %3757 = vmatpush1.msra.mxu0 0.0
    %3758 = vmatprep.subr.mxu0 0.0
    %3759 = vmatpush1.msra.mxu0 0.0
    %3760 = vmatprep.subr.mxu0 0.0
    %3761 = vmatpush1.msra.mxu0 0.0
    %3762 = vmatprep.subr.mxu0 0.0
    %3763 = vmatpush1.msra.mxu0 0.0
    %3764 = vmatprep.subr.mxu0 0.0
    %3765 = vmatpush1.msra.mxu0 0.0
    %3766 = vmatprep.subr.mxu0 0.0
    %3767 = vmatpush1.msra.mxu0 0.0
    %3768 = vmatprep.subr.mxu0 0.0
    %3769 = vmatpush1.msra.mxu0 0.0
    %3770 = vmatprep.subr.mxu0 0.0
    %3771 = vmatpush1.msra.mxu0 0.0
    %3772 = vmatprep.subr.mxu0 0.0
    %3773 = vmatpush1.msra.mxu0 0.0
    %3774 = vmatprep.subr.mxu0 0.0
    %3775 = vmatpush1.msra.mxu0 0.0
    %3776 = vmatprep.subr.mxu0 0.0
    %3777 = vmatpush1.msra.mxu0 0.0
    %3778 = vmatprep.subr.mxu0 0.0
    %3779 = vmatpush1.msra.mxu0 0.0
    %3780 = vmatprep.subr.mxu0 0.0
    %3781 = vmatpush1.msra.mxu0 0.0
    %3782 = vmatprep.subr.mxu0 0.0
    %3783 = vmatpush1.msra.mxu0 0.0
    %3784 = vmatprep.subr.mxu0 0.0
    %3785 = vmatpush1.msra.mxu0 0.0
    %3786 = vmatprep.subr.mxu0 0.0
    %3787 = vmatpush1.msra.mxu0 0.0
    %3788 = vmatprep.subr.mxu0 0.0
    %3789 = vmatpush1.msra.mxu0 0.0
    %3790 = vmatprep.subr.mxu0 0.0
    %3791 = vmatpush1.msra.mxu0 0.0
    %3792 = vmatprep.subr.mxu0 0.0
    %3793 = vmatpush1.msra.mxu0 0.0
    %3794 = vmatprep.subr.mxu0 0.0
    %3795 = vmatpush1.msra.mxu0 0.0
    %3796 = vmatprep.subr.mxu0 0.0
    %3797 = vmatpush1.msra.mxu0 0.0
    %3798 = vmatprep.subr.mxu0 0.0
    %3799 = vmatpush1.msra.mxu0 0.0
    %3800 = vmatprep.subr.mxu0 0.0
    %3801 = vmatpush1.msra.mxu0 0.0
    %3802 = vmatprep.subr.mxu0 0.0
    %3803 = vmatpush1.msra.mxu0 0.0
    %3804 = vmatprep.mubr.f32.mxu0 0.0
    %v3805 = vand.u32 %v3584, 4294901760
    %v3806 = vsub.f32 %v3584, %v3805
    %3807 = vmatmul.mubr.f32.gmra.mrb[0].mxu0 %v3806
    %v3808 = vpop.f32.mrb[0].mxu0
    %v3809 = vadd.f32 %v3735, %v3808
    %v3810 = vpop.f32.mrb[0].mxu0
    %3811 = vdwg.mxu0
    %3812 = vmatprep.subr.mxu0 0.0
    %v3813 = vand.u32 %v1708, 4294901760
    %3814 = vmatpush1.msra.mxu0 %v3813
    %3815 = vmatprep.subr.mxu0 0.0
    %3816 = vmatpush1.msra.mxu0 0.0
    %3817 = vmatprep.subr.mxu0 0.0
    %3818 = vmatpush1.msra.mxu0 0.0
    %3819 = vmatprep.subr.mxu0 0.0
    %3820 = vmatpush1.msra.mxu0 0.0
    %3821 = vmatprep.subr.mxu0 0.0
    %3822 = vmatpush1.msra.mxu0 0.0
    %3823 = vmatprep.subr.mxu0 0.0
    %3824 = vmatpush1.msra.mxu0 0.0
    %3825 = vmatprep.subr.mxu0 0.0
    %3826 = vmatpush1.msra.mxu0 0.0
    %3827 = vmatprep.subr.mxu0 0.0
    %3828 = vmatpush1.msra.mxu0 0.0
    %3829 = vmatprep.subr.mxu0 0.0
    %3830 = vmatpush1.msra.mxu0 0.0
    %3831 = vmatprep.subr.mxu0 0.0
    %3832 = vmatpush1.msra.mxu0 0.0
    %3833 = vmatprep.subr.mxu0 0.0
    %3834 = vmatpush1.msra.mxu0 0.0
    %3835 = vmatprep.subr.mxu0 0.0
    %3836 = vmatpush1.msra.mxu0 0.0
    %3837 = vmatprep.subr.mxu0 0.0
    %3838 = vmatpush1.msra.mxu0 0.0
    %3839 = vmatprep.subr.mxu0 0.0
    %3840 = vmatpush1.msra.mxu0 0.0
    %3841 = vmatprep.subr.mxu0 0.0
    %3842 = vmatpush1.msra.mxu0 0.0
    %3843 = vmatprep.subr.mxu0 0.0
    %3844 = vmatpush1.msra.mxu0 0.0
    %3845 = vmatprep.subr.mxu0 0.0
    %3846 = vmatpush1.msra.mxu0 0.0
    %3847 = vmatprep.subr.mxu0 0.0
    %3848 = vmatpush1.msra.mxu0 0.0
    %3849 = vmatprep.subr.mxu0 0.0
    %3850 = vmatpush1.msra.mxu0 0.0
    %3851 = vmatprep.subr.mxu0 0.0
    %3852 = vmatpush1.msra.mxu0 0.0
    %3853 = vmatprep.subr.mxu0 0.0
    %3854 = vmatpush1.msra.mxu0 0.0
    %3855 = vmatprep.subr.mxu0 0.0
    %3856 = vmatpush1.msra.mxu0 0.0
    %3857 = vmatprep.subr.mxu0 0.0
    %3858 = vmatpush1.msra.mxu0 0.0
    %3859 = vmatprep.subr.mxu0 0.0
    %3860 = vmatpush1.msra.mxu0 0.0
    %3861 = vmatprep.subr.mxu0 0.0
    %3862 = vmatpush1.msra.mxu0 0.0
    %3863 = vmatprep.subr.mxu0 0.0
    %3864 = vmatpush1.msra.mxu0 0.0
    %3865 = vmatprep.subr.mxu0 0.0
    %3866 = vmatpush1.msra.mxu0 0.0
    %3867 = vmatprep.subr.mxu0 0.0
    %3868 = vmatpush1.msra.mxu0 0.0
    %3869 = vmatprep.subr.mxu0 0.0
    %3870 = vmatpush1.msra.mxu0 0.0
    %3871 = vmatprep.subr.mxu0 0.0
    %3872 = vmatpush1.msra.mxu0 0.0
    %3873 = vmatprep.subr.mxu0 0.0
    %3874 = vmatpush1.msra.mxu0 0.0
    %3875 = vmatprep.subr.mxu0 0.0
    %3876 = vmatpush1.msra.mxu0 0.0
    %3877 = vmatprep.mubr.f32.mxu0 0.0
    %v3878 = vand.u32 %v3584, 4294901760
    %v3879 = vsub.f32 %v3584, %v3878
    %v3880 = vand.u32 %v3879, 4294901760
    %3881 = vmatmul.mubr.f32.gmra.mrb[0].mxu0 %v3880
    %v3882 = vpop.f32.mrb[0].mxu0
    %v3883 = vadd.f32 %v3809, %v3882
    %v3884 = vpop.f32.mrb[0].mxu0
    %3885 = vdwg.mxu0
    %3886 = vmatprep.subr.mxu0 0.0
    %v3887 = vand.u32 %v1708, 4294901760
    %v3888 = vsub.f32 %v1708, %v3887
    %v3889 = vand.u32 %v3888, 4294901760
    %3890 = vmatpush1.msra.mxu0 %v3889
    %3891 = vmatprep.subr.mxu0 0.0
    %3892 = vmatpush1.msra.mxu0 0.0
    %3893 = vmatprep.subr.mxu0 0.0
    %3894 = vmatpush1.msra.mxu0 0.0
    %3895 = vmatprep.subr.mxu0 0.0
    %3896 = vmatpush1.msra.mxu0 0.0
    %3897 = vmatprep.subr.mxu0 0.0
    %3898 = vmatpush1.msra.mxu0 0.0
    %3899 = vmatprep.subr.mxu0 0.0
    %3900 = vmatpush1.msra.mxu0 0.0
    %3901 = vmatprep.subr.mxu0 0.0
    %3902 = vmatpush1.msra.mxu0 0.0
    %3903 = vmatprep.subr.mxu0 0.0
    %3904 = vmatpush1.msra.mxu0 0.0
    %3905 = vmatprep.subr.mxu0 0.0
    %3906 = vmatpush1.msra.mxu0 0.0
    %3907 = vmatprep.subr.mxu0 0.0
    %3908 = vmatpush1.msra.mxu0 0.0
    %3909 = vmatprep.subr.mxu0 0.0
    %3910 = vmatpush1.msra.mxu0 0.0
    %3911 = vmatprep.subr.mxu0 0.0
    %3912 = vmatpush1.msra.mxu0 0.0
    %3913 = vmatprep.subr.mxu0 0.0
    %3914 = vmatpush1.msra.mxu0 0.0
    %3915 = vmatprep.subr.mxu0 0.0
    %3916 = vmatpush1.msra.mxu0 0.0
    %3917 = vmatprep.subr.mxu0 0.0
    %3918 = vmatpush1.msra.mxu0 0.0
    %3919 = vmatprep.subr.mxu0 0.0
    %3920 = vmatpush1.msra.mxu0 0.0
    %3921 = vmatprep.subr.mxu0 0.0
    %3922 = vmatpush1.msra.mxu0 0.0
    %3923 = vmatprep.subr.mxu0 0.0
    %3924 = vmatpush1.msra.mxu0 0.0
    %3925 = vmatprep.subr.mxu0 0.0
    %3926 = vmatpush1.msra.mxu0 0.0
    %3927 = vmatprep.subr.mxu0 0.0
    %3928 = vmatpush1.msra.mxu0 0.0
    %3929 = vmatprep.subr.mxu0 0.0
    %3930 = vmatpush1.msra.mxu0 0.0
    %3931 = vmatprep.subr.mxu0 0.0
    %3932 = vmatpush1.msra.mxu0 0.0
    %3933 = vmatprep.subr.mxu0 0.0
    %3934 = vmatpush1.msra.mxu0 0.0
    %3935 = vmatprep.subr.mxu0 0.0
    %3936 = vmatpush1.msra.mxu0 0.0
    %3937 = vmatprep.subr.mxu0 0.0
    %3938 = vmatpush1.msra.mxu0 0.0
    %3939 = vmatprep.subr.mxu0 0.0
    %3940 = vmatpush1.msra.mxu0 0.0
    %3941 = vmatprep.subr.mxu0 0.0
    %3942 = vmatpush1.msra.mxu0 0.0
    %3943 = vmatprep.subr.mxu0 0.0
    %3944 = vmatpush1.msra.mxu0 0.0
    %3945 = vmatprep.subr.mxu0 0.0
    %3946 = vmatpush1.msra.mxu0 0.0
    %3947 = vmatprep.subr.mxu0 0.0
    %3948 = vmatpush1.msra.mxu0 0.0
    %3949 = vmatprep.subr.mxu0 0.0
    %3950 = vmatpush1.msra.mxu0 0.0
    %3951 = vmatprep.subr.mxu0 0.0
    %3952 = vmatpush1.msra.mxu0 0.0
    %3953 = vmatprep.mubr.f32.mxu0 0.0
    %v3954 = vand.u32 %v3584, 4294901760
    %3955 = vmatmul.mubr.f32.gmra.mrb[0].mxu0 %v3954
    %v3956 = vpop.f32.mrb[0].mxu0
    %v3957 = vadd.f32 %v3883, %v3956
    %v3958 = vpop.f32.mrb[0].mxu0
    %3959 = vdwg.mxu0
    %3960 = vmatprep.subr.mxu0 0.0
    %v3961 = vand.u32 %v1708, 4294901760
    %3962 = vmatpush1.msra.mxu0 %v3961
    %3963 = vmatprep.subr.mxu0 0.0
    %3964 = vmatpush1.msra.mxu0 0.0
    %3965 = vmatprep.subr.mxu0 0.0
    %3966 = vmatpush1.msra.mxu0 0.0
    %3967 = vmatprep.subr.mxu0 0.0
    %3968 = vmatpush1.msra.mxu0 0.0
    %3969 = vmatprep.subr.mxu0 0.0
    %3970 = vmatpush1.msra.mxu0 0.0
    %3971 = vmatprep.subr.mxu0 0.0
    %3972 = vmatpush1.msra.mxu0 0.0
    %3973 = vmatprep.subr.mxu0 0.0
    %3974 = vmatpush1.msra.mxu0 0.0
    %3975 = vmatprep.subr.mxu0 0.0
    %3976 = vmatpush1.msra.mxu0 0.0
    %3977 = vmatprep.subr.mxu0 0.0
    %3978 = vmatpush1.msra.mxu0 0.0
    %3979 = vmatprep.subr.mxu0 0.0
    %3980 = vmatpush1.msra.mxu0 0.0
    %3981 = vmatprep.subr.mxu0 0.0
    %3982 = vmatpush1.msra.mxu0 0.0
    %3983 = vmatprep.subr.mxu0 0.0
    %3984 = vmatpush1.msra.mxu0 0.0
    %3985 = vmatprep.subr.mxu0 0.0
    %3986 = vmatpush1.msra.mxu0 0.0
    %3987 = vmatprep.subr.mxu0 0.0
    %3988 = vmatpush1.msra.mxu0 0.0
    %3989 = vmatprep.subr.mxu0 0.0
    %3990 = vmatpush1.msra.mxu0 0.0
    %3991 = vmatprep.subr.mxu0 0.0
    %3992 = vmatpush1.msra.mxu0 0.0
    %3993 = vmatprep.subr.mxu0 0.0
    %3994 = vmatpush1.msra.mxu0 0.0
    %3995 = vmatprep.subr.mxu0 0.0
    %3996 = vmatpush1.msra.mxu0 0.0
    %3997 = vmatprep.subr.mxu0 0.0
    %3998 = vmatpush1.msra.mxu0 0.0
    %3999 = vmatprep.subr.mxu0 0.0
    %4000 = vmatpush1.msra.mxu0 0.0
    %4001 = vmatprep.subr.mxu0 0.0
    %4002 = vmatpush1.msra.mxu0 0.0
    %4003 = vmatprep.subr.mxu0 0.0
    %4004 = vmatpush1.msra.mxu0 0.0
    %4005 = vmatprep.subr.mxu0 0.0
    %4006 = vmatpush1.msra.mxu0 0.0
    %4007 = vmatprep.subr.mxu0 0.0
    %4008 = vmatpush1.msra.mxu0 0.0
    %4009 = vmatprep.subr.mxu0 0.0
    %4010 = vmatpush1.msra.mxu0 0.0
    %4011 = vmatprep.subr.mxu0 0.0
    %4012 = vmatpush1.msra.mxu0 0.0
    %4013 = vmatprep.subr.mxu0 0.0
    %4014 = vmatpush1.msra.mxu0 0.0
    %4015 = vmatprep.subr.mxu0 0.0
    %4016 = vmatpush1.msra.mxu0 0.0
    %4017 = vmatprep.subr.mxu0 0.0
    %4018 = vmatpush1.msra.mxu0 0.0
    %4019 = vmatprep.subr.mxu0 0.0
    %4020 = vmatpush1.msra.mxu0 0.0
    %4021 = vmatprep.subr.mxu0 0.0
    %4022 = vmatpush1.msra.mxu0 0.0
    %4023 = vmatprep.subr.mxu0 0.0
    %4024 = vmatpush1.msra.mxu0 0.0
    %4025 = vmatprep.mubr.f32.mxu0 0.0
    %v4026 = vand.u32 %v3584, 4294901760
    %4027 = vmatmul.mubr.f32.gmra.mrb[0].mxu0 %v4026
    %v4028 = vpop.f32.mrb[0].mxu0
    %v4029 = vadd.f32 %v3957, %v4028
    %v4030 = vpop.f32.mrb[0].mxu0
    %4031 = vdwg.mxu0
    %v4033 = vsel %vm3538, %v3578, 0
    %4035 = vmatprep.subr.mxu0 0.0
    %v4036 = vand.u32 %v1731, 4294901760
    %4037 = vmatpush1.msra.mxu0 %v4036
    %4038 = vmatprep.subr.mxu0 0.0
    %4039 = vmatpush1.msra.mxu0 0.0
    %4040 = vmatprep.subr.mxu0 0.0
    %4041 = vmatpush1.msra.mxu0 0.0
    %4042 = vmatprep.subr.mxu0 0.0
    %4043 = vmatpush1.msra.mxu0 0.0
    %4044 = vmatprep.subr.mxu0 0.0
    %4045 = vmatpush1.msra.mxu0 0.0
    %4046 = vmatprep.subr.mxu0 0.0
    %4047 = vmatpush1.msra.mxu0 0.0
    %4048 = vmatprep.subr.mxu0 0.0
    %4049 = vmatpush1.msra.mxu0 0.0
    %4050 = vmatprep.subr.mxu0 0.0
    %4051 = vmatpush1.msra.mxu0 0.0
    %4052 = vmatprep.subr.mxu0 0.0
    %4053 = vmatpush1.msra.mxu0 0.0
    %4054 = vmatprep.subr.mxu0 0.0
    %4055 = vmatpush1.msra.mxu0 0.0
    %4056 = vmatprep.subr.mxu0 0.0
    %4057 = vmatpush1.msra.mxu0 0.0
    %4058 = vmatprep.subr.mxu0 0.0
    %4059 = vmatpush1.msra.mxu0 0.0
    %4060 = vmatprep.subr.mxu0 0.0
    %4061 = vmatpush1.msra.mxu0 0.0
    %4062 = vmatprep.subr.mxu0 0.0
    %4063 = vmatpush1.msra.mxu0 0.0
    %4064 = vmatprep.subr.mxu0 0.0
    %4065 = vmatpush1.msra.mxu0 0.0
    %4066 = vmatprep.subr.mxu0 0.0
    %4067 = vmatpush1.msra.mxu0 0.0
    %4068 = vmatprep.subr.mxu0 0.0
    %4069 = vmatpush1.msra.mxu0 0.0
    %4070 = vmatprep.subr.mxu0 0.0
    %4071 = vmatpush1.msra.mxu0 0.0
    %4072 = vmatprep.subr.mxu0 0.0
    %4073 = vmatpush1.msra.mxu0 0.0
    %4074 = vmatprep.subr.mxu0 0.0
    %4075 = vmatpush1.msra.mxu0 0.0
    %4076 = vmatprep.subr.mxu0 0.0
    %4077 = vmatpush1.msra.mxu0 0.0
    %4078 = vmatprep.subr.mxu0 0.0
    %4079 = vmatpush1.msra.mxu0 0.0
    %4080 = vmatprep.subr.mxu0 0.0
    %4081 = vmatpush1.msra.mxu0 0.0
    %4082 = vmatprep.subr.mxu0 0.0
    %4083 = vmatpush1.msra.mxu0 0.0
    %4084 = vmatprep.subr.mxu0 0.0
    %4085 = vmatpush1.msra.mxu0 0.0
    %4086 = vmatprep.subr.mxu0 0.0
    %4087 = vmatpush1.msra.mxu0 0.0
    %4088 = vmatprep.subr.mxu0 0.0
    %4089 = vmatpush1.msra.mxu0 0.0
    %4090 = vmatprep.subr.mxu0 0.0
    %4091 = vmatpush1.msra.mxu0 0.0
    %4092 = vmatprep.subr.mxu0 0.0
    %4093 = vmatpush1.msra.mxu0 0.0
    %4094 = vmatprep.subr.mxu0 0.0
    %4095 = vmatpush1.msra.mxu0 0.0
    %4096 = vmatprep.subr.mxu0 0.0
    %4097 = vmatpush1.msra.mxu0 0.0
    %4098 = vmatprep.subr.mxu0 0.0
    %4099 = vmatpush1.msra.mxu0 0.0
    %4100 = vmatprep.mubr.f32.mxu0 0.0
    %v4101 = vand.u32 %v4033, 4294901760
    %v4102 = vsub.f32 %v4033, %v4101
    %v4103 = vand.u32 %v4102, 4294901760
    %v4104 = vsub.f32 %v4102, %v4103
    %v4105 = vand.u32 %v4104, 4294901760
    %4106 = vmatmul.mubr.f32.gmra.mrb[0].mxu0 %v4105
    %v4107 = vpop.f32.mrb[0].mxu0
    %v4108 = vadd.f32 0.0, %v4107
    %v4109 = vpop.f32.mrb[0].mxu0
    %4110 = vdwg.mxu0
    %4111 = vmatprep.subr.mxu0 0.0
    %v4112 = vand.u32 %v1731, 4294901760
    %v4113 = vsub.f32 %v1731, %v4112
    %v4114 = vand.u32 %v4113, 4294901760
    %v4115 = vsub.f32 %v4113, %v4114
    %v4116 = vand.u32 %v4115, 4294901760
    %4117 = vmatpush1.msra.mxu0 %v4116
    %4118 = vmatprep.subr.mxu0 0.0
    %4119 = vmatpush1.msra.mxu0 0.0
    %4120 = vmatprep.subr.mxu0 0.0
    %4121 = vmatpush1.msra.mxu0 0.0
    %4122 = vmatprep.subr.mxu0 0.0
    %4123 = vmatpush1.msra.mxu0 0.0
    %4124 = vmatprep.subr.mxu0 0.0
    %4125 = vmatpush1.msra.mxu0 0.0
    %4126 = vmatprep.subr.mxu0 0.0
    %4127 = vmatpush1.msra.mxu0 0.0
    %4128 = vmatprep.subr.mxu0 0.0
    %4129 = vmatpush1.msra.mxu0 0.0
    %4130 = vmatprep.subr.mxu0 0.0
    %4131 = vmatpush1.msra.mxu0 0.0
    %4132 = vmatprep.subr.mxu0 0.0
    %4133 = vmatpush1.msra.mxu0 0.0
    %4134 = vmatprep.subr.mxu0 0.0
    %4135 = vmatpush1.msra.mxu0 0.0
    %4136 = vmatprep.subr.mxu0 0.0
    %4137 = vmatpush1.msra.mxu0 0.0
    %4138 = vmatprep.subr.mxu0 0.0
    %4139 = vmatpush1.msra.mxu0 0.0
    %4140 = vmatprep.subr.mxu0 0.0
    %4141 = vmatpush1.msra.mxu0 0.0
    %4142 = vmatprep.subr.mxu0 0.0
    %4143 = vmatpush1.msra.mxu0 0.0
    %4144 = vmatprep.subr.mxu0 0.0
    %4145 = vmatpush1.msra.mxu0 0.0
    %4146 = vmatprep.subr.mxu0 0.0
    %4147 = vmatpush1.msra.mxu0 0.0
    %4148 = vmatprep.subr.mxu0 0.0
    %4149 = vmatpush1.msra.mxu0 0.0
    %4150 = vmatprep.subr.mxu0 0.0
    %4151 = vmatpush1.msra.mxu0 0.0
    %4152 = vmatprep.subr.mxu0 0.0
    %4153 = vmatpush1.msra.mxu0 0.0
    %4154 = vmatprep.subr.mxu0 0.0
    %4155 = vmatpush1.msra.mxu0 0.0
    %4156 = vmatprep.subr.mxu0 0.0
    %4157 = vmatpush1.msra.mxu0 0.0
    %4158 = vmatprep.subr.mxu0 0.0
    %4159 = vmatpush1.msra.mxu0 0.0
    %4160 = vmatprep.subr.mxu0 0.0
    %4161 = vmatpush1.msra.mxu0 0.0
    %4162 = vmatprep.subr.mxu0 0.0
    %4163 = vmatpush1.msra.mxu0 0.0
    %4164 = vmatprep.subr.mxu0 0.0
    %4165 = vmatpush1.msra.mxu0 0.0
    %4166 = vmatprep.subr.mxu0 0.0
    %4167 = vmatpush1.msra.mxu0 0.0
    %4168 = vmatprep.subr.mxu0 0.0
    %4169 = vmatpush1.msra.mxu0 0.0
    %4170 = vmatprep.subr.mxu0 0.0
    %4171 = vmatpush1.msra.mxu0 0.0
    %4172 = vmatprep.subr.mxu0 0.0
    %4173 = vmatpush1.msra.mxu0 0.0
    %4174 = vmatprep.subr.mxu0 0.0
    %4175 = vmatpush1.msra.mxu0 0.0
    %4176 = vmatprep.subr.mxu0 0.0
    %4177 = vmatpush1.msra.mxu0 0.0
    %4178 = vmatprep.subr.mxu0 0.0
    %4179 = vmatpush1.msra.mxu0 0.0
    %4180 = vmatprep.mubr.f32.mxu0 0.0
    %v4181 = vand.u32 %v4033, 4294901760
    %4182 = vmatmul.mubr.f32.gmra.mrb[0].mxu0 %v4181
    %v4183 = vpop.f32.mrb[0].mxu0
    %v4184 = vadd.f32 %v4108, %v4183
    %v4185 = vpop.f32.mrb[0].mxu0
    %4186 = vdwg.mxu0
    %4187 = vmatprep.subr.mxu0 0.0
    %v4188 = vand.u32 %v1731, 4294901760
    %v4189 = vsub.f32 %v1731, %v4188
    %4190 = vmatpush1.msra.mxu0 %v4189
    %4191 = vmatprep.subr.mxu0 0.0
    %4192 = vmatpush1.msra.mxu0 0.0
    %4193 = vmatprep.subr.mxu0 0.0
    %4194 = vmatpush1.msra.mxu0 0.0
    %4195 = vmatprep.subr.mxu0 0.0
    %4196 = vmatpush1.msra.mxu0 0.0
    %4197 = vmatprep.subr.mxu0 0.0
    %4198 = vmatpush1.msra.mxu0 0.0
    %4199 = vmatprep.subr.mxu0 0.0
    %4200 = vmatpush1.msra.mxu0 0.0
    %4201 = vmatprep.subr.mxu0 0.0
    %4202 = vmatpush1.msra.mxu0 0.0
    %4203 = vmatprep.subr.mxu0 0.0
    %4204 = vmatpush1.msra.mxu0 0.0
    %4205 = vmatprep.subr.mxu0 0.0
    %4206 = vmatpush1.msra.mxu0 0.0
    %4207 = vmatprep.subr.mxu0 0.0
    %4208 = vmatpush1.msra.mxu0 0.0
    %4209 = vmatprep.subr.mxu0 0.0
    %4210 = vmatpush1.msra.mxu0 0.0
    %4211 = vmatprep.subr.mxu0 0.0
    %4212 = vmatpush1.msra.mxu0 0.0
    %4213 = vmatprep.subr.mxu0 0.0
    %4214 = vmatpush1.msra.mxu0 0.0
    %4215 = vmatprep.subr.mxu0 0.0
    %4216 = vmatpush1.msra.mxu0 0.0
    %4217 = vmatprep.subr.mxu0 0.0
    %4218 = vmatpush1.msra.mxu0 0.0
    %4219 = vmatprep.subr.mxu0 0.0
    %4220 = vmatpush1.msra.mxu0 0.0
    %4221 = vmatprep.subr.mxu0 0.0
    %4222 = vmatpush1.msra.mxu0 0.0
    %4223 = vmatprep.subr.mxu0 0.0
    %4224 = vmatpush1.msra.mxu0 0.0
    %4225 = vmatprep.subr.mxu0 0.0
    %4226 = vmatpush1.msra.mxu0 0.0
    %4227 = vmatprep.subr.mxu0 0.0
    %4228 = vmatpush1.msra.mxu0 0.0
    %4229 = vmatprep.subr.mxu0 0.0
    %4230 = vmatpush1.msra.mxu0 0.0
    %4231 = vmatprep.subr.mxu0 0.0
    %4232 = vmatpush1.msra.mxu0 0.0
    %4233 = vmatprep.subr.mxu0 0.0
    %4234 = vmatpush1.msra.mxu0 0.0
    %4235 = vmatprep.subr.mxu0 0.0
    %4236 = vmatpush1.msra.mxu0 0.0
    %4237 = vmatprep.subr.mxu0 0.0
    %4238 = vmatpush1.msra.mxu0 0.0
    %4239 = vmatprep.subr.mxu0 0.0
    %4240 = vmatpush1.msra.mxu0 0.0
    %4241 = vmatprep.subr.mxu0 0.0
    %4242 = vmatpush1.msra.mxu0 0.0
    %4243 = vmatprep.subr.mxu0 0.0
    %4244 = vmatpush1.msra.mxu0 0.0
    %4245 = vmatprep.subr.mxu0 0.0
    %4246 = vmatpush1.msra.mxu0 0.0
    %4247 = vmatprep.subr.mxu0 0.0
    %4248 = vmatpush1.msra.mxu0 0.0
    %4249 = vmatprep.subr.mxu0 0.0
    %4250 = vmatpush1.msra.mxu0 0.0
    %4251 = vmatprep.subr.mxu0 0.0
    %4252 = vmatpush1.msra.mxu0 0.0
    %4253 = vmatprep.mubr.f32.mxu0 0.0
    %v4254 = vand.u32 %v4033, 4294901760
    %v4255 = vsub.f32 %v4033, %v4254
    %4256 = vmatmul.mubr.f32.gmra.mrb[0].mxu0 %v4255
    %v4257 = vpop.f32.mrb[0].mxu0
    %v4258 = vadd.f32 %v4184, %v4257
    %v4259 = vpop.f32.mrb[0].mxu0
    %4260 = vdwg.mxu0
    %4261 = vmatprep.subr.mxu0 0.0
    %v4262 = vand.u32 %v1731, 4294901760
    %4263 = vmatpush1.msra.mxu0 %v4262
    %4264 = vmatprep.subr.mxu0 0.0
    %4265 = vmatpush1.msra.mxu0 0.0
    %4266 = vmatprep.subr.mxu0 0.0
    %4267 = vmatpush1.msra.mxu0 0.0
    %4268 = vmatprep.subr.mxu0 0.0
    %4269 = vmatpush1.msra.mxu0 0.0
    %4270 = vmatprep.subr.mxu0 0.0
    %4271 = vmatpush1.msra.mxu0 0.0
    %4272 = vmatprep.subr.mxu0 0.0
    %4273 = vmatpush1.msra.mxu0 0.0
    %4274 = vmatprep.subr.mxu0 0.0
    %4275 = vmatpush1.msra.mxu0 0.0
    %4276 = vmatprep.subr.mxu0 0.0
    %4277 = vmatpush1.msra.mxu0 0.0
    %4278 = vmatprep.subr.mxu0 0.0
    %4279 = vmatpush1.msra.mxu0 0.0
    %4280 = vmatprep.subr.mxu0 0.0
    %4281 = vmatpush1.msra.mxu0 0.0
    %4282 = vmatprep.subr.mxu0 0.0
    %4283 = vmatpush1.msra.mxu0 0.0
    %4284 = vmatprep.subr.mxu0 0.0
    %4285 = vmatpush1.msra.mxu0 0.0
    %4286 = vmatprep.subr.mxu0 0.0
    %4287 = vmatpush1.msra.mxu0 0.0
    %4288 = vmatprep.subr.mxu0 0.0
    %4289 = vmatpush1.msra.mxu0 0.0
    %4290 = vmatprep.subr.mxu0 0.0
    %4291 = vmatpush1.msra.mxu0 0.0
    %4292 = vmatprep.subr.mxu0 0.0
    %4293 = vmatpush1.msra.mxu0 0.0
    %4294 = vmatprep.subr.mxu0 0.0
    %4295 = vmatpush1.msra.mxu0 0.0
    %4296 = vmatprep.subr.mxu0 0.0
    %4297 = vmatpush1.msra.mxu0 0.0
    %4298 = vmatprep.subr.mxu0 0.0
    %4299 = vmatpush1.msra.mxu0 0.0
    %4300 = vmatprep.subr.mxu0 0.0
    %4301 = vmatpush1.msra.mxu0 0.0
    %4302 = vmatprep.subr.mxu0 0.0
    %4303 = vmatpush1.msra.mxu0 0.0
    %4304 = vmatprep.subr.mxu0 0.0
    %4305 = vmatpush1.msra.mxu0 0.0
    %4306 = vmatprep.subr.mxu0 0.0
    %4307 = vmatpush1.msra.mxu0 0.0
    %4308 = vmatprep.subr.mxu0 0.0
    %4309 = vmatpush1.msra.mxu0 0.0
    %4310 = vmatprep.subr.mxu0 0.0
    %4311 = vmatpush1.msra.mxu0 0.0
    %4312 = vmatprep.subr.mxu0 0.0
    %4313 = vmatpush1.msra.mxu0 0.0
    %4314 = vmatprep.subr.mxu0 0.0
    %4315 = vmatpush1.msra.mxu0 0.0
    %4316 = vmatprep.subr.mxu0 0.0
    %4317 = vmatpush1.msra.mxu0 0.0
    %4318 = vmatprep.subr.mxu0 0.0
    %4319 = vmatpush1.msra.mxu0 0.0
    %4320 = vmatprep.subr.mxu0 0.0
    %4321 = vmatpush1.msra.mxu0 0.0
    %4322 = vmatprep.subr.mxu0 0.0
    %4323 = vmatpush1.msra.mxu0 0.0
    %4324 = vmatprep.subr.mxu0 0.0
    %4325 = vmatpush1.msra.mxu0 0.0
    %4326 = vmatprep.mubr.f32.mxu0 0.0
    %v4327 = vand.u32 %v4033, 4294901760
    %v4328 = vsub.f32 %v4033, %v4327
    %v4329 = vand.u32 %v4328, 4294901760
    %4330 = vmatmul.mubr.f32.gmra.mrb[0].mxu0 %v4329
    %v4331 = vpop.f32.mrb[0].mxu0
    %v4332 = vadd.f32 %v4258, %v4331
    %v4333 = vpop.f32.mrb[0].mxu0
    %4334 = vdwg.mxu0
    %4335 = vmatprep.subr.mxu0 0.0
    %v4336 = vand.u32 %v1731, 4294901760
    %v4337 = vsub.f32 %v1731, %v4336
    %v4338 = vand.u32 %v4337, 4294901760
    %4339 = vmatpush1.msra.mxu0 %v4338
    %4340 = vmatprep.subr.mxu0 0.0
    %4341 = vmatpush1.msra.mxu0 0.0
    %4342 = vmatprep.subr.mxu0 0.0
    %4343 = vmatpush1.msra.mxu0 0.0
    %4344 = vmatprep.subr.mxu0 0.0
    %4345 = vmatpush1.msra.mxu0 0.0
    %4346 = vmatprep.subr.mxu0 0.0
    %4347 = vmatpush1.msra.mxu0 0.0
    %4348 = vmatprep.subr.mxu0 0.0
    %4349 = vmatpush1.msra.mxu0 0.0
    %4350 = vmatprep.subr.mxu0 0.0
    %4351 = vmatpush1.msra.mxu0 0.0
    %4352 = vmatprep.subr.mxu0 0.0
    %4353 = vmatpush1.msra.mxu0 0.0
    %4354 = vmatprep.subr.mxu0 0.0
    %4355 = vmatpush1.msra.mxu0 0.0
    %4356 = vmatprep.subr.mxu0 0.0
    %4357 = vmatpush1.msra.mxu0 0.0
    %4358 = vmatprep.subr.mxu0 0.0
    %4359 = vmatpush1.msra.mxu0 0.0
    %4360 = vmatprep.subr.mxu0 0.0
    %4361 = vmatpush1.msra.mxu0 0.0
    %4362 = vmatprep.subr.mxu0 0.0
    %4363 = vmatpush1.msra.mxu0 0.0
    %4364 = vmatprep.subr.mxu0 0.0
    %4365 = vmatpush1.msra.mxu0 0.0
    %4366 = vmatprep.subr.mxu0 0.0
    %4367 = vmatpush1.msra.mxu0 0.0
    %4368 = vmatprep.subr.mxu0 0.0
    %4369 = vmatpush1.msra.mxu0 0.0
    %4370 = vmatprep.subr.mxu0 0.0
    %4371 = vmatpush1.msra.mxu0 0.0
    %4372 = vmatprep.subr.mxu0 0.0
    %4373 = vmatpush1.msra.mxu0 0.0
    %4374 = vmatprep.subr.mxu0 0.0
    %4375 = vmatpush1.msra.mxu0 0.0
    %4376 = vmatprep.subr.mxu0 0.0
    %4377 = vmatpush1.msra.mxu0 0.0
    %4378 = vmatprep.subr.mxu0 0.0
    %4379 = vmatpush1.msra.mxu0 0.0
    %4380 = vmatprep.subr.mxu0 0.0
    %4381 = vmatpush1.msra.mxu0 0.0
    %4382 = vmatprep.subr.mxu0 0.0
    %4383 = vmatpush1.msra.mxu0 0.0
    %4384 = vmatprep.subr.mxu0 0.0
    %4385 = vmatpush1.msra.mxu0 0.0
    %4386 = vmatprep.subr.mxu0 0.0
    %4387 = vmatpush1.msra.mxu0 0.0
    %4388 = vmatprep.subr.mxu0 0.0
    %4389 = vmatpush1.msra.mxu0 0.0
    %4390 = vmatprep.subr.mxu0 0.0
    %4391 = vmatpush1.msra.mxu0 0.0
    %4392 = vmatprep.subr.mxu0 0.0
    %4393 = vmatpush1.msra.mxu0 0.0
    %4394 = vmatprep.subr.mxu0 0.0
    %4395 = vmatpush1.msra.mxu0 0.0
    %4396 = vmatprep.subr.mxu0 0.0
    %4397 = vmatpush1.msra.mxu0 0.0
    %4398 = vmatprep.subr.mxu0 0.0
    %4399 = vmatpush1.msra.mxu0 0.0
    %4400 = vmatprep.subr.mxu0 0.0
    %4401 = vmatpush1.msra.mxu0 0.0
    %4402 = vmatprep.mubr.f32.mxu0 0.0
    %v4403 = vand.u32 %v4033, 4294901760
    %4404 = vmatmul.mubr.f32.gmra.mrb[0].mxu0 %v4403
    %v4405 = vpop.f32.mrb[0].mxu0
    %v4406 = vadd.f32 %v4332, %v4405
    %v4407 = vpop.f32.mrb[0].mxu0
    %4408 = vdwg.mxu0
    %4409 = vmatprep.subr.mxu0 0.0
    %v4410 = vand.u32 %v1731, 4294901760
    %4411 = vmatpush1.msra.mxu0 %v4410
    %4412 = vmatprep.subr.mxu0 0.0
    %4413 = vmatpush1.msra.mxu0 0.0
    %4414 = vmatprep.subr.mxu0 0.0
    %4415 = vmatpush1.msra.mxu0 0.0
    %4416 = vmatprep.subr.mxu0 0.0
    %4417 = vmatpush1.msra.mxu0 0.0
    %4418 = vmatprep.subr.mxu0 0.0
    %4419 = vmatpush1.msra.mxu0 0.0
    %4420 = vmatprep.subr.mxu0 0.0
    %4421 = vmatpush1.msra.mxu0 0.0
    %4422 = vmatprep.subr.mxu0 0.0
    %4423 = vmatpush1.msra.mxu0 0.0
    %4424 = vmatprep.subr.mxu0 0.0
    %4425 = vmatpush1.msra.mxu0 0.0
    %4426 = vmatprep.subr.mxu0 0.0
    %4427 = vmatpush1.msra.mxu0 0.0
    %4428 = vmatprep.subr.mxu0 0.0
    %4429 = vmatpush1.msra.mxu0 0.0
    %4430 = vmatprep.subr.mxu0 0.0
    %4431 = vmatpush1.msra.mxu0 0.0
    %4432 = vmatprep.subr.mxu0 0.0
    %4433 = vmatpush1.msra.mxu0 0.0
    %4434 = vmatprep.subr.mxu0 0.0
    %4435 = vmatpush1.msra.mxu0 0.0
    %4436 = vmatprep.subr.mxu0 0.0
    %4437 = vmatpush1.msra.mxu0 0.0
    %4438 = vmatprep.subr.mxu0 0.0
    %4439 = vmatpush1.msra.mxu0 0.0
    %4440 = vmatprep.subr.mxu0 0.0
    %4441 = vmatpush1.msra.mxu0 0.0
    %4442 = vmatprep.subr.mxu0 0.0
    %4443 = vmatpush1.msra.mxu0 0.0
    %4444 = vmatprep.subr.mxu0 0.0
    %4445 = vmatpush1.msra.mxu0 0.0
    %4446 = vmatprep.subr.mxu0 0.0
    %4447 = vmatpush1.msra.mxu0 0.0
    %4448 = vmatprep.subr.mxu0 0.0
    %4449 = vmatpush1.msra.mxu0 0.0
    %4450 = vmatprep.subr.mxu0 0.0
    %4451 = vmatpush1.msra.mxu0 0.0
    %4452 = vmatprep.subr.mxu0 0.0
    %4453 = vmatpush1.msra.mxu0 0.0
    %4454 = vmatprep.subr.mxu0 0.0
    %4455 = vmatpush1.msra.mxu0 0.0
    %4456 = vmatprep.subr.mxu0 0.0
    %4457 = vmatpush1.msra.mxu0 0.0
    %4458 = vmatprep.subr.mxu0 0.0
    %4459 = vmatpush1.msra.mxu0 0.0
    %4460 = vmatprep.subr.mxu0 0.0
    %4461 = vmatpush1.msra.mxu0 0.0
    %4462 = vmatprep.subr.mxu0 0.0
    %4463 = vmatpush1.msra.mxu0 0.0
    %4464 = vmatprep.subr.mxu0 0.0
    %4465 = vmatpush1.msra.mxu0 0.0
    %4466 = vmatprep.subr.mxu0 0.0
    %4467 = vmatpush1.msra.mxu0 0.0
    %4468 = vmatprep.subr.mxu0 0.0
    %4469 = vmatpush1.msra.mxu0 0.0
    %4470 = vmatprep.subr.mxu0 0.0
    %4471 = vmatpush1.msra.mxu0 0.0
    %4472 = vmatprep.subr.mxu0 0.0
    %4473 = vmatpush1.msra.mxu0 0.0
    %4474 = vmatprep.mubr.f32.mxu0 0.0
    %v4475 = vand.u32 %v4033, 4294901760
    %4476 = vmatmul.mubr.f32.gmra.mrb[0].mxu0 %v4475
    %v4477 = vpop.f32.mrb[0].mxu0
    %v4478 = vadd.f32 %v4406, %v4477
    %v4479 = vpop.f32.mrb[0].mxu0
    %4480 = vdwg.mxu0
    %v4482 = vsel %vm3538, %v3580, 0
    %4484 = vmatprep.subr.mxu0 0.0
    %v4485 = vand.u32 %v1714, 4294901760
    %4486 = vmatpush1.msra.mxu0 %v4485
    %4487 = vmatprep.subr.mxu0 0.0
    %4488 = vmatpush1.msra.mxu0 0.0
    %4489 = vmatprep.subr.mxu0 0.0
    %4490 = vmatpush1.msra.mxu0 0.0
    %4491 = vmatprep.subr.mxu0 0.0
    %4492 = vmatpush1.msra.mxu0 0.0
    %4493 = vmatprep.subr.mxu0 0.0
    %4494 = vmatpush1.msra.mxu0 0.0
    %4495 = vmatprep.subr.mxu0 0.0
    %4496 = vmatpush1.msra.mxu0 0.0
    %4497 = vmatprep.subr.mxu0 0.0
    %4498 = vmatpush1.msra.mxu0 0.0
    %4499 = vmatprep.subr.mxu0 0.0
    %4500 = vmatpush1.msra.mxu0 0.0
    %4501 = vmatprep.subr.mxu0 0.0
    %4502 = vmatpush1.msra.mxu0 0.0
    %4503 = vmatprep.subr.mxu0 0.0
    %4504 = vmatpush1.msra.mxu0 0.0
    %4505 = vmatprep.subr.mxu0 0.0
    %4506 = vmatpush1.msra.mxu0 0.0
    %4507 = vmatprep.subr.mxu0 0.0
    %4508 = vmatpush1.msra.mxu0 0.0
    %4509 = vmatprep.subr.mxu0 0.0
    %4510 = vmatpush1.msra.mxu0 0.0
    %4511 = vmatprep.subr.mxu0 0.0
    %4512 = vmatpush1.msra.mxu0 0.0
    %4513 = vmatprep.subr.mxu0 0.0
    %4514 = vmatpush1.msra.mxu0 0.0
    %4515 = vmatprep.subr.mxu0 0.0
    %4516 = vmatpush1.msra.mxu0 0.0
    %4517 = vmatprep.subr.mxu0 0.0
    %4518 = vmatpush1.msra.mxu0 0.0
    %4519 = vmatprep.subr.mxu0 0.0
    %4520 = vmatpush1.msra.mxu0 0.0
    %4521 = vmatprep.subr.mxu0 0.0
    %4522 = vmatpush1.msra.mxu0 0.0
    %4523 = vmatprep.subr.mxu0 0.0
    %4524 = vmatpush1.msra.mxu0 0.0
    %4525 = vmatprep.subr.mxu0 0.0
    %4526 = vmatpush1.msra.mxu0 0.0
    %4527 = vmatprep.subr.mxu0 0.0
    %4528 = vmatpush1.msra.mxu0 0.0
    %4529 = vmatprep.subr.mxu0 0.0
    %4530 = vmatpush1.msra.mxu0 0.0
    %4531 = vmatprep.subr.mxu0 0.0
    %4532 = vmatpush1.msra.mxu0 0.0
    %4533 = vmatprep.subr.mxu0 0.0
    %4534 = vmatpush1.msra.mxu0 0.0
    %4535 = vmatprep.subr.mxu0 0.0
    %4536 = vmatpush1.msra.mxu0 0.0
    %4537 = vmatprep.subr.mxu0 0.0
    %4538 = vmatpush1.msra.mxu0 0.0
    %4539 = vmatprep.subr.mxu0 0.0
    %4540 = vmatpush1.msra.mxu0 0.0
    %4541 = vmatprep.subr.mxu0 0.0
    %4542 = vmatpush1.msra.mxu0 0.0
    %4543 = vmatprep.subr.mxu0 0.0
    %4544 = vmatpush1.msra.mxu0 0.0
    %4545 = vmatprep.subr.mxu0 0.0
    %4546 = vmatpush1.msra.mxu0 0.0
    %4547 = vmatprep.subr.mxu0 0.0
    %4548 = vmatpush1.msra.mxu0 0.0
    %4549 = vmatprep.mubr.f32.mxu0 0.0
    %v4550 = vand.u32 %v4482, 4294901760
    %v4551 = vsub.f32 %v4482, %v4550
    %v4552 = vand.u32 %v4551, 4294901760
    %v4553 = vsub.f32 %v4551, %v4552
    %v4554 = vand.u32 %v4553, 4294901760
    %4555 = vmatmul.mubr.f32.gmra.mrb[0].mxu0 %v4554
    %v4556 = vpop.f32.mrb[0].mxu0
    %v4557 = vadd.f32 0.0, %v4556
    %v4558 = vpop.f32.mrb[0].mxu0
    %4559 = vdwg.mxu0
    %4560 = vmatprep.subr.mxu0 0.0
    %v4561 = vand.u32 %v1714, 4294901760
    %v4562 = vsub.f32 %v1714, %v4561
    %v4563 = vand.u32 %v4562, 4294901760
    %v4564 = vsub.f32 %v4562, %v4563
    %v4565 = vand.u32 %v4564, 4294901760
    %4566 = vmatpush1.msra.mxu0 %v4565
    %4567 = vmatprep.subr.mxu0 0.0
    %4568 = vmatpush1.msra.mxu0 0.0
    %4569 = vmatprep.subr.mxu0 0.0
    %4570 = vmatpush1.msra.mxu0 0.0
    %4571 = vmatprep.subr.mxu0 0.0
    %4572 = vmatpush1.msra.mxu0 0.0
    %4573 = vmatprep.subr.mxu0 0.0
    %4574 = vmatpush1.msra.mxu0 0.0
    %4575 = vmatprep.subr.mxu0 0.0
    %4576 = vmatpush1.msra.mxu0 0.0
    %4577 = vmatprep.subr.mxu0 0.0
    %4578 = vmatpush1.msra.mxu0 0.0
    %4579 = vmatprep.subr.mxu0 0.0
    %4580 = vmatpush1.msra.mxu0 0.0
    %4581 = vmatprep.subr.mxu0 0.0
    %4582 = vmatpush1.msra.mxu0 0.0
    %4583 = vmatprep.subr.mxu0 0.0
    %4584 = vmatpush1.msra.mxu0 0.0
    %4585 = vmatprep.subr.mxu0 0.0
    %4586 = vmatpush1.msra.mxu0 0.0
    %4587 = vmatprep.subr.mxu0 0.0
    %4588 = vmatpush1.msra.mxu0 0.0
    %4589 = vmatprep.subr.mxu0 0.0
    %4590 = vmatpush1.msra.mxu0 0.0
    %4591 = vmatprep.subr.mxu0 0.0
    %4592 = vmatpush1.msra.mxu0 0.0
    %4593 = vmatprep.subr.mxu0 0.0
    %4594 = vmatpush1.msra.mxu0 0.0
    %4595 = vmatprep.subr.mxu0 0.0
    %4596 = vmatpush1.msra.mxu0 0.0
    %4597 = vmatprep.subr.mxu0 0.0
    %4598 = vmatpush1.msra.mxu0 0.0
    %4599 = vmatprep.subr.mxu0 0.0
    %4600 = vmatpush1.msra.mxu0 0.0
    %4601 = vmatprep.subr.mxu0 0.0
    %4602 = vmatpush1.msra.mxu0 0.0
    %4603 = vmatprep.subr.mxu0 0.0
    %4604 = vmatpush1.msra.mxu0 0.0
    %4605 = vmatprep.subr.mxu0 0.0
    %4606 = vmatpush1.msra.mxu0 0.0
    %4607 = vmatprep.subr.mxu0 0.0
    %4608 = vmatpush1.msra.mxu0 0.0
    %4609 = vmatprep.subr.mxu0 0.0
    %4610 = vmatpush1.msra.mxu0 0.0
    %4611 = vmatprep.subr.mxu0 0.0
    %4612 = vmatpush1.msra.mxu0 0.0
    %4613 = vmatprep.subr.mxu0 0.0
    %4614 = vmatpush1.msra.mxu0 0.0
    %4615 = vmatprep.subr.mxu0 0.0
    %4616 = vmatpush1.msra.mxu0 0.0
    %4617 = vmatprep.subr.mxu0 0.0
    %4618 = vmatpush1.msra.mxu0 0.0
    %4619 = vmatprep.subr.mxu0 0.0
    %4620 = vmatpush1.msra.mxu0 0.0
    %4621 = vmatprep.subr.mxu0 0.0
    %4622 = vmatpush1.msra.mxu0 0.0
    %4623 = vmatprep.subr.mxu0 0.0
    %4624 = vmatpush1.msra.mxu0 0.0
    %4625 = vmatprep.subr.mxu0 0.0
    %4626 = vmatpush1.msra.mxu0 0.0
    %4627 = vmatprep.subr.mxu0 0.0
    %4628 = vmatpush1.msra.mxu0 0.0
    %4629 = vmatprep.mubr.f32.mxu0 0.0
    %v4630 = vand.u32 %v4482, 4294901760
    %4631 = vmatmul.mubr.f32.gmra.mrb[0].mxu0 %v4630
    %v4632 = vpop.f32.mrb[0].mxu0
    %v4633 = vadd.f32 %v4557, %v4632
    %v4634 = vpop.f32.mrb[0].mxu0
    %4635 = vdwg.mxu0
    %4636 = vmatprep.subr.mxu0 0.0
    %v4637 = vand.u32 %v1714, 4294901760
    %v4638 = vsub.f32 %v1714, %v4637
    %4639 = vmatpush1.msra.mxu0 %v4638
    %4640 = vmatprep.subr.mxu0 0.0
    %4641 = vmatpush1.msra.mxu0 0.0
    %4642 = vmatprep.subr.mxu0 0.0
    %4643 = vmatpush1.msra.mxu0 0.0
    %4644 = vmatprep.subr.mxu0 0.0
    %4645 = vmatpush1.msra.mxu0 0.0
    %4646 = vmatprep.subr.mxu0 0.0
    %4647 = vmatpush1.msra.mxu0 0.0
    %4648 = vmatprep.subr.mxu0 0.0
    %4649 = vmatpush1.msra.mxu0 0.0
    %4650 = vmatprep.subr.mxu0 0.0
    %4651 = vmatpush1.msra.mxu0 0.0
    %4652 = vmatprep.subr.mxu0 0.0
    %4653 = vmatpush1.msra.mxu0 0.0
    %4654 = vmatprep.subr.mxu0 0.0
    %4655 = vmatpush1.msra.mxu0 0.0
    %4656 = vmatprep.subr.mxu0 0.0
    %4657 = vmatpush1.msra.mxu0 0.0
    %4658 = vmatprep.subr.mxu0 0.0
    %4659 = vmatpush1.msra.mxu0 0.0
    %4660 = vmatprep.subr.mxu0 0.0
    %4661 = vmatpush1.msra.mxu0 0.0
    %4662 = vmatprep.subr.mxu0 0.0
    %4663 = vmatpush1.msra.mxu0 0.0
    %4664 = vmatprep.subr.mxu0 0.0
    %4665 = vmatpush1.msra.mxu0 0.0
    %4666 = vmatprep.subr.mxu0 0.0
    %4667 = vmatpush1.msra.mxu0 0.0
    %4668 = vmatprep.subr.mxu0 0.0
    %4669 = vmatpush1.msra.mxu0 0.0
    %4670 = vmatprep.subr.mxu0 0.0
    %4671 = vmatpush1.msra.mxu0 0.0
    %4672 = vmatprep.subr.mxu0 0.0
    %4673 = vmatpush1.msra.mxu0 0.0
    %4674 = vmatprep.subr.mxu0 0.0
    %4675 = vmatpush1.msra.mxu0 0.0
    %4676 = vmatprep.subr.mxu0 0.0
    %4677 = vmatpush1.msra.mxu0 0.0
    %4678 = vmatprep.subr.mxu0 0.0
    %4679 = vmatpush1.msra.mxu0 0.0
    %4680 = vmatprep.subr.mxu0 0.0
    %4681 = vmatpush1.msra.mxu0 0.0
    %4682 = vmatprep.subr.mxu0 0.0
    %4683 = vmatpush1.msra.mxu0 0.0
    %4684 = vmatprep.subr.mxu0 0.0
    %4685 = vmatpush1.msra.mxu0 0.0
    %4686 = vmatprep.subr.mxu0 0.0
    %4687 = vmatpush1.msra.mxu0 0.0
    %4688 = vmatprep.subr.mxu0 0.0
    %4689 = vmatpush1.msra.mxu0 0.0
    %4690 = vmatprep.subr.mxu0 0.0
    %4691 = vmatpush1.msra.mxu0 0.0
    %4692 = vmatprep.subr.mxu0 0.0
    %4693 = vmatpush1.msra.mxu0 0.0
    %4694 = vmatprep.subr.mxu0 0.0
    %4695 = vmatpush1.msra.mxu0 0.0
    %4696 = vmatprep.subr.mxu0 0.0
    %4697 = vmatpush1.msra.mxu0 0.0
    %4698 = vmatprep.subr.mxu0 0.0
    %4699 = vmatpush1.msra.mxu0 0.0
    %4700 = vmatprep.subr.mxu0 0.0
    %4701 = vmatpush1.msra.mxu0 0.0
    %4702 = vmatprep.mubr.f32.mxu0 0.0
    %v4703 = vand.u32 %v4482, 4294901760
    %v4704 = vsub.f32 %v4482, %v4703
    %4705 = vmatmul.mubr.f32.gmra.mrb[0].mxu0 %v4704
    %v4706 = vpop.f32.mrb[0].mxu0
    %v4707 = vadd.f32 %v4633, %v4706
    %v4708 = vpop.f32.mrb[0].mxu0
    %4709 = vdwg.mxu0
    %4710 = vmatprep.subr.mxu0 0.0
    %v4711 = vand.u32 %v1714, 4294901760
    %4712 = vmatpush1.msra.mxu0 %v4711
    %4713 = vmatprep.subr.mxu0 0.0
    %4714 = vmatpush1.msra.mxu0 0.0
    %4715 = vmatprep.subr.mxu0 0.0
    %4716 = vmatpush1.msra.mxu0 0.0
    %4717 = vmatprep.subr.mxu0 0.0
    %4718 = vmatpush1.msra.mxu0 0.0
    %4719 = vmatprep.subr.mxu0 0.0
    %4720 = vmatpush1.msra.mxu0 0.0
    %4721 = vmatprep.subr.mxu0 0.0
    %4722 = vmatpush1.msra.mxu0 0.0
    %4723 = vmatprep.subr.mxu0 0.0
    %4724 = vmatpush1.msra.mxu0 0.0
    %4725 = vmatprep.subr.mxu0 0.0
    %4726 = vmatpush1.msra.mxu0 0.0
    %4727 = vmatprep.subr.mxu0 0.0
    %4728 = vmatpush1.msra.mxu0 0.0
    %4729 = vmatprep.subr.mxu0 0.0
    %4730 = vmatpush1.msra.mxu0 0.0
    %4731 = vmatprep.subr.mxu0 0.0
    %4732 = vmatpush1.msra.mxu0 0.0
    %4733 = vmatprep.subr.mxu0 0.0
    %4734 = vmatpush1.msra.mxu0 0.0
    %4735 = vmatprep.subr.mxu0 0.0
    %4736 = vmatpush1.msra.mxu0 0.0
    %4737 = vmatprep.subr.mxu0 0.0
    %4738 = vmatpush1.msra.mxu0 0.0
    %4739 = vmatprep.subr.mxu0 0.0
    %4740 = vmatpush1.msra.mxu0 0.0
    %4741 = vmatprep.subr.mxu0 0.0
    %4742 = vmatpush1.msra.mxu0 0.0
    %4743 = vmatprep.subr.mxu0 0.0
    %4744 = vmatpush1.msra.mxu0 0.0
    %4745 = vmatprep.subr.mxu0 0.0
    %4746 = vmatpush1.msra.mxu0 0.0
    %4747 = vmatprep.subr.mxu0 0.0
    %4748 = vmatpush1.msra.mxu0 0.0
    %4749 = vmatprep.subr.mxu0 0.0
    %4750 = vmatpush1.msra.mxu0 0.0
    %4751 = vmatprep.subr.mxu0 0.0
    %4752 = vmatpush1.msra.mxu0 0.0
    %4753 = vmatprep.subr.mxu0 0.0
    %4754 = vmatpush1.msra.mxu0 0.0
    %4755 = vmatprep.subr.mxu0 0.0
    %4756 = vmatpush1.msra.mxu0 0.0
    %4757 = vmatprep.subr.mxu0 0.0
    %4758 = vmatpush1.msra.mxu0 0.0
    %4759 = vmatprep.subr.mxu0 0.0
    %4760 = vmatpush1.msra.mxu0 0.0
    %4761 = vmatprep.subr.mxu0 0.0
    %4762 = vmatpush1.msra.mxu0 0.0
    %4763 = vmatprep.subr.mxu0 0.0
    %4764 = vmatpush1.msra.mxu0 0.0
    %4765 = vmatprep.subr.mxu0 0.0
    %4766 = vmatpush1.msra.mxu0 0.0
    %4767 = vmatprep.subr.mxu0 0.0
    %4768 = vmatpush1.msra.mxu0 0.0
    %4769 = vmatprep.subr.mxu0 0.0
    %4770 = vmatpush1.msra.mxu0 0.0
    %4771 = vmatprep.subr.mxu0 0.0
    %4772 = vmatpush1.msra.mxu0 0.0
    %4773 = vmatprep.subr.mxu0 0.0
    %4774 = vmatpush1.msra.mxu0 0.0
    %4775 = vmatprep.mubr.f32.mxu0 0.0
    %v4776 = vand.u32 %v4482, 4294901760
    %v4777 = vsub.f32 %v4482, %v4776
    %v4778 = vand.u32 %v4777, 4294901760
    %4779 = vmatmul.mubr.f32.gmra.mrb[0].mxu0 %v4778
    %v4780 = vpop.f32.mrb[0].mxu0
    %v4781 = vadd.f32 %v4707, %v4780
    %v4782 = vpop.f32.mrb[0].mxu0
    %4783 = vdwg.mxu0
    %4784 = vmatprep.subr.mxu0 0.0
    %v4785 = vand.u32 %v1714, 4294901760
    %v4786 = vsub.f32 %v1714, %v4785
    %v4787 = vand.u32 %v4786, 4294901760
    %4788 = vmatpush1.msra.mxu0 %v4787
    %4789 = vmatprep.subr.mxu0 0.0
    %4790 = vmatpush1.msra.mxu0 0.0
    %4791 = vmatprep.subr.mxu0 0.0
    %4792 = vmatpush1.msra.mxu0 0.0
    %4793 = vmatprep.subr.mxu0 0.0
    %4794 = vmatpush1.msra.mxu0 0.0
    %4795 = vmatprep.subr.mxu0 0.0
    %4796 = vmatpush1.msra.mxu0 0.0
    %4797 = vmatprep.subr.mxu0 0.0
    %4798 = vmatpush1.msra.mxu0 0.0
    %4799 = vmatprep.subr.mxu0 0.0
    %4800 = vmatpush1.msra.mxu0 0.0
    %4801 = vmatprep.subr.mxu0 0.0
    %4802 = vmatpush1.msra.mxu0 0.0
    %4803 = vmatprep.subr.mxu0 0.0
    %4804 = vmatpush1.msra.mxu0 0.0
    %4805 = vmatprep.subr.mxu0 0.0
    %4806 = vmatpush1.msra.mxu0 0.0
    %4807 = vmatprep.subr.mxu0 0.0
    %4808 = vmatpush1.msra.mxu0 0.0
    %4809 = vmatprep.subr.mxu0 0.0
    %4810 = vmatpush1.msra.mxu0 0.0
    %4811 = vmatprep.subr.mxu0 0.0
    %4812 = vmatpush1.msra.mxu0 0.0
    %4813 = vmatprep.subr.mxu0 0.0
    %4814 = vmatpush1.msra.mxu0 0.0
    %4815 = vmatprep.subr.mxu0 0.0
    %4816 = vmatpush1.msra.mxu0 0.0
    %4817 = vmatprep.subr.mxu0 0.0
    %4818 = vmatpush1.msra.mxu0 0.0
    %4819 = vmatprep.subr.mxu0 0.0
    %4820 = vmatpush1.msra.mxu0 0.0
    %4821 = vmatprep.subr.mxu0 0.0
    %4822 = vmatpush1.msra.mxu0 0.0
    %4823 = vmatprep.subr.mxu0 0.0
    %4824 = vmatpush1.msra.mxu0 0.0
    %4825 = vmatprep.subr.mxu0 0.0
    %4826 = vmatpush1.msra.mxu0 0.0
    %4827 = vmatprep.subr.mxu0 0.0
    %4828 = vmatpush1.msra.mxu0 0.0
    %4829 = vmatprep.subr.mxu0 0.0
    %4830 = vmatpush1.msra.mxu0 0.0
    %4831 = vmatprep.subr.mxu0 0.0
    %4832 = vmatpush1.msra.mxu0 0.0
    %4833 = vmatprep.subr.mxu0 0.0
    %4834 = vmatpush1.msra.mxu0 0.0
    %4835 = vmatprep.subr.mxu0 0.0
    %4836 = vmatpush1.msra.mxu0 0.0
    %4837 = vmatprep.subr.mxu0 0.0
    %4838 = vmatpush1.msra.mxu0 0.0
    %4839 = vmatprep.subr.mxu0 0.0
    %4840 = vmatpush1.msra.mxu0 0.0
    %4841 = vmatprep.subr.mxu0 0.0
    %4842 = vmatpush1.msra.mxu0 0.0
    %4843 = vmatprep.subr.mxu0 0.0
    %4844 = vmatpush1.msra.mxu0 0.0
    %4845 = vmatprep.subr.mxu0 0.0
    %4846 = vmatpush1.msra.mxu0 0.0
    %4847 = vmatprep.subr.mxu0 0.0
    %4848 = vmatpush1.msra.mxu0 0.0
    %4849 = vmatprep.subr.mxu0 0.0
    %4850 = vmatpush1.msra.mxu0 0.0
    %4851 = vmatprep.mubr.f32.mxu0 0.0
    %v4852 = vand.u32 %v4482, 4294901760
    %4853 = vmatmul.mubr.f32.gmra.mrb[0].mxu0 %v4852
    %v4854 = vpop.f32.mrb[0].mxu0
    %v4855 = vadd.f32 %v4781, %v4854
    %v4856 = vpop.f32.mrb[0].mxu0
    %4857 = vdwg.mxu0
    %4858 = vmatprep.subr.mxu0 0.0
    %v4859 = vand.u32 %v1714, 4294901760
    %4860 = vmatpush1.msra.mxu0 %v4859
    %4861 = vmatprep.subr.mxu0 0.0
    %4862 = vmatpush1.msra.mxu0 0.0
    %4863 = vmatprep.subr.mxu0 0.0
    %4864 = vmatpush1.msra.mxu0 0.0
    %4865 = vmatprep.subr.mxu0 0.0
    %4866 = vmatpush1.msra.mxu0 0.0
    %4867 = vmatprep.subr.mxu0 0.0
    %4868 = vmatpush1.msra.mxu0 0.0
    %4869 = vmatprep.subr.mxu0 0.0
    %4870 = vmatpush1.msra.mxu0 0.0
    %4871 = vmatprep.subr.mxu0 0.0
    %4872 = vmatpush1.msra.mxu0 0.0
    %4873 = vmatprep.subr.mxu0 0.0
    %4874 = vmatpush1.msra.mxu0 0.0
    %4875 = vmatprep.subr.mxu0 0.0
    %4876 = vmatpush1.msra.mxu0 0.0
    %4877 = vmatprep.subr.mxu0 0.0
    %4878 = vmatpush1.msra.mxu0 0.0
    %4879 = vmatprep.subr.mxu0 0.0
    %4880 = vmatpush1.msra.mxu0 0.0
    %4881 = vmatprep.subr.mxu0 0.0
    %4882 = vmatpush1.msra.mxu0 0.0
    %4883 = vmatprep.subr.mxu0 0.0
    %4884 = vmatpush1.msra.mxu0 0.0
    %4885 = vmatprep.subr.mxu0 0.0
    %4886 = vmatpush1.msra.mxu0 0.0
    %4887 = vmatprep.subr.mxu0 0.0
    %4888 = vmatpush1.msra.mxu0 0.0
    %4889 = vmatprep.subr.mxu0 0.0
    %4890 = vmatpush1.msra.mxu0 0.0
    %4891 = vmatprep.subr.mxu0 0.0
    %4892 = vmatpush1.msra.mxu0 0.0
    %4893 = vmatprep.subr.mxu0 0.0
    %4894 = vmatpush1.msra.mxu0 0.0
    %4895 = vmatprep.subr.mxu0 0.0
    %4896 = vmatpush1.msra.mxu0 0.0
    %4897 = vmatprep.subr.mxu0 0.0
    %4898 = vmatpush1.msra.mxu0 0.0
    %4899 = vmatprep.subr.mxu0 0.0
    %4900 = vmatpush1.msra.mxu0 0.0
    %4901 = vmatprep.subr.mxu0 0.0
    %4902 = vmatpush1.msra.mxu0 0.0
    %4903 = vmatprep.subr.mxu0 0.0
    %4904 = vmatpush1.msra.mxu0 0.0
    %4905 = vmatprep.subr.mxu0 0.0
    %4906 = vmatpush1.msra.mxu0 0.0
    %4907 = vmatprep.subr.mxu0 0.0
    %4908 = vmatpush1.msra.mxu0 0.0
    %4909 = vmatprep.subr.mxu0 0.0
    %4910 = vmatpush1.msra.mxu0 0.0
    %4911 = vmatprep.subr.mxu0 0.0
    %4912 = vmatpush1.msra.mxu0 0.0
    %4913 = vmatprep.subr.mxu0 0.0
    %4914 = vmatpush1.msra.mxu0 0.0
    %4915 = vmatprep.subr.mxu0 0.0
    %4916 = vmatpush1.msra.mxu0 0.0
    %4917 = vmatprep.subr.mxu0 0.0
    %4918 = vmatpush1.msra.mxu0 0.0
    %4919 = vmatprep.subr.mxu0 0.0
    %4920 = vmatpush1.msra.mxu0 0.0
    %4921 = vmatprep.subr.mxu0 0.0
    %4922 = vmatpush1.msra.mxu0 0.0
    %4923 = vmatprep.mubr.f32.mxu0 0.0
    %v4924 = vand.u32 %v4482, 4294901760
    %4925 = vmatmul.mubr.f32.gmra.mrb[0].mxu0 %v4924
    %v4926 = vpop.f32.mrb[0].mxu0
    %v4927 = vadd.f32 %v4855, %v4926
    %v4928 = vpop.f32.mrb[0].mxu0
    %4929 = vdwg.mxu0
    %v4931 = vsel %vm3538, %v3582, 0
    %4933 = vmatprep.subr.mxu0 0.0
    %v4934 = vand.u32 %v1735, 4294901760
    %4935 = vmatpush1.msra.mxu0 %v4934
    %4936 = vmatprep.subr.mxu0 0.0
    %4937 = vmatpush1.msra.mxu0 0.0
    %4938 = vmatprep.subr.mxu0 0.0
    %4939 = vmatpush1.msra.mxu0 0.0
    %4940 = vmatprep.subr.mxu0 0.0
    %4941 = vmatpush1.msra.mxu0 0.0
    %4942 = vmatprep.subr.mxu0 0.0
    %4943 = vmatpush1.msra.mxu0 0.0
    %4944 = vmatprep.subr.mxu0 0.0
    %4945 = vmatpush1.msra.mxu0 0.0
    %4946 = vmatprep.subr.mxu0 0.0
    %4947 = vmatpush1.msra.mxu0 0.0
    %4948 = vmatprep.subr.mxu0 0.0
    %4949 = vmatpush1.msra.mxu0 0.0
    %4950 = vmatprep.subr.mxu0 0.0
    %4951 = vmatpush1.msra.mxu0 0.0
    %4952 = vmatprep.subr.mxu0 0.0
    %4953 = vmatpush1.msra.mxu0 0.0
    %4954 = vmatprep.subr.mxu0 0.0
    %4955 = vmatpush1.msra.mxu0 0.0
    %4956 = vmatprep.subr.mxu0 0.0
    %4957 = vmatpush1.msra.mxu0 0.0
    %4958 = vmatprep.subr.mxu0 0.0
    %4959 = vmatpush1.msra.mxu0 0.0
    %4960 = vmatprep.subr.mxu0 0.0
    %4961 = vmatpush1.msra.mxu0 0.0
    %4962 = vmatprep.subr.mxu0 0.0
    %4963 = vmatpush1.msra.mxu0 0.0
    %4964 = vmatprep.subr.mxu0 0.0
    %4965 = vmatpush1.msra.mxu0 0.0
    %4966 = vmatprep.subr.mxu0 0.0
    %4967 = vmatpush1.msra.mxu0 0.0
    %4968 = vmatprep.subr.mxu0 0.0
    %4969 = vmatpush1.msra.mxu0 0.0
    %4970 = vmatprep.subr.mxu0 0.0
    %4971 = vmatpush1.msra.mxu0 0.0
    %4972 = vmatprep.subr.mxu0 0.0
    %4973 = vmatpush1.msra.mxu0 0.0
    %4974 = vmatprep.subr.mxu0 0.0
    %4975 = vmatpush1.msra.mxu0 0.0
    %4976 = vmatprep.subr.mxu0 0.0
    %4977 = vmatpush1.msra.mxu0 0.0
    %4978 = vmatprep.subr.mxu0 0.0
    %4979 = vmatpush1.msra.mxu0 0.0
    %4980 = vmatprep.subr.mxu0 0.0
    %4981 = vmatpush1.msra.mxu0 0.0
    %4982 = vmatprep.subr.mxu0 0.0
    %4983 = vmatpush1.msra.mxu0 0.0
    %4984 = vmatprep.subr.mxu0 0.0
    %4985 = vmatpush1.msra.mxu0 0.0
    %4986 = vmatprep.subr.mxu0 0.0
    %4987 = vmatpush1.msra.mxu0 0.0
    %4988 = vmatprep.subr.mxu0 0.0
    %4989 = vmatpush1.msra.mxu0 0.0
    %4990 = vmatprep.subr.mxu0 0.0
    %4991 = vmatpush1.msra.mxu0 0.0
    %4992 = vmatprep.subr.mxu0 0.0
    %4993 = vmatpush1.msra.mxu0 0.0
    %4994 = vmatprep.subr.mxu0 0.0
    %4995 = vmatpush1.msra.mxu0 0.0
    %4996 = vmatprep.subr.mxu0 0.0
    %4997 = vmatpush1.msra.mxu0 0.0
    %4998 = vmatprep.mubr.f32.mxu0 0.0
    %v4999 = vand.u32 %v4931, 4294901760
    %v5000 = vsub.f32 %v4931, %v4999
    %v5001 = vand.u32 %v5000, 4294901760
    %v5002 = vsub.f32 %v5000, %v5001
    %v5003 = vand.u32 %v5002, 4294901760
    %5004 = vmatmul.mubr.f32.gmra.mrb[0].mxu0 %v5003
    %v5005 = vpop.f32.mrb[0].mxu0
    %v5006 = vadd.f32 0.0, %v5005
    %v5007 = vpop.f32.mrb[0].mxu0
    %5008 = vdwg.mxu0
    %5009 = vmatprep.subr.mxu0 0.0
    %v5010 = vand.u32 %v1735, 4294901760
    %v5011 = vsub.f32 %v1735, %v5010
    %v5012 = vand.u32 %v5011, 4294901760
    %v5013 = vsub.f32 %v5011, %v5012
    %v5014 = vand.u32 %v5013, 4294901760
    %5015 = vmatpush1.msra.mxu0 %v5014
    %5016 = vmatprep.subr.mxu0 0.0
    %5017 = vmatpush1.msra.mxu0 0.0
    %5018 = vmatprep.subr.mxu0 0.0
    %5019 = vmatpush1.msra.mxu0 0.0
    %5020 = vmatprep.subr.mxu0 0.0
    %5021 = vmatpush1.msra.mxu0 0.0
    %5022 = vmatprep.subr.mxu0 0.0
    %5023 = vmatpush1.msra.mxu0 0.0
    %5024 = vmatprep.subr.mxu0 0.0
    %5025 = vmatpush1.msra.mxu0 0.0
    %5026 = vmatprep.subr.mxu0 0.0
    %5027 = vmatpush1.msra.mxu0 0.0
    %5028 = vmatprep.subr.mxu0 0.0
    %5029 = vmatpush1.msra.mxu0 0.0
    %5030 = vmatprep.subr.mxu0 0.0
    %5031 = vmatpush1.msra.mxu0 0.0
    %5032 = vmatprep.subr.mxu0 0.0
    %5033 = vmatpush1.msra.mxu0 0.0
    %5034 = vmatprep.subr.mxu0 0.0
    %5035 = vmatpush1.msra.mxu0 0.0
    %5036 = vmatprep.subr.mxu0 0.0
    %5037 = vmatpush1.msra.mxu0 0.0
    %5038 = vmatprep.subr.mxu0 0.0
    %5039 = vmatpush1.msra.mxu0 0.0
    %5040 = vmatprep.subr.mxu0 0.0
    %5041 = vmatpush1.msra.mxu0 0.0
    %5042 = vmatprep.subr.mxu0 0.0
    %5043 = vmatpush1.msra.mxu0 0.0
    %5044 = vmatprep.subr.mxu0 0.0
    %5045 = vmatpush1.msra.mxu0 0.0
    %5046 = vmatprep.subr.mxu0 0.0
    %5047 = vmatpush1.msra.mxu0 0.0
    %5048 = vmatprep.subr.mxu0 0.0
    %5049 = vmatpush1.msra.mxu0 0.0
    %5050 = vmatprep.subr.mxu0 0.0
    %5051 = vmatpush1.msra.mxu0 0.0
    %5052 = vmatprep.subr.mxu0 0.0
    %5053 = vmatpush1.msra.mxu0 0.0
    %5054 = vmatprep.subr.mxu0 0.0
    %5055 = vmatpush1.msra.mxu0 0.0
    %5056 = vmatprep.subr.mxu0 0.0
    %5057 = vmatpush1.msra.mxu0 0.0
    %5058 = vmatprep.subr.mxu0 0.0
    %5059 = vmatpush1.msra.mxu0 0.0
    %5060 = vmatprep.subr.mxu0 0.0
    %5061 = vmatpush1.msra.mxu0 0.0
    %5062 = vmatprep.subr.mxu0 0.0
    %5063 = vmatpush1.msra.mxu0 0.0
    %5064 = vmatprep.subr.mxu0 0.0
    %5065 = vmatpush1.msra.mxu0 0.0
    %5066 = vmatprep.subr.mxu0 0.0
    %5067 = vmatpush1.msra.mxu0 0.0
    %5068 = vmatprep.subr.mxu0 0.0
    %5069 = vmatpush1.msra.mxu0 0.0
    %5070 = vmatprep.subr.mxu0 0.0
    %5071 = vmatpush1.msra.mxu0 0.0
    %5072 = vmatprep.subr.mxu0 0.0
    %5073 = vmatpush1.msra.mxu0 0.0
    %5074 = vmatprep.subr.mxu0 0.0
    %5075 = vmatpush1.msra.mxu0 0.0
    %5076 = vmatprep.subr.mxu0 0.0
    %5077 = vmatpush1.msra.mxu0 0.0
    %5078 = vmatprep.mubr.f32.mxu0 0.0
    %v5079 = vand.u32 %v4931, 4294901760
    %5080 = vmatmul.mubr.f32.gmra.mrb[0].mxu0 %v5079
    %v5081 = vpop.f32.mrb[0].mxu0
    %v5082 = vadd.f32 %v5006, %v5081
    %v5083 = vpop.f32.mrb[0].mxu0
    %5084 = vdwg.mxu0
    %5085 = vmatprep.subr.mxu0 0.0
    %v5086 = vand.u32 %v1735, 4294901760
    %v5087 = vsub.f32 %v1735, %v5086
    %5088 = vmatpush1.msra.mxu0 %v5087
    %5089 = vmatprep.subr.mxu0 0.0
    %5090 = vmatpush1.msra.mxu0 0.0
    %5091 = vmatprep.subr.mxu0 0.0
    %5092 = vmatpush1.msra.mxu0 0.0
    %5093 = vmatprep.subr.mxu0 0.0
    %5094 = vmatpush1.msra.mxu0 0.0
    %5095 = vmatprep.subr.mxu0 0.0
    %5096 = vmatpush1.msra.mxu0 0.0
    %5097 = vmatprep.subr.mxu0 0.0
    %5098 = vmatpush1.msra.mxu0 0.0
    %5099 = vmatprep.subr.mxu0 0.0
    %5100 = vmatpush1.msra.mxu0 0.0
    %5101 = vmatprep.subr.mxu0 0.0
    %5102 = vmatpush1.msra.mxu0 0.0
    %5103 = vmatprep.subr.mxu0 0.0
    %5104 = vmatpush1.msra.mxu0 0.0
    %5105 = vmatprep.subr.mxu0 0.0
    %5106 = vmatpush1.msra.mxu0 0.0
    %5107 = vmatprep.subr.mxu0 0.0
    %5108 = vmatpush1.msra.mxu0 0.0
    %5109 = vmatprep.subr.mxu0 0.0
    %5110 = vmatpush1.msra.mxu0 0.0
    %5111 = vmatprep.subr.mxu0 0.0
    %5112 = vmatpush1.msra.mxu0 0.0
    %5113 = vmatprep.subr.mxu0 0.0
    %5114 = vmatpush1.msra.mxu0 0.0
    %5115 = vmatprep.subr.mxu0 0.0
    %5116 = vmatpush1.msra.mxu0 0.0
    %5117 = vmatprep.subr.mxu0 0.0
    %5118 = vmatpush1.msra.mxu0 0.0
    %5119 = vmatprep.subr.mxu0 0.0
    %5120 = vmatpush1.msra.mxu0 0.0
    %5121 = vmatprep.subr.mxu0 0.0
    %5122 = vmatpush1.msra.mxu0 0.0
    %5123 = vmatprep.subr.mxu0 0.0
    %5124 = vmatpush1.msra.mxu0 0.0
    %5125 = vmatprep.subr.mxu0 0.0
    %5126 = vmatpush1.msra.mxu0 0.0
    %5127 = vmatprep.subr.mxu0 0.0
    %5128 = vmatpush1.msra.mxu0 0.0
    %5129 = vmatprep.subr.mxu0 0.0
    %5130 = vmatpush1.msra.mxu0 0.0
    %5131 = vmatprep.subr.mxu0 0.0
    %5132 = vmatpush1.msra.mxu0 0.0
    %5133 = vmatprep.subr.mxu0 0.0
    %5134 = vmatpush1.msra.mxu0 0.0
    %5135 = vmatprep.subr.mxu0 0.0
    %5136 = vmatpush1.msra.mxu0 0.0
    %5137 = vmatprep.subr.mxu0 0.0
    %5138 = vmatpush1.msra.mxu0 0.0
    %5139 = vmatprep.subr.mxu0 0.0
    %5140 = vmatpush1.msra.mxu0 0.0
    %5141 = vmatprep.subr.mxu0 0.0
    %5142 = vmatpush1.msra.mxu0 0.0
    %5143 = vmatprep.subr.mxu0 0.0
    %5144 = vmatpush1.msra.mxu0 0.0
    %5145 = vmatprep.subr.mxu0 0.0
    %5146 = vmatpush1.msra.mxu0 0.0
    %5147 = vmatprep.subr.mxu0 0.0
    %5148 = vmatpush1.msra.mxu0 0.0
    %5149 = vmatprep.subr.mxu0 0.0
    %5150 = vmatpush1.msra.mxu0 0.0
    %5151 = vmatprep.mubr.f32.mxu0 0.0
    %v5152 = vand.u32 %v4931, 4294901760
    %v5153 = vsub.f32 %v4931, %v5152
    %5154 = vmatmul.mubr.f32.gmra.mrb[0].mxu0 %v5153
    %v5155 = vpop.f32.mrb[0].mxu0
    %v5156 = vadd.f32 %v5082, %v5155
    %v5157 = vpop.f32.mrb[0].mxu0
    %5158 = vdwg.mxu0
    %5159 = vmatprep.subr.mxu0 0.0
    %v5160 = vand.u32 %v1735, 4294901760
    %5161 = vmatpush1.msra.mxu0 %v5160
    %5162 = vmatprep.subr.mxu0 0.0
    %5163 = vmatpush1.msra.mxu0 0.0
    %5164 = vmatprep.subr.mxu0 0.0
    %5165 = vmatpush1.msra.mxu0 0.0
    %5166 = vmatprep.subr.mxu0 0.0
    %5167 = vmatpush1.msra.mxu0 0.0
    %5168 = vmatprep.subr.mxu0 0.0
    %5169 = vmatpush1.msra.mxu0 0.0
    %5170 = vmatprep.subr.mxu0 0.0
    %5171 = vmatpush1.msra.mxu0 0.0
    %5172 = vmatprep.subr.mxu0 0.0
    %5173 = vmatpush1.msra.mxu0 0.0
    %5174 = vmatprep.subr.mxu0 0.0
    %5175 = vmatpush1.msra.mxu0 0.0
    %5176 = vmatprep.subr.mxu0 0.0
    %5177 = vmatpush1.msra.mxu0 0.0
    %5178 = vmatprep.subr.mxu0 0.0
    %5179 = vmatpush1.msra.mxu0 0.0
    %5180 = vmatprep.subr.mxu0 0.0
    %5181 = vmatpush1.msra.mxu0 0.0
    %5182 = vmatprep.subr.mxu0 0.0
    %5183 = vmatpush1.msra.mxu0 0.0
    %5184 = vmatprep.subr.mxu0 0.0
    %5185 = vmatpush1.msra.mxu0 0.0
    %5186 = vmatprep.subr.mxu0 0.0
    %5187 = vmatpush1.msra.mxu0 0.0
    %5188 = vmatprep.subr.mxu0 0.0
    %5189 = vmatpush1.msra.mxu0 0.0
    %5190 = vmatprep.subr.mxu0 0.0
    %5191 = vmatpush1.msra.mxu0 0.0
    %5192 = vmatprep.subr.mxu0 0.0
    %5193 = vmatpush1.msra.mxu0 0.0
    %5194 = vmatprep.subr.mxu0 0.0
    %5195 = vmatpush1.msra.mxu0 0.0
    %5196 = vmatprep.subr.mxu0 0.0
    %5197 = vmatpush1.msra.mxu0 0.0
    %5198 = vmatprep.subr.mxu0 0.0
    %5199 = vmatpush1.msra.mxu0 0.0
    %5200 = vmatprep.subr.mxu0 0.0
    %5201 = vmatpush1.msra.mxu0 0.0
    %5202 = vmatprep.subr.mxu0 0.0
    %5203 = vmatpush1.msra.mxu0 0.0
    %5204 = vmatprep.subr.mxu0 0.0
    %5205 = vmatpush1.msra.mxu0 0.0
    %5206 = vmatprep.subr.mxu0 0.0
    %5207 = vmatpush1.msra.mxu0 0.0
    %5208 = vmatprep.subr.mxu0 0.0
    %5209 = vmatpush1.msra.mxu0 0.0
    %5210 = vmatprep.subr.mxu0 0.0
    %5211 = vmatpush1.msra.mxu0 0.0
    %5212 = vmatprep.subr.mxu0 0.0
    %5213 = vmatpush1.msra.mxu0 0.0
    %5214 = vmatprep.subr.mxu0 0.0
    %5215 = vmatpush1.msra.mxu0 0.0
    %5216 = vmatprep.subr.mxu0 0.0
    %5217 = vmatpush1.msra.mxu0 0.0
    %5218 = vmatprep.subr.mxu0 0.0
    %5219 = vmatpush1.msra.mxu0 0.0
    %5220 = vmatprep.subr.mxu0 0.0
    %5221 = vmatpush1.msra.mxu0 0.0
    %5222 = vmatprep.subr.mxu0 0.0
    %5223 = vmatpush1.msra.mxu0 0.0
    %5224 = vmatprep.mubr.f32.mxu0 0.0
    %v5225 = vand.u32 %v4931, 4294901760
    %v5226 = vsub.f32 %v4931, %v5225
    %v5227 = vand.u32 %v5226, 4294901760
    %5228 = vmatmul.mubr.f32.gmra.mrb[0].mxu0 %v5227
    %v5229 = vpop.f32.mrb[0].mxu0
    %v5230 = vadd.f32 %v5156, %v5229
    %v5231 = vpop.f32.mrb[0].mxu0
    %5232 = vdwg.mxu0
    %5233 = vmatprep.subr.mxu0 0.0
    %v5234 = vand.u32 %v1735, 4294901760
    %v5235 = vsub.f32 %v1735, %v5234
    %v5236 = vand.u32 %v5235, 4294901760
    %5237 = vmatpush1.msra.mxu0 %v5236
    %5238 = vmatprep.subr.mxu0 0.0
    %5239 = vmatpush1.msra.mxu0 0.0
    %5240 = vmatprep.subr.mxu0 0.0
    %5241 = vmatpush1.msra.mxu0 0.0
    %5242 = vmatprep.subr.mxu0 0.0
    %5243 = vmatpush1.msra.mxu0 0.0
    %5244 = vmatprep.subr.mxu0 0.0
    %5245 = vmatpush1.msra.mxu0 0.0
    %5246 = vmatprep.subr.mxu0 0.0
    %5247 = vmatpush1.msra.mxu0 0.0
    %5248 = vmatprep.subr.mxu0 0.0
    %5249 = vmatpush1.msra.mxu0 0.0
    %5250 = vmatprep.subr.mxu0 0.0
    %5251 = vmatpush1.msra.mxu0 0.0
    %5252 = vmatprep.subr.mxu0 0.0
    %5253 = vmatpush1.msra.mxu0 0.0
    %5254 = vmatprep.subr.mxu0 0.0
    %5255 = vmatpush1.msra.mxu0 0.0
    %5256 = vmatprep.subr.mxu0 0.0
    %5257 = vmatpush1.msra.mxu0 0.0
    %5258 = vmatprep.subr.mxu0 0.0
    %5259 = vmatpush1.msra.mxu0 0.0
    %5260 = vmatprep.subr.mxu0 0.0
    %5261 = vmatpush1.msra.mxu0 0.0
    %5262 = vmatprep.subr.mxu0 0.0
    %5263 = vmatpush1.msra.mxu0 0.0
    %5264 = vmatprep.subr.mxu0 0.0
    %5265 = vmatpush1.msra.mxu0 0.0
    %5266 = vmatprep.subr.mxu0 0.0
    %5267 = vmatpush1.msra.mxu0 0.0
    %5268 = vmatprep.subr.mxu0 0.0
    %5269 = vmatpush1.msra.mxu0 0.0
    %5270 = vmatprep.subr.mxu0 0.0
    %5271 = vmatpush1.msra.mxu0 0.0
    %5272 = vmatprep.subr.mxu0 0.0
    %5273 = vmatpush1.msra.mxu0 0.0
    %5274 = vmatprep.subr.mxu0 0.0
    %5275 = vmatpush1.msra.mxu0 0.0
    %5276 = vmatprep.subr.mxu0 0.0
    %5277 = vmatpush1.msra.mxu0 0.0
    %5278 = vmatprep.subr.mxu0 0.0
    %5279 = vmatpush1.msra.mxu0 0.0
    %5280 = vmatprep.subr.mxu0 0.0
    %5281 = vmatpush1.msra.mxu0 0.0
    %5282 = vmatprep.subr.mxu0 0.0
    %5283 = vmatpush1.msra.mxu0 0.0
    %5284 = vmatprep.subr.mxu0 0.0
    %5285 = vmatpush1.msra.mxu0 0.0
    %5286 = vmatprep.subr.mxu0 0.0
    %5287 = vmatpush1.msra.mxu0 0.0
    %5288 = vmatprep.subr.mxu0 0.0
    %5289 = vmatpush1.msra.mxu0 0.0
    %5290 = vmatprep.subr.mxu0 0.0
    %5291 = vmatpush1.msra.mxu0 0.0
    %5292 = vmatprep.subr.mxu0 0.0
    %5293 = vmatpush1.msra.mxu0 0.0
    %5294 = vmatprep.subr.mxu0 0.0
    %5295 = vmatpush1.msra.mxu0 0.0
    %5296 = vmatprep.subr.mxu0 0.0
    %5297 = vmatpush1.msra.mxu0 0.0
    %5298 = vmatprep.subr.mxu0 0.0
    %5299 = vmatpush1.msra.mxu0 0.0
    %5300 = vmatprep.mubr.f32.mxu0 0.0
    %v5301 = vand.u32 %v4931, 4294901760
    %5302 = vmatmul.mubr.f32.gmra.mrb[0].mxu0 %v5301
    %v5303 = vpop.f32.mrb[0].mxu0
    %v5304 = vadd.f32 %v5230, %v5303
    %v5305 = vpop.f32.mrb[0].mxu0
    %5306 = vdwg.mxu0
    %5307 = vmatprep.subr.mxu0 0.0
    %v5308 = vand.u32 %v1735, 4294901760
    %5309 = vmatpush1.msra.mxu0 %v5308
    %5310 = vmatprep.subr.mxu0 0.0
    %5311 = vmatpush1.msra.mxu0 0.0
    %5312 = vmatprep.subr.mxu0 0.0
    %5313 = vmatpush1.msra.mxu0 0.0
    %5314 = vmatprep.subr.mxu0 0.0
    %5315 = vmatpush1.msra.mxu0 0.0
    %5316 = vmatprep.subr.mxu0 0.0
    %5317 = vmatpush1.msra.mxu0 0.0
    %5318 = vmatprep.subr.mxu0 0.0
    %5319 = vmatpush1.msra.mxu0 0.0
    %5320 = vmatprep.subr.mxu0 0.0
    %5321 = vmatpush1.msra.mxu0 0.0
    %5322 = vmatprep.subr.mxu0 0.0
    %5323 = vmatpush1.msra.mxu0 0.0
    %5324 = vmatprep.subr.mxu0 0.0
    %5325 = vmatpush1.msra.mxu0 0.0
    %5326 = vmatprep.subr.mxu0 0.0
    %5327 = vmatpush1.msra.mxu0 0.0
    %5328 = vmatprep.subr.mxu0 0.0
    %5329 = vmatpush1.msra.mxu0 0.0
    %5330 = vmatprep.subr.mxu0 0.0
    %5331 = vmatpush1.msra.mxu0 0.0
    %5332 = vmatprep.subr.mxu0 0.0
    %5333 = vmatpush1.msra.mxu0 0.0
    %5334 = vmatprep.subr.mxu0 0.0
    %5335 = vmatpush1.msra.mxu0 0.0
    %5336 = vmatprep.subr.mxu0 0.0
    %5337 = vmatpush1.msra.mxu0 0.0
    %5338 = vmatprep.subr.mxu0 0.0
    %5339 = vmatpush1.msra.mxu0 0.0
    %5340 = vmatprep.subr.mxu0 0.0
    %5341 = vmatpush1.msra.mxu0 0.0
    %5342 = vmatprep.subr.mxu0 0.0
    %5343 = vmatpush1.msra.mxu0 0.0
    %5344 = vmatprep.subr.mxu0 0.0
    %5345 = vmatpush1.msra.mxu0 0.0
    %5346 = vmatprep.subr.mxu0 0.0
    %5347 = vmatpush1.msra.mxu0 0.0
    %5348 = vmatprep.subr.mxu0 0.0
    %5349 = vmatpush1.msra.mxu0 0.0
    %5350 = vmatprep.subr.mxu0 0.0
    %5351 = vmatpush1.msra.mxu0 0.0
    %5352 = vmatprep.subr.mxu0 0.0
    %5353 = vmatpush1.msra.mxu0 0.0
    %5354 = vmatprep.subr.mxu0 0.0
    %5355 = vmatpush1.msra.mxu0 0.0
    %5356 = vmatprep.subr.mxu0 0.0
    %5357 = vmatpush1.msra.mxu0 0.0
    %5358 = vmatprep.subr.mxu0 0.0
    %5359 = vmatpush1.msra.mxu0 0.0
    %5360 = vmatprep.subr.mxu0 0.0
    %5361 = vmatpush1.msra.mxu0 0.0
    %5362 = vmatprep.subr.mxu0 0.0
    %5363 = vmatpush1.msra.mxu0 0.0
    %5364 = vmatprep.subr.mxu0 0.0
    %5365 = vmatpush1.msra.mxu0 0.0
    %5366 = vmatprep.subr.mxu0 0.0
    %5367 = vmatpush1.msra.mxu0 0.0
    %5368 = vmatprep.subr.mxu0 0.0
    %5369 = vmatpush1.msra.mxu0 0.0
    %5370 = vmatprep.subr.mxu0 0.0
    %5371 = vmatpush1.msra.mxu0 0.0
    %5372 = vmatprep.mubr.f32.mxu0 0.0
    %v5373 = vand.u32 %v4931, 4294901760
    %5374 = vmatmul.mubr.f32.gmra.mrb[0].mxu0 %v5373
    %v5375 = vpop.f32.mrb[0].mxu0
    %v5376 = vadd.f32 %v5304, %v5375
    %v5377 = vpop.f32.mrb[0].mxu0
    %5378 = vdwg.mxu0
    %5379 = vst.msk [vmem:[#allocation2] sm:$0xff] %vm1737, %v4029
    %5381 = vrot.lane.b32.xlu0 %v4478, 64
    %v5382 = vpop.permute.xlu0 %5381
    %vm5384 = vcmask 1048064
    %5385 = vst.msk [vmem:[#allocation2] sm:$0xff] %vm5384, %v5382
    %5386 = vst.msk [vmem:[#allocation2 + $0x8] sm:$0xff] %vm1737, %v4927
    %5388 = vrot.lane.b32.xlu0 %v5376, 64
    %v5389 = vpop.permute.xlu0 %5388
    %5391 = vst.msk [vmem:[#allocation2 + $0x8] sm:$0xff] %vm5384, %v5389
    %v5392 = vld [vmem:[#allocation2] sm:$0xff]
    %v5393 = vld [vmem:[#allocation2 + $0x8] sm:$0xff]
    %v5394 = vld [vmem:[#allocation8] sm:$0xff]
    %v5395 = vld [vmem:[#allocation8 + $0x8] sm:$0xff]
    %v5396 = vld [vmem:[#allocation8 + $0x10] sm:$0xff]
    %v5397 = vld [vmem:[#allocation8 + $0x18] sm:$0xff]
    %v5398 = vld [vmem:[#allocation8 + $0x20] sm:$0xff]
    %v5399 = vld [vmem:[#allocation8 + $0x28] sm:$0xff]
    %v5400 = vld [vmem:[#allocation8 + $0x30] sm:$0xff]
    %v5401 = vld [vmem:[#allocation8 + $0x38] sm:$0xff]
    %v5402 = vld [vmem:[#allocation8 + $0x40] sm:$0xff]
    %v5403 = vld [vmem:[#allocation8 + $0x48] sm:$0xff]
    %v5404 = vld [vmem:[#allocation8 + $0x50] sm:$0xff]
    %v5405 = vld [vmem:[#allocation8 + $0x58] sm:$0xff]
    %v5406 = vld [vmem:[#allocation8 + $0x60] sm:$0xff]
    %v5407 = vld [vmem:[#allocation8 + $0x68] sm:$0xff]
    %v5408 = vld [vmem:[#allocation8 + $0x70] sm:$0xff]
    %v5409 = vld [vmem:[#allocation8 + $0x78] sm:$0xff]
    %v5410 = vld [vmem:[%s4] sm:$0x1]
    %v5412 = vlaneseq
    %v5413 = vshrl.u32 %v5412, 7
    %v5414 = vsub.s32 0, %v5413
    %v5415 = vrot.slane %v5410, %v5414
    %5417 = vmatprep.subr.mxu0 0.0
    %v5418 = vand.u32 %v5394, 4294901760
    %5419 = vmatpush1.msra.mxu0 %v5418
    %5420 = vmatprep.subr.mxu0 0.0
    %v5421 = vand.u32 %v5395, 4294901760
    %5422 = vmatpush1.msra.mxu0 %v5421
    %5423 = vmatprep.subr.mxu0 0.0
    %v5424 = vand.u32 %v5396, 4294901760
    %5425 = vmatpush1.msra.mxu0 %v5424
    %5426 = vmatprep.subr.mxu0 0.0
    %v5427 = vand.u32 %v5397, 4294901760
    %5428 = vmatpush1.msra.mxu0 %v5427
    %5429 = vmatprep.subr.mxu0 0.0
    %v5430 = vand.u32 %v5398, 4294901760
    %5431 = vmatpush1.msra.mxu0 %v5430
    %5432 = vmatprep.subr.mxu0 0.0
    %v5433 = vand.u32 %v5399, 4294901760
    %5434 = vmatpush1.msra.mxu0 %v5433
    %5435 = vmatprep.subr.mxu0 0.0
    %v5436 = vand.u32 %v5400, 4294901760
    %5437 = vmatpush1.msra.mxu0 %v5436
    %5438 = vmatprep.subr.mxu0 0.0
    %v5439 = vand.u32 %v5401, 4294901760
    %5440 = vmatpush1.msra.mxu0 %v5439
    %5441 = vmatprep.subr.mxu0 0.0
    %v5442 = vand.u32 %v5402, 4294901760
    %5443 = vmatpush1.msra.mxu0 %v5442
    %5444 = vmatprep.subr.mxu0 0.0
    %v5445 = vand.u32 %v5403, 4294901760
    %5446 = vmatpush1.msra.mxu0 %v5445
    %5447 = vmatprep.subr.mxu0 0.0
    %v5448 = vand.u32 %v5404, 4294901760
    %5449 = vmatpush1.msra.mxu0 %v5448
    %5450 = vmatprep.subr.mxu0 0.0
    %v5451 = vand.u32 %v5405, 4294901760
    %5452 = vmatpush1.msra.mxu0 %v5451
    %5453 = vmatprep.subr.mxu0 0.0
    %v5454 = vand.u32 %v5406, 4294901760
    %5455 = vmatpush1.msra.mxu0 %v5454
    %5456 = vmatprep.subr.mxu0 0.0
    %v5457 = vand.u32 %v5407, 4294901760
    %5458 = vmatpush1.msra.mxu0 %v5457
    %5459 = vmatprep.subr.mxu0 0.0
    %v5460 = vand.u32 %v5408, 4294901760
    %5461 = vmatpush1.msra.mxu0 %v5460
    %5462 = vmatprep.subr.mxu0 0.0
    %v5463 = vand.u32 %v5409, 4294901760
    %5464 = vmatpush1.msra.mxu0 %v5463
    %5465 = vmatprep.subr.mxu0 0.0
    %5466 = vmatpush1.msra.mxu0 0.0
    %5467 = vmatprep.subr.mxu0 0.0
    %5468 = vmatpush1.msra.mxu0 0.0
    %5469 = vmatprep.subr.mxu0 0.0
    %5470 = vmatpush1.msra.mxu0 0.0
    %5471 = vmatprep.subr.mxu0 0.0
    %5472 = vmatpush1.msra.mxu0 0.0
    %5473 = vmatprep.subr.mxu0 0.0
    %5474 = vmatpush1.msra.mxu0 0.0
    %5475 = vmatprep.subr.mxu0 0.0
    %5476 = vmatpush1.msra.mxu0 0.0
    %5477 = vmatprep.subr.mxu0 0.0
    %5478 = vmatpush1.msra.mxu0 0.0
    %5479 = vmatprep.subr.mxu0 0.0
    %5480 = vmatpush1.msra.mxu0 0.0
    %5481 = vmatprep.subr.mxu0 0.0
    %5482 = vmatpush1.msra.mxu0 0.0
    %5483 = vmatprep.subr.mxu0 0.0
    %5484 = vmatpush1.msra.mxu0 0.0
    %5485 = vmatprep.subr.mxu0 0.0
    %5486 = vmatpush1.msra.mxu0 0.0
    %5487 = vmatprep.subr.mxu0 0.0
    %5488 = vmatpush1.msra.mxu0 0.0
    %5489 = vmatprep.subr.mxu0 0.0
    %5490 = vmatpush1.msra.mxu0 0.0
    %5491 = vmatprep.subr.mxu0 0.0
    %5492 = vmatpush1.msra.mxu0 0.0
    %5493 = vmatprep.subr.mxu0 0.0
    %5494 = vmatpush1.msra.mxu0 0.0
    %5495 = vmatprep.subr.mxu0 0.0
    %5496 = vmatpush1.msra.mxu0 0.0
    %5497 = vmatprep.mubr.f32.mxu0 0.0
    %v5498 = vand.u32 %v5392, 4294901760
    %v5499 = vsub.f32 %v5392, %v5498
    %v5500 = vand.u32 %v5499, 4294901760
    %v5501 = vsub.f32 %v5499, %v5500
    %v5502 = vand.u32 %v5501, 4294901760
    %5503 = vmatmul.mubr.f32.gmra.mrb[0].mxu0 %v5502
    %v5504 = vpop.f32.mrb[0].mxu0
    %v5505 = vadd.f32 %v5415, %v5504
    %v5506 = vpop.f32.mrb[0].mxu0
    %5507 = vmatprep.mubr.f32.mxu0 0.0
    %v5508 = vand.u32 %v5393, 4294901760
    %v5509 = vsub.f32 %v5393, %v5508
    %v5510 = vand.u32 %v5509, 4294901760
    %v5511 = vsub.f32 %v5509, %v5510
    %v5512 = vand.u32 %v5511, 4294901760
    %5513 = vmatmul.mubr.f32.gmra.mrb[0].mxu0 %v5512
    %v5514 = vpop.f32.mrb[0].mxu0
    %v5515 = vadd.f32 %v5415, %v5514
    %v5516 = vpop.f32.mrb[0].mxu0
    %5517 = vdwg.mxu0
    %5518 = vmatprep.subr.mxu0 0.0
    %v5519 = vand.u32 %v5394, 4294901760
    %v5520 = vsub.f32 %v5394, %v5519
    %v5521 = vand.u32 %v5520, 4294901760
    %v5522 = vsub.f32 %v5520, %v5521
    %v5523 = vand.u32 %v5522, 4294901760
    %5524 = vmatpush1.msra.mxu0 %v5523
    %5525 = vmatprep.subr.mxu0 0.0
    %v5526 = vand.u32 %v5395, 4294901760
    %v5527 = vsub.f32 %v5395, %v5526
    %v5528 = vand.u32 %v5527, 4294901760
    %v5529 = vsub.f32 %v5527, %v5528
    %v5530 = vand.u32 %v5529, 4294901760
    %5531 = vmatpush1.msra.mxu0 %v5530
    %5532 = vmatprep.subr.mxu0 0.0
    %v5533 = vand.u32 %v5396, 4294901760
    %v5534 = vsub.f32 %v5396, %v5533
    %v5535 = vand.u32 %v5534, 4294901760
    %v5536 = vsub.f32 %v5534, %v5535
    %v5537 = vand.u32 %v5536, 4294901760
    %5538 = vmatpush1.msra.mxu0 %v5537
    %5539 = vmatprep.subr.mxu0 0.0
    %v5540 = vand.u32 %v5397, 4294901760
    %v5541 = vsub.f32 %v5397, %v5540
    %v5542 = vand.u32 %v5541, 4294901760
    %v5543 = vsub.f32 %v5541, %v5542
    %v5544 = vand.u32 %v5543, 4294901760
    %5545 = vmatpush1.msra.mxu0 %v5544
    %5546 = vmatprep.subr.mxu0 0.0
    %v5547 = vand.u32 %v5398, 4294901760
    %v5548 = vsub.f32 %v5398, %v5547
    %v5549 = vand.u32 %v5548, 4294901760
    %v5550 = vsub.f32 %v5548, %v5549
    %v5551 = vand.u32 %v5550, 4294901760
    %5552 = vmatpush1.msra.mxu0 %v5551
    %5553 = vmatprep.subr.mxu0 0.0
    %v5554 = vand.u32 %v5399, 4294901760
    %v5555 = vsub.f32 %v5399, %v5554
    %v5556 = vand.u32 %v5555, 4294901760
    %v5557 = vsub.f32 %v5555, %v5556
    %v5558 = vand.u32 %v5557, 4294901760
    %5559 = vmatpush1.msra.mxu0 %v5558
    %5560 = vmatprep.subr.mxu0 0.0
    %v5561 = vand.u32 %v5400, 4294901760
    %v5562 = vsub.f32 %v5400, %v5561
    %v5563 = vand.u32 %v5562, 4294901760
    %v5564 = vsub.f32 %v5562, %v5563
    %v5565 = vand.u32 %v5564, 4294901760
    %5566 = vmatpush1.msra.mxu0 %v5565
    %5567 = vmatprep.subr.mxu0 0.0
    %v5568 = vand.u32 %v5401, 4294901760
    %v5569 = vsub.f32 %v5401, %v5568
    %v5570 = vand.u32 %v5569, 4294901760
    %v5571 = vsub.f32 %v5569, %v5570
    %v5572 = vand.u32 %v5571, 4294901760
    %5573 = vmatpush1.msra.mxu0 %v5572
    %5574 = vmatprep.subr.mxu0 0.0
    %v5575 = vand.u32 %v5402, 4294901760
    %v5576 = vsub.f32 %v5402, %v5575
    %v5577 = vand.u32 %v5576, 4294901760
    %v5578 = vsub.f32 %v5576, %v5577
    %v5579 = vand.u32 %v5578, 4294901760
    %5580 = vmatpush1.msra.mxu0 %v5579
    %5581 = vmatprep.subr.mxu0 0.0
    %v5582 = vand.u32 %v5403, 4294901760
    %v5583 = vsub.f32 %v5403, %v5582
    %v5584 = vand.u32 %v5583, 4294901760
    %v5585 = vsub.f32 %v5583, %v5584
    %v5586 = vand.u32 %v5585, 4294901760
    %5587 = vmatpush1.msra.mxu0 %v5586
    %5588 = vmatprep.subr.mxu0 0.0
    %v5589 = vand.u32 %v5404, 4294901760
    %v5590 = vsub.f32 %v5404, %v5589
    %v5591 = vand.u32 %v5590, 4294901760
    %v5592 = vsub.f32 %v5590, %v5591
    %v5593 = vand.u32 %v5592, 4294901760
    %5594 = vmatpush1.msra.mxu0 %v5593
    %5595 = vmatprep.subr.mxu0 0.0
    %v5596 = vand.u32 %v5405, 4294901760
    %v5597 = vsub.f32 %v5405, %v5596
    %v5598 = vand.u32 %v5597, 4294901760
    %v5599 = vsub.f32 %v5597, %v5598
    %v5600 = vand.u32 %v5599, 4294901760
    %5601 = vmatpush1.msra.mxu0 %v5600
    %5602 = vmatprep.subr.mxu0 0.0
    %v5603 = vand.u32 %v5406, 4294901760
    %v5604 = vsub.f32 %v5406, %v5603
    %v5605 = vand.u32 %v5604, 4294901760
    %v5606 = vsub.f32 %v5604, %v5605
    %v5607 = vand.u32 %v5606, 4294901760
    %5608 = vmatpush1.msra.mxu0 %v5607
    %5609 = vmatprep.subr.mxu0 0.0
    %v5610 = vand.u32 %v5407, 4294901760
    %v5611 = vsub.f32 %v5407, %v5610
    %v5612 = vand.u32 %v5611, 4294901760
    %v5613 = vsub.f32 %v5611, %v5612
    %v5614 = vand.u32 %v5613, 4294901760
    %5615 = vmatpush1.msra.mxu0 %v5614
    %5616 = vmatprep.subr.mxu0 0.0
    %v5617 = vand.u32 %v5408, 4294901760
    %v5618 = vsub.f32 %v5408, %v5617
    %v5619 = vand.u32 %v5618, 4294901760
    %v5620 = vsub.f32 %v5618, %v5619
    %v5621 = vand.u32 %v5620, 4294901760
    %5622 = vmatpush1.msra.mxu0 %v5621
    %5623 = vmatprep.subr.mxu0 0.0
    %v5624 = vand.u32 %v5409, 4294901760
    %v5625 = vsub.f32 %v5409, %v5624
    %v5626 = vand.u32 %v5625, 4294901760
    %v5627 = vsub.f32 %v5625, %v5626
    %v5628 = vand.u32 %v5627, 4294901760
    %5629 = vmatpush1.msra.mxu0 %v5628
    %5630 = vmatprep.subr.mxu0 0.0
    %5631 = vmatpush1.msra.mxu0 0.0
    %5632 = vmatprep.subr.mxu0 0.0
    %5633 = vmatpush1.msra.mxu0 0.0
    %5634 = vmatprep.subr.mxu0 0.0
    %5635 = vmatpush1.msra.mxu0 0.0
    %5636 = vmatprep.subr.mxu0 0.0
    %5637 = vmatpush1.msra.mxu0 0.0
    %5638 = vmatprep.subr.mxu0 0.0
    %5639 = vmatpush1.msra.mxu0 0.0
    %5640 = vmatprep.subr.mxu0 0.0
    %5641 = vmatpush1.msra.mxu0 0.0
    %5642 = vmatprep.subr.mxu0 0.0
    %5643 = vmatpush1.msra.mxu0 0.0
    %5644 = vmatprep.subr.mxu0 0.0
    %5645 = vmatpush1.msra.mxu0 0.0
    %5646 = vmatprep.subr.mxu0 0.0
    %5647 = vmatpush1.msra.mxu0 0.0
    %5648 = vmatprep.subr.mxu0 0.0
    %5649 = vmatpush1.msra.mxu0 0.0
    %5650 = vmatprep.subr.mxu0 0.0
    %5651 = vmatpush1.msra.mxu0 0.0
    %5652 = vmatprep.subr.mxu0 0.0
    %5653 = vmatpush1.msra.mxu0 0.0
    %5654 = vmatprep.subr.mxu0 0.0
    %5655 = vmatpush1.msra.mxu0 0.0
    %5656 = vmatprep.subr.mxu0 0.0
    %5657 = vmatpush1.msra.mxu0 0.0
    %5658 = vmatprep.subr.mxu0 0.0
    %5659 = vmatpush1.msra.mxu0 0.0
    %5660 = vmatprep.subr.mxu0 0.0
    %5661 = vmatpush1.msra.mxu0 0.0
    %5662 = vmatprep.mubr.f32.mxu0 0.0
    %v5663 = vand.u32 %v5392, 4294901760
    %5664 = vmatmul.mubr.f32.gmra.mrb[0].mxu0 %v5663
    %v5665 = vpop.f32.mrb[0].mxu0
    %v5666 = vadd.f32 %v5505, %v5665
    %v5667 = vpop.f32.mrb[0].mxu0
    %5668 = vmatprep.mubr.f32.mxu0 0.0
    %v5669 = vand.u32 %v5393, 4294901760
    %5670 = vmatmul.mubr.f32.gmra.mrb[0].mxu0 %v5669
    %v5671 = vpop.f32.mrb[0].mxu0
    %v5672 = vadd.f32 %v5515, %v5671
    %v5673 = vpop.f32.mrb[0].mxu0
    %5674 = vdwg.mxu0
    %5675 = vmatprep.subr.mxu0 0.0
    %v5676 = vand.u32 %v5394, 4294901760
    %v5677 = vsub.f32 %v5394, %v5676
    %5678 = vmatpush1.msra.mxu0 %v5677
    %5679 = vmatprep.subr.mxu0 0.0
    %v5680 = vand.u32 %v5395, 4294901760
    %v5681 = vsub.f32 %v5395, %v5680
    %5682 = vmatpush1.msra.mxu0 %v5681
    %5683 = vmatprep.subr.mxu0 0.0
    %v5684 = vand.u32 %v5396, 4294901760
    %v5685 = vsub.f32 %v5396, %v5684
    %5686 = vmatpush1.msra.mxu0 %v5685
    %5687 = vmatprep.subr.mxu0 0.0
    %v5688 = vand.u32 %v5397, 4294901760
    %v5689 = vsub.f32 %v5397, %v5688
    %5690 = vmatpush1.msra.mxu0 %v5689
    %5691 = vmatprep.subr.mxu0 0.0
    %v5692 = vand.u32 %v5398, 4294901760
    %v5693 = vsub.f32 %v5398, %v5692
    %5694 = vmatpush1.msra.mxu0 %v5693
    %5695 = vmatprep.subr.mxu0 0.0
    %v5696 = vand.u32 %v5399, 4294901760
    %v5697 = vsub.f32 %v5399, %v5696
    %5698 = vmatpush1.msra.mxu0 %v5697
    %5699 = vmatprep.subr.mxu0 0.0
    %v5700 = vand.u32 %v5400, 4294901760
    %v5701 = vsub.f32 %v5400, %v5700
    %5702 = vmatpush1.msra.mxu0 %v5701
    %5703 = vmatprep.subr.mxu0 0.0
    %v5704 = vand.u32 %v5401, 4294901760
    %v5705 = vsub.f32 %v5401, %v5704
    %5706 = vmatpush1.msra.mxu0 %v5705
    %5707 = vmatprep.subr.mxu0 0.0
    %v5708 = vand.u32 %v5402, 4294901760
    %v5709 = vsub.f32 %v5402, %v5708
    %5710 = vmatpush1.msra.mxu0 %v5709
    %5711 = vmatprep.subr.mxu0 0.0
    %v5712 = vand.u32 %v5403, 4294901760
    %v5713 = vsub.f32 %v5403, %v5712
    %5714 = vmatpush1.msra.mxu0 %v5713
    %5715 = vmatprep.subr.mxu0 0.0
    %v5716 = vand.u32 %v5404, 4294901760
    %v5717 = vsub.f32 %v5404, %v5716
    %5718 = vmatpush1.msra.mxu0 %v5717
    %5719 = vmatprep.subr.mxu0 0.0
    %v5720 = vand.u32 %v5405, 4294901760
    %v5721 = vsub.f32 %v5405, %v5720
    %5722 = vmatpush1.msra.mxu0 %v5721
    %5723 = vmatprep.subr.mxu0 0.0
    %v5724 = vand.u32 %v5406, 4294901760
    %v5725 = vsub.f32 %v5406, %v5724
    %5726 = vmatpush1.msra.mxu0 %v5725
    %5727 = vmatprep.subr.mxu0 0.0
    %v5728 = vand.u32 %v5407, 4294901760
    %v5729 = vsub.f32 %v5407, %v5728
    %5730 = vmatpush1.msra.mxu0 %v5729
    %5731 = vmatprep.subr.mxu0 0.0
    %v5732 = vand.u32 %v5408, 4294901760
    %v5733 = vsub.f32 %v5408, %v5732
    %5734 = vmatpush1.msra.mxu0 %v5733
    %5735 = vmatprep.subr.mxu0 0.0
    %v5736 = vand.u32 %v5409, 4294901760
    %v5737 = vsub.f32 %v5409, %v5736
    %5738 = vmatpush1.msra.mxu0 %v5737
    %5739 = vmatprep.subr.mxu0 0.0
    %5740 = vmatpush1.msra.mxu0 0.0
    %5741 = vmatprep.subr.mxu0 0.0
    %5742 = vmatpush1.msra.mxu0 0.0
    %5743 = vmatprep.subr.mxu0 0.0
    %5744 = vmatpush1.msra.mxu0 0.0
    %5745 = vmatprep.subr.mxu0 0.0
    %5746 = vmatpush1.msra.mxu0 0.0
    %5747 = vmatprep.subr.mxu0 0.0
    %5748 = vmatpush1.msra.mxu0 0.0
    %5749 = vmatprep.subr.mxu0 0.0
    %5750 = vmatpush1.msra.mxu0 0.0
    %5751 = vmatprep.subr.mxu0 0.0
    %5752 = vmatpush1.msra.mxu0 0.0
    %5753 = vmatprep.subr.mxu0 0.0
    %5754 = vmatpush1.msra.mxu0 0.0
    %5755 = vmatprep.subr.mxu0 0.0
    %5756 = vmatpush1.msra.mxu0 0.0
    %5757 = vmatprep.subr.mxu0 0.0
    %5758 = vmatpush1.msra.mxu0 0.0
    %5759 = vmatprep.subr.mxu0 0.0
    %5760 = vmatpush1.msra.mxu0 0.0
    %5761 = vmatprep.subr.mxu0 0.0
    %5762 = vmatpush1.msra.mxu0 0.0
    %5763 = vmatprep.subr.mxu0 0.0
    %5764 = vmatpush1.msra.mxu0 0.0
    %5765 = vmatprep.subr.mxu0 0.0
    %5766 = vmatpush1.msra.mxu0 0.0
    %5767 = vmatprep.subr.mxu0 0.0
    %5768 = vmatpush1.msra.mxu0 0.0
    %5769 = vmatprep.subr.mxu0 0.0
    %5770 = vmatpush1.msra.mxu0 0.0
    %5771 = vmatprep.mubr.f32.mxu0 0.0
    %v5772 = vand.u32 %v5392, 4294901760
    %v5773 = vsub.f32 %v5392, %v5772
    %5774 = vmatmul.mubr.f32.gmra.mrb[0].mxu0 %v5773
    %v5775 = vpop.f32.mrb[0].mxu0
    %v5776 = vadd.f32 %v5666, %v5775
    %v5777 = vpop.f32.mrb[0].mxu0
    %5778 = vmatprep.mubr.f32.mxu0 0.0
    %v5779 = vand.u32 %v5393, 4294901760
    %v5780 = vsub.f32 %v5393, %v5779
    %5781 = vmatmul.mubr.f32.gmra.mrb[0].mxu0 %v5780
    %v5782 = vpop.f32.mrb[0].mxu0
    %v5783 = vadd.f32 %v5672, %v5782
    %v5784 = vpop.f32.mrb[0].mxu0
    %5785 = vdwg.mxu0
    %5786 = vmatprep.subr.mxu0 0.0
    %v5787 = vand.u32 %v5394, 4294901760
    %5788 = vmatpush1.msra.mxu0 %v5787
    %5789 = vmatprep.subr.mxu0 0.0
    %v5790 = vand.u32 %v5395, 4294901760
    %5791 = vmatpush1.msra.mxu0 %v5790
    %5792 = vmatprep.subr.mxu0 0.0
    %v5793 = vand.u32 %v5396, 4294901760
    %5794 = vmatpush1.msra.mxu0 %v5793
    %5795 = vmatprep.subr.mxu0 0.0
    %v5796 = vand.u32 %v5397, 4294901760
    %5797 = vmatpush1.msra.mxu0 %v5796
    %5798 = vmatprep.subr.mxu0 0.0
    %v5799 = vand.u32 %v5398, 4294901760
    %5800 = vmatpush1.msra.mxu0 %v5799
    %5801 = vmatprep.subr.mxu0 0.0
    %v5802 = vand.u32 %v5399, 4294901760
    %5803 = vmatpush1.msra.mxu0 %v5802
    %5804 = vmatprep.subr.mxu0 0.0
    %v5805 = vand.u32 %v5400, 4294901760
    %5806 = vmatpush1.msra.mxu0 %v5805
    %5807 = vmatprep.subr.mxu0 0.0
    %v5808 = vand.u32 %v5401, 4294901760
    %5809 = vmatpush1.msra.mxu0 %v5808
    %5810 = vmatprep.subr.mxu0 0.0
    %v5811 = vand.u32 %v5402, 4294901760
    %5812 = vmatpush1.msra.mxu0 %v5811
    %5813 = vmatprep.subr.mxu0 0.0
    %v5814 = vand.u32 %v5403, 4294901760
    %5815 = vmatpush1.msra.mxu0 %v5814
    %5816 = vmatprep.subr.mxu0 0.0
    %v5817 = vand.u32 %v5404, 4294901760
    %5818 = vmatpush1.msra.mxu0 %v5817
    %5819 = vmatprep.subr.mxu0 0.0
    %v5820 = vand.u32 %v5405, 4294901760
    %5821 = vmatpush1.msra.mxu0 %v5820
    %5822 = vmatprep.subr.mxu0 0.0
    %v5823 = vand.u32 %v5406, 4294901760
    %5824 = vmatpush1.msra.mxu0 %v5823
    %5825 = vmatprep.subr.mxu0 0.0
    %v5826 = vand.u32 %v5407, 4294901760
    %5827 = vmatpush1.msra.mxu0 %v5826
    %5828 = vmatprep.subr.mxu0 0.0
    %v5829 = vand.u32 %v5408, 4294901760
    %5830 = vmatpush1.msra.mxu0 %v5829
    %5831 = vmatprep.subr.mxu0 0.0
    %v5832 = vand.u32 %v5409, 4294901760
    %5833 = vmatpush1.msra.mxu0 %v5832
    %5834 = vmatprep.subr.mxu0 0.0
    %5835 = vmatpush1.msra.mxu0 0.0
    %5836 = vmatprep.subr.mxu0 0.0
    %5837 = vmatpush1.msra.mxu0 0.0
    %5838 = vmatprep.subr.mxu0 0.0
    %5839 = vmatpush1.msra.mxu0 0.0
    %5840 = vmatprep.subr.mxu0 0.0
    %5841 = vmatpush1.msra.mxu0 0.0
    %5842 = vmatprep.subr.mxu0 0.0
    %5843 = vmatpush1.msra.mxu0 0.0
    %5844 = vmatprep.subr.mxu0 0.0
    %5845 = vmatpush1.msra.mxu0 0.0
    %5846 = vmatprep.subr.mxu0 0.0
    %5847 = vmatpush1.msra.mxu0 0.0
    %5848 = vmatprep.subr.mxu0 0.0
    %5849 = vmatpush1.msra.mxu0 0.0
    %5850 = vmatprep.subr.mxu0 0.0
    %5851 = vmatpush1.msra.mxu0 0.0
    %5852 = vmatprep.subr.mxu0 0.0
    %5853 = vmatpush1.msra.mxu0 0.0
    %5854 = vmatprep.subr.mxu0 0.0
    %5855 = vmatpush1.msra.mxu0 0.0
    %5856 = vmatprep.subr.mxu0 0.0
    %5857 = vmatpush1.msra.mxu0 0.0
    %5858 = vmatprep.subr.mxu0 0.0
    %5859 = vmatpush1.msra.mxu0 0.0
    %5860 = vmatprep.subr.mxu0 0.0
    %5861 = vmatpush1.msra.mxu0 0.0
    %5862 = vmatprep.subr.mxu0 0.0
    %5863 = vmatpush1.msra.mxu0 0.0
    %5864 = vmatprep.subr.mxu0 0.0
    %5865 = vmatpush1.msra.mxu0 0.0
    %5866 = vmatprep.mubr.f32.mxu0 0.0
    %v5867 = vand.u32 %v5392, 4294901760
    %v5868 = vsub.f32 %v5392, %v5867
    %v5869 = vand.u32 %v5868, 4294901760
    %5870 = vmatmul.mubr.f32.gmra.mrb[0].mxu0 %v5869
    %v5871 = vpop.f32.mrb[0].mxu0
    %v5872 = vadd.f32 %v5776, %v5871
    %v5873 = vpop.f32.mrb[0].mxu0
    %5874 = vmatprep.mubr.f32.mxu0 0.0
    %v5875 = vand.u32 %v5393, 4294901760
    %v5876 = vsub.f32 %v5393, %v5875
    %v5877 = vand.u32 %v5876, 4294901760
    %5878 = vmatmul.mubr.f32.gmra.mrb[0].mxu0 %v5877
    %v5879 = vpop.f32.mrb[0].mxu0
    %v5880 = vadd.f32 %v5783, %v5879
    %v5881 = vpop.f32.mrb[0].mxu0
    %5882 = vdwg.mxu0
    %5883 = vmatprep.subr.mxu0 0.0
    %v5884 = vand.u32 %v5394, 4294901760
    %v5885 = vsub.f32 %v5394, %v5884
    %v5886 = vand.u32 %v5885, 4294901760
    %5887 = vmatpush1.msra.mxu0 %v5886
    %5888 = vmatprep.subr.mxu0 0.0
    %v5889 = vand.u32 %v5395, 4294901760
    %v5890 = vsub.f32 %v5395, %v5889
    %v5891 = vand.u32 %v5890, 4294901760
    %5892 = vmatpush1.msra.mxu0 %v5891
    %5893 = vmatprep.subr.mxu0 0.0
    %v5894 = vand.u32 %v5396, 4294901760
    %v5895 = vsub.f32 %v5396, %v5894
    %v5896 = vand.u32 %v5895, 4294901760
    %5897 = vmatpush1.msra.mxu0 %v5896
    %5898 = vmatprep.subr.mxu0 0.0
    %v5899 = vand.u32 %v5397, 4294901760
    %v5900 = vsub.f32 %v5397, %v5899
    %v5901 = vand.u32 %v5900, 4294901760
    %5902 = vmatpush1.msra.mxu0 %v5901
    %5903 = vmatprep.subr.mxu0 0.0
    %v5904 = vand.u32 %v5398, 4294901760
    %v5905 = vsub.f32 %v5398, %v5904
    %v5906 = vand.u32 %v5905, 4294901760
    %5907 = vmatpush1.msra.mxu0 %v5906
    %5908 = vmatprep.subr.mxu0 0.0
    %v5909 = vand.u32 %v5399, 4294901760
    %v5910 = vsub.f32 %v5399, %v5909
    %v5911 = vand.u32 %v5910, 4294901760
    %5912 = vmatpush1.msra.mxu0 %v5911
    %5913 = vmatprep.subr.mxu0 0.0
    %v5914 = vand.u32 %v5400, 4294901760
    %v5915 = vsub.f32 %v5400, %v5914
    %v5916 = vand.u32 %v5915, 4294901760
    %5917 = vmatpush1.msra.mxu0 %v5916
    %5918 = vmatprep.subr.mxu0 0.0
    %v5919 = vand.u32 %v5401, 4294901760
    %v5920 = vsub.f32 %v5401, %v5919
    %v5921 = vand.u32 %v5920, 4294901760
    %5922 = vmatpush1.msra.mxu0 %v5921
    %5923 = vmatprep.subr.mxu0 0.0
    %v5924 = vand.u32 %v5402, 4294901760
    %v5925 = vsub.f32 %v5402, %v5924
    %v5926 = vand.u32 %v5925, 4294901760
    %5927 = vmatpush1.msra.mxu0 %v5926
    %5928 = vmatprep.subr.mxu0 0.0
    %v5929 = vand.u32 %v5403, 4294901760
    %v5930 = vsub.f32 %v5403, %v5929
    %v5931 = vand.u32 %v5930, 4294901760
    %5932 = vmatpush1.msra.mxu0 %v5931
    %5933 = vmatprep.subr.mxu0 0.0
    %v5934 = vand.u32 %v5404, 4294901760
    %v5935 = vsub.f32 %v5404, %v5934
    %v5936 = vand.u32 %v5935, 4294901760
    %5937 = vmatpush1.msra.mxu0 %v5936
    %5938 = vmatprep.subr.mxu0 0.0
    %v5939 = vand.u32 %v5405, 4294901760
    %v5940 = vsub.f32 %v5405, %v5939
    %v5941 = vand.u32 %v5940, 4294901760
    %5942 = vmatpush1.msra.mxu0 %v5941
    %5943 = vmatprep.subr.mxu0 0.0
    %v5944 = vand.u32 %v5406, 4294901760
    %v5945 = vsub.f32 %v5406, %v5944
    %v5946 = vand.u32 %v5945, 4294901760
    %5947 = vmatpush1.msra.mxu0 %v5946
    %5948 = vmatprep.subr.mxu0 0.0
    %v5949 = vand.u32 %v5407, 4294901760
    %v5950 = vsub.f32 %v5407, %v5949
    %v5951 = vand.u32 %v5950, 4294901760
    %5952 = vmatpush1.msra.mxu0 %v5951
    %5953 = vmatprep.subr.mxu0 0.0
    %v5954 = vand.u32 %v5408, 4294901760
    %v5955 = vsub.f32 %v5408, %v5954
    %v5956 = vand.u32 %v5955, 4294901760
    %5957 = vmatpush1.msra.mxu0 %v5956
    %5958 = vmatprep.subr.mxu0 0.0
    %v5959 = vand.u32 %v5409, 4294901760
    %v5960 = vsub.f32 %v5409, %v5959
    %v5961 = vand.u32 %v5960, 4294901760
    %5962 = vmatpush1.msra.mxu0 %v5961
    %5963 = vmatprep.subr.mxu0 0.0
    %5964 = vmatpush1.msra.mxu0 0.0
    %5965 = vmatprep.subr.mxu0 0.0
    %5966 = vmatpush1.msra.mxu0 0.0
    %5967 = vmatprep.subr.mxu0 0.0
    %5968 = vmatpush1.msra.mxu0 0.0
    %5969 = vmatprep.subr.mxu0 0.0
    %5970 = vmatpush1.msra.mxu0 0.0
    %5971 = vmatprep.subr.mxu0 0.0
    %5972 = vmatpush1.msra.mxu0 0.0
    %5973 = vmatprep.subr.mxu0 0.0
    %5974 = vmatpush1.msra.mxu0 0.0
    %5975 = vmatprep.subr.mxu0 0.0
    %5976 = vmatpush1.msra.mxu0 0.0
    %5977 = vmatprep.subr.mxu0 0.0
    %5978 = vmatpush1.msra.mxu0 0.0
    %5979 = vmatprep.subr.mxu0 0.0
    %5980 = vmatpush1.msra.mxu0 0.0
    %5981 = vmatprep.subr.mxu0 0.0
    %5982 = vmatpush1.msra.mxu0 0.0
    %5983 = vmatprep.subr.mxu0 0.0
    %5984 = vmatpush1.msra.mxu0 0.0
    %5985 = vmatprep.subr.mxu0 0.0
    %5986 = vmatpush1.msra.mxu0 0.0
    %5987 = vmatprep.subr.mxu0 0.0
    %5988 = vmatpush1.msra.mxu0 0.0
    %5989 = vmatprep.subr.mxu0 0.0
    %5990 = vmatpush1.msra.mxu0 0.0
    %5991 = vmatprep.subr.mxu0 0.0
    %5992 = vmatpush1.msra.mxu0 0.0
    %5993 = vmatprep.subr.mxu0 0.0
    %5994 = vmatpush1.msra.mxu0 0.0
    %5995 = vmatprep.mubr.f32.mxu0 0.0
    %v5996 = vand.u32 %v5392, 4294901760
    %5997 = vmatmul.mubr.f32.gmra.mrb[0].mxu0 %v5996
    %v5998 = vpop.f32.mrb[0].mxu0
    %v5999 = vadd.f32 %v5872, %v5998
    %v6000 = vpop.f32.mrb[0].mxu0
    %6001 = vmatprep.mubr.f32.mxu0 0.0
    %v6002 = vand.u32 %v5393, 4294901760
    %6003 = vmatmul.mubr.f32.gmra.mrb[0].mxu0 %v6002
    %v6004 = vpop.f32.mrb[0].mxu0
    %v6005 = vadd.f32 %v5880, %v6004
    %v6006 = vpop.f32.mrb[0].mxu0
    %6007 = vdwg.mxu0
    %6008 = vmatprep.subr.mxu0 0.0
    %v6009 = vand.u32 %v5394, 4294901760
    %6010 = vmatpush1.msra.mxu0 %v6009
    %6011 = vmatprep.subr.mxu0 0.0
    %v6012 = vand.u32 %v5395, 4294901760
    %6013 = vmatpush1.msra.mxu0 %v6012
    %6014 = vmatprep.subr.mxu0 0.0
    %v6015 = vand.u32 %v5396, 4294901760
    %6016 = vmatpush1.msra.mxu0 %v6015
    %6017 = vmatprep.subr.mxu0 0.0
    %v6018 = vand.u32 %v5397, 4294901760
    %6019 = vmatpush1.msra.mxu0 %v6018
    %6020 = vmatprep.subr.mxu0 0.0
    %v6021 = vand.u32 %v5398, 4294901760
    %6022 = vmatpush1.msra.mxu0 %v6021
    %6023 = vmatprep.subr.mxu0 0.0
    %v6024 = vand.u32 %v5399, 4294901760
    %6025 = vmatpush1.msra.mxu0 %v6024
    %6026 = vmatprep.subr.mxu0 0.0
    %v6027 = vand.u32 %v5400, 4294901760
    %6028 = vmatpush1.msra.mxu0 %v6027
    %6029 = vmatprep.subr.mxu0 0.0
    %v6030 = vand.u32 %v5401, 4294901760
    %6031 = vmatpush1.msra.mxu0 %v6030
    %6032 = vmatprep.subr.mxu0 0.0
    %v6033 = vand.u32 %v5402, 4294901760
    %6034 = vmatpush1.msra.mxu0 %v6033
    %6035 = vmatprep.subr.mxu0 0.0
    %v6036 = vand.u32 %v5403, 4294901760
    %6037 = vmatpush1.msra.mxu0 %v6036
    %6038 = vmatprep.subr.mxu0 0.0
    %v6039 = vand.u32 %v5404, 4294901760
    %6040 = vmatpush1.msra.mxu0 %v6039
    %6041 = vmatprep.subr.mxu0 0.0
    %v6042 = vand.u32 %v5405, 4294901760
    %6043 = vmatpush1.msra.mxu0 %v6042
    %6044 = vmatprep.subr.mxu0 0.0
    %v6045 = vand.u32 %v5406, 4294901760
    %6046 = vmatpush1.msra.mxu0 %v6045
    %6047 = vmatprep.subr.mxu0 0.0
    %v6048 = vand.u32 %v5407, 4294901760
    %6049 = vmatpush1.msra.mxu0 %v6048
    %6050 = vmatprep.subr.mxu0 0.0
    %v6051 = vand.u32 %v5408, 4294901760
    %6052 = vmatpush1.msra.mxu0 %v6051
    %6053 = vmatprep.subr.mxu0 0.0
    %v6054 = vand.u32 %v5409, 4294901760
    %6055 = vmatpush1.msra.mxu0 %v6054
    %6056 = vmatprep.subr.mxu0 0.0
    %6057 = vmatpush1.msra.mxu0 0.0
    %6058 = vmatprep.subr.mxu0 0.0
    %6059 = vmatpush1.msra.mxu0 0.0
    %6060 = vmatprep.subr.mxu0 0.0
    %6061 = vmatpush1.msra.mxu0 0.0
    %6062 = vmatprep.subr.mxu0 0.0
    %6063 = vmatpush1.msra.mxu0 0.0
    %6064 = vmatprep.subr.mxu0 0.0
    %6065 = vmatpush1.msra.mxu0 0.0
    %6066 = vmatprep.subr.mxu0 0.0
    %6067 = vmatpush1.msra.mxu0 0.0
    %6068 = vmatprep.subr.mxu0 0.0
    %6069 = vmatpush1.msra.mxu0 0.0
    %6070 = vmatprep.subr.mxu0 0.0
    %6071 = vmatpush1.msra.mxu0 0.0
    %6072 = vmatprep.subr.mxu0 0.0
    %6073 = vmatpush1.msra.mxu0 0.0
    %6074 = vmatprep.subr.mxu0 0.0
    %6075 = vmatpush1.msra.mxu0 0.0
    %6076 = vmatprep.subr.mxu0 0.0
    %6077 = vmatpush1.msra.mxu0 0.0
    %6078 = vmatprep.subr.mxu0 0.0
    %6079 = vmatpush1.msra.mxu0 0.0
    %6080 = vmatprep.subr.mxu0 0.0
    %6081 = vmatpush1.msra.mxu0 0.0
    %6082 = vmatprep.subr.mxu0 0.0
    %6083 = vmatpush1.msra.mxu0 0.0
    %6084 = vmatprep.subr.mxu0 0.0
    %6085 = vmatpush1.msra.mxu0 0.0
    %6086 = vmatprep.subr.mxu0 0.0
    %6087 = vmatpush1.msra.mxu0 0.0
    %6088 = vmatprep.mubr.f32.mxu0 0.0
    %v6089 = vand.u32 %v5392, 4294901760
    %6090 = vmatmul.mubr.f32.gmra.mrb[0].mxu0 %v6089
    %v6091 = vpop.f32.mrb[0].mxu0
    %v6092 = vadd.f32 %v5999, %v6091
    %v6093 = vpop.f32.mrb[0].mxu0
    %6094 = vmatprep.mubr.f32.mxu0 0.0
    %v6095 = vand.u32 %v5393, 4294901760
    %6096 = vmatmul.mubr.f32.gmra.mrb[0].mxu0 %v6095
    %v6097 = vpop.f32.mrb[0].mxu0
    %v6098 = vadd.f32 %v6005, %v6097
    %v6099 = vpop.f32.mrb[0].mxu0
    %6100 = vdwg.mxu0
    %6101 = vst [vmem:[#allocation9] sm:$0xff] %v6092
    %6102 = vst [vmem:[#allocation9 + $0x8] sm:$0xff] %v6098
    // Predicated region
    $region34: #{tpu_custom_call.1} parent=1 // pred_check
      _
    $region35: #{tpu_custom_call.1} parent=1 // pred_check_branch
      %6104 = sbr.rel (0) target = $region37
    $region36: #{tpu_custom_call.1} parent=1 // pred_region
      %s6106 = ssub.s32 256, 256
      %6107 = vsyncadd [#allocation5], %s6106
      %s6108 = sshll.u32 [#allocation9], 4
      %s6109 = int_to_ptr.vmem [resolvable:$true] %s6108
      %6114 = dma.vmem_to_hbm [thread:$0]  %s6109, 256, %s5, [#allocation5], 128, 128, 8
    $region37: #{tpu_custom_call.1} parent=1 // pred_fallthru
      _
    // Predicated region
    $region38: #{tpu_custom_call.1} parent=1 // pred_check
      _
    $region39: #{tpu_custom_call.1} parent=1 // pred_check_branch
      %6116 = sbr.rel (0) target = $region41
    $region40: #{tpu_custom_call.1} parent=1 // pred_region
      %6117 = dma.done [#allocation5], 256
    $region41: #{tpu_custom_call.1} parent=1 // pred_fallthru
      _
    %6118 = vsyncpa [#allocation4], 1
    %6119 = vsyncpa [#allocation7], 1
    %6120 = vsyncpa [#allocation5], 1

</llo_original>
